<compile_context>
chip_gen: v6e
topology: v6e:2x2x1
jax: 0.10.0
libtpu: 0.0.40
codegen_flags: <defaults>
</compile_context>

<pallas_src>
import functools

import jax
import jax.numpy as jnp
from jax.experimental import pallas as pl
from jax.experimental.pallas import tpu as pltpu


def _round_up(x, m):
    return (x + m - 1) // m * m


def _tpu_defaults(C):
    """Per-generation defaults.

    Returns (tile_cap, use_bf16_mxu, bf16_valu, two_cores, vmem_cap_bytes).
    """
    kind = ""
    try:
        kind = jax.devices()[0].device_kind.lower()
    except Exception:
        pass
    is_v7 = ("v7" in kind) or ("7x" in kind)
    is_v6 = "v6" in kind
    if is_v6 or is_v7:
        # bf16 VALU + 2x256x256 bf16 MXU; v7x has 2 TCs but only 64 MiB VMEM.
        return 1024, True, True, is_v7, (40 << 20 if is_v7 else 64 << 20)
    # v5e and older/unknown: no bf16 VALU; bf16 MXU only pays once C is large
    # enough that the matmul is no longer hidden under the VPU sel build.
    return 1024, (C >= 256), False, False, 64 << 20


def kernel_rotate_kernel(pb_ref, w_ref, feat_ref, out_ref, *, sel_dtype,
                         mm_dtype):
    pb = pb_ref[...]                               # (tn, K)  int32
    w = w_ref[...].astype(sel_dtype)               # (tn, K)  sel_dtype (once)
    feat = feat_ref[...]                           # (m_pad, C) already mm_dtype

    tn, K = pb.shape
    m_pad = feat.shape[0]

    # One-hot selection matrix via broadcasted iota + compare (VPU).
    # Built and accumulated directly in sel_dtype (bf16 on v6e/v7x) so the
    # dominant select/add work runs at packed-vreg rate; initialize from the
    # k = 0 term instead of zeros + add.
    m_iota = jax.lax.broadcasted_iota(jnp.int32, (tn, m_pad), 1)
    zero = jnp.zeros((), dtype=sel_dtype)
    sel = jnp.where(pb[:, 0:1] == m_iota, w[:, 0:1], zero)
    for k in range(1, K):                          # K is small & static
        sel = sel + jnp.where(pb[:, k:k + 1] == m_iota, w[:, k:k + 1], zero)

    # Only the v5e bf16-MXU path (f32 sel, bf16 matmul) needs a cast here.
    sel_mm = sel if sel.dtype == mm_dtype else sel.astype(mm_dtype)

    # Hot path: (tn, m_pad) @ (m_pad, C) on the MXU, f32 accumulation.
    out_ref[...] = jnp.dot(
        sel_mm, feat, preferred_element_type=jnp.float32
    ).astype(out_ref.dtype)


def kernel_rotate(features, points_base, weights, *, tile_n=None,
                  use_bf16_mxu=None, single_buffer_features=False):
    """features (M, C), points_base (N, K) int32, weights (N, K) -> (N, C).

    `use_bf16_mxu=None` auto-selects per TPU generation; pass an explicit
    bool if generation-independent numerics are required downstream.
    """
    M, C = features.shape
    N, K = points_base.shape
    assert weights.shape == (N, K)
    out_dtype = features.dtype

    if points_base.dtype != jnp.int32:
        points_base = points_base.astype(jnp.int32)

    tile_cap, auto_bf16, bf16_valu, two_cores, vmem_cap = _tpu_defaults(C)
    if use_bf16_mxu is None:
        use_bf16_mxu = auto_bf16
    mm_dtype = jnp.bfloat16 if use_bf16_mxu else jnp.float32
    sel_dtype = jnp.bfloat16 if (use_bf16_mxu and bf16_valu) else jnp.float32

    # ---- tile_n selection: large tiles amortize the ~0.35 us/step overhead;
    # keep >= 2 grid steps on 2-core chips so both TensorCores get work.
    if tile_n is None:
        tile_n = N if N <= 8 else min(tile_cap, (N // 8) * 8)
        if two_cores and N >= 16 and pl.cdiv(N, tile_n) < 2:
            tile_n = _round_up(pl.cdiv(N, 2), 8)
    else:
        tile_n = max(1, min(int(tile_n), N))
        if tile_n < N:
            tile_n = max(8, (tile_n // 8) * 8)

    # MXU-aligned contraction dim (also keeps the sel build lane-dense).
    m_pad = _round_up(M, 128)

    # Features: pad M and cast to the matmul dtype ONCE in the wrapper.
    feat_p = jnp.pad(features, ((0, m_pad - M), (0, 0))).astype(mm_dtype)

    # No N padding: ragged last block reads garbage only into rows >= N, which
    # are clipped on output writeback.  No C padding: output is exactly (N, C).
    grid = (pl.cdiv(N, tile_n),)

    feat_itemsize = jnp.dtype(mm_dtype).itemsize
    sel_itemsize = jnp.dtype(sel_dtype).itemsize
    out_itemsize = jnp.dtype(out_dtype).itemsize

    # VMEM budget (double-buffered pb/w/out, features buffers, sel + iota +
    # temporaries), with 2x headroom, clamped below the per-chip cap so Mosaic
    # internal scratch keeps >= ~24 MiB on v7x's 64 MiB VMEM.
    feat_bufs = 1 if single_buffer_features else 2
    est = (feat_bufs * m_pad * C * feat_itemsize
           + 2 * tile_n * K * 8                    # pb (i32) + weights (f32)
           + 2 * tile_n * C * out_itemsize         # output tiles
           + tile_n * m_pad * 4                    # iota (i32)
           + 3 * tile_n * m_pad * sel_itemsize)    # sel + where temporaries
    vmem_limit = int(min(vmem_cap, max(16 << 20, 2 * est)))

    n_tot = grid[0] * tile_n
    cost = pl.CostEstimate(
        flops=2 * n_tot * m_pad * C + 3 * n_tot * m_pad * K,
        transcendentals=0,
        bytes_accessed=(m_pad * C * feat_itemsize      # features fetched once
                        + N * K * 4                    # points_base
                        + N * K * 4                    # weights
                        + N * C * out_itemsize),       # output
    )

    feat_index_map = lambda i: (0, 0)
    if single_buffer_features:
        # Constant index_map -> one resident copy is enough.
        feat_spec = pl.BlockSpec((m_pad, C), feat_index_map,
                                 pipeline_mode=pl.Buffered(1))
    else:
        feat_spec = pl.BlockSpec((m_pad, C), feat_index_map)

    out = pl.pallas_call(
        functools.partial(kernel_rotate_kernel, sel_dtype=sel_dtype,
                          mm_dtype=mm_dtype),
        out_shape=jax.ShapeDtypeStruct((N, C), out_dtype),
        grid_spec=pltpu.PrefetchScalarGridSpec(
            num_scalar_prefetch=0,
            grid=grid,
            in_specs=[
                pl.BlockSpec((tile_n, K), lambda i: (i, 0)),   # points_base
                pl.BlockSpec((tile_n, K), lambda i: (i, 0)),   # weights
                feat_spec,                                     # features
            ],
            out_specs=pl.BlockSpec((tile_n, C), lambda i: (i, 0)),
        ),
        compiler_params=pltpu.CompilerParams(
            dimension_semantics=("parallel",),
            vmem_limit_bytes=vmem_limit,
        ),
        cost_estimate=cost,
    )(points_base, weights, feat_p)

    return out


def kernel_rotate_ref(features, points_base, weights):
    # pure-JAX reference: weighted gather
    gathered = features[points_base]              # (N, K, C)
    return jnp.einsum("nk,nkc->nc", weights, gathered)


if __name__ == "__main__":
    key = jax.random.PRNGKey(0)
    k_feat, k_idx, k_w = jax.random.split(key, 3)

    M, C = 64, 32      # base kernel points, channels
    N, K = 512, 8      # output points, interpolation taps

    features = jax.random.normal(k_feat, (M, C), dtype=jnp.float32)
    points_base = jax.random.randint(k_idx, (N, K), 0, M, dtype=jnp.int32)
    weights = jax.random.uniform(k_w, (N, K), dtype=jnp.float32)

    ref = kernel_rotate_ref(features, points_base, weights)

    # 1) Auto (per-generation) path: bf16 sel/MXU on v6e/v7x, f32 on v5e.
    out = jax.block_until_ready(kernel_rotate(features, points_base, weights))
    _, auto_bf16, _, _, _ = _tpu_defaults(C)
    atol, rtol = (1e-1, 5e-2) if auto_bf16 else (1e-5, 1e-5)
    assert out.shape == (N, C)
    assert jnp.allclose(out, ref, atol=atol, rtol=rtol), "auto path mismatch"

    # 2) Exact f32 path with a ragged (non-divisible) N tail: validates the
    #    no-N-padding boundary handling against the reference.
    N2 = 300
    out2 = jax.block_until_ready(
        kernel_rotate(features, points_base[:N2], weights[:N2],
                      use_bf16_mxu=False))
    assert out2.shape == (N2, C)
    assert jnp.allclose(out2, ref[:N2], atol=1e-5, rtol=1e-5), "ragged mismatch"

    print("KERNEL_OK")
</pallas_src>

<mosaic_0001>
module attributes {stable_mosaic.version = 11 : i64} {
  func.func @kernel_rotate_kernel(%arg0: i32, %arg1: memref<512x8xi32, #tpu.memory_space<vmem>>, %arg2: memref<512x8xf32, #tpu.memory_space<vmem>>, %arg3: memref<128x32xf32, #tpu.memory_space<vmem>>, %arg4: memref<512x32xf32, #tpu.memory_space<vmem>>) attributes {dimension_semantics = [#tpu.dimension_semantics<parallel>], iteration_bounds = array<i64: 1>, scalar_prefetch = 0 : i64, scratch_operands = 0 : i64, tpu.core_type = #tpu.core_type<tc>, window_params = [{transform_indices = @transform_0, window_bounds = array<i64: 512, 8>}, {transform_indices = @transform_1, window_bounds = array<i64: 512, 8>}, {pipeline_mode = #tpu.pipeline_mode<synchronous>, transform_indices = @transform_2, window_bounds = array<i64: 128, 32>}, {transform_indices = @transform_3, window_bounds = array<i64: 512, 32>}]} {
    %c0 = arith.constant 0 : index
    %c0_0 = arith.constant 0 : index
    %0 = vector.load %arg1[%c0, %c0_0] : memref<512x8xi32, #tpu.memory_space<vmem>>, vector<512x8xi32>
    %c0_1 = arith.constant 0 : index
    %c0_2 = arith.constant 0 : index
    %1 = vector.load %arg2[%c0_1, %c0_2] : memref<512x8xf32, #tpu.memory_space<vmem>>, vector<512x8xf32>
    %c0_3 = arith.constant 0 : index
    %c0_4 = arith.constant 0 : index
    %2 = vector.load %arg3[%c0_3, %c0_4] : memref<128x32xf32, #tpu.memory_space<vmem>>, vector<128x32xf32>
    %3 = tpu.iota {dimensions = array<i32: 1>} : vector<512x128xi32>
    %4 = vector.extract_strided_slice %0 {offsets = [0, 0], sizes = [512, 1], strides = [1, 1]} : vector<512x8xi32> to vector<512x1xi32>
    %5 = vector.broadcast %4 : vector<512x1xi32> to vector<512x128xi32>
    %6 = arith.cmpi eq, %5, %3 : vector<512x128xi32>
    %7 = vector.extract_strided_slice %1 {offsets = [0, 0], sizes = [512, 1], strides = [1, 1]} : vector<512x8xf32> to vector<512x1xf32>
    %cst = arith.constant 0.000000e+00 : f32
    %8 = vector.shape_cast %7 : vector<512x1xf32> to vector<512x1xf32>
    %9 = vector.broadcast %8 : vector<512x1xf32> to vector<512x128xf32>
    %10 = vector.broadcast %cst : f32 to vector<512x128xf32>
    %11 = arith.select %6, %9, %10 : vector<512x128xi1>, vector<512x128xf32>
    %12 = vector.extract_strided_slice %0 {offsets = [0, 1], sizes = [512, 1], strides = [1, 1]} : vector<512x8xi32> to vector<512x1xi32>
    %13 = vector.broadcast %12 : vector<512x1xi32> to vector<512x128xi32>
    %14 = arith.cmpi eq, %13, %3 : vector<512x128xi32>
    %15 = vector.extract_strided_slice %1 {offsets = [0, 1], sizes = [512, 1], strides = [1, 1]} : vector<512x8xf32> to vector<512x1xf32>
    %cst_5 = arith.constant 0.000000e+00 : f32
    %16 = vector.shape_cast %15 : vector<512x1xf32> to vector<512x1xf32>
    %17 = vector.broadcast %16 : vector<512x1xf32> to vector<512x128xf32>
    %18 = vector.broadcast %cst_5 : f32 to vector<512x128xf32>
    %19 = arith.select %14, %17, %18 : vector<512x128xi1>, vector<512x128xf32>
    %20 = arith.addf %11, %19 : vector<512x128xf32>
    %21 = vector.extract_strided_slice %0 {offsets = [0, 2], sizes = [512, 1], strides = [1, 1]} : vector<512x8xi32> to vector<512x1xi32>
    %22 = vector.broadcast %21 : vector<512x1xi32> to vector<512x128xi32>
    %23 = arith.cmpi eq, %22, %3 : vector<512x128xi32>
    %24 = vector.extract_strided_slice %1 {offsets = [0, 2], sizes = [512, 1], strides = [1, 1]} : vector<512x8xf32> to vector<512x1xf32>
    %cst_6 = arith.constant 0.000000e+00 : f32
    %25 = vector.shape_cast %24 : vector<512x1xf32> to vector<512x1xf32>
    %26 = vector.broadcast %25 : vector<512x1xf32> to vector<512x128xf32>
    %27 = vector.broadcast %cst_6 : f32 to vector<512x128xf32>
    %28 = arith.select %23, %26, %27 : vector<512x128xi1>, vector<512x128xf32>
    %29 = arith.addf %20, %28 : vector<512x128xf32>
    %30 = vector.extract_strided_slice %0 {offsets = [0, 3], sizes = [512, 1], strides = [1, 1]} : vector<512x8xi32> to vector<512x1xi32>
    %31 = vector.broadcast %30 : vector<512x1xi32> to vector<512x128xi32>
    %32 = arith.cmpi eq, %31, %3 : vector<512x128xi32>
    %33 = vector.extract_strided_slice %1 {offsets = [0, 3], sizes = [512, 1], strides = [1, 1]} : vector<512x8xf32> to vector<512x1xf32>
    %cst_7 = arith.constant 0.000000e+00 : f32
    %34 = vector.shape_cast %33 : vector<512x1xf32> to vector<512x1xf32>
    %35 = vector.broadcast %34 : vector<512x1xf32> to vector<512x128xf32>
    %36 = vector.broadcast %cst_7 : f32 to vector<512x128xf32>
    %37 = arith.select %32, %35, %36 : vector<512x128xi1>, vector<512x128xf32>
    %38 = arith.addf %29, %37 : vector<512x128xf32>
    %39 = vector.extract_strided_slice %0 {offsets = [0, 4], sizes = [512, 1], strides = [1, 1]} : vector<512x8xi32> to vector<512x1xi32>
    %40 = vector.broadcast %39 : vector<512x1xi32> to vector<512x128xi32>
    %41 = arith.cmpi eq, %40, %3 : vector<512x128xi32>
    %42 = vector.extract_strided_slice %1 {offsets = [0, 4], sizes = [512, 1], strides = [1, 1]} : vector<512x8xf32> to vector<512x1xf32>
    %cst_8 = arith.constant 0.000000e+00 : f32
    %43 = vector.shape_cast %42 : vector<512x1xf32> to vector<512x1xf32>
    %44 = vector.broadcast %43 : vector<512x1xf32> to vector<512x128xf32>
    %45 = vector.broadcast %cst_8 : f32 to vector<512x128xf32>
    %46 = arith.select %41, %44, %45 : vector<512x128xi1>, vector<512x128xf32>
    %47 = arith.addf %38, %46 : vector<512x128xf32>
    %48 = vector.extract_strided_slice %0 {offsets = [0, 5], sizes = [512, 1], strides = [1, 1]} : vector<512x8xi32> to vector<512x1xi32>
    %49 = vector.broadcast %48 : vector<512x1xi32> to vector<512x128xi32>
    %50 = arith.cmpi eq, %49, %3 : vector<512x128xi32>
    %51 = vector.extract_strided_slice %1 {offsets = [0, 5], sizes = [512, 1], strides = [1, 1]} : vector<512x8xf32> to vector<512x1xf32>
    %cst_9 = arith.constant 0.000000e+00 : f32
    %52 = vector.shape_cast %51 : vector<512x1xf32> to vector<512x1xf32>
    %53 = vector.broadcast %52 : vector<512x1xf32> to vector<512x128xf32>
    %54 = vector.broadcast %cst_9 : f32 to vector<512x128xf32>
    %55 = arith.select %50, %53, %54 : vector<512x128xi1>, vector<512x128xf32>
    %56 = arith.addf %47, %55 : vector<512x128xf32>
    %57 = vector.extract_strided_slice %0 {offsets = [0, 6], sizes = [512, 1], strides = [1, 1]} : vector<512x8xi32> to vector<512x1xi32>
    %58 = vector.broadcast %57 : vector<512x1xi32> to vector<512x128xi32>
    %59 = arith.cmpi eq, %58, %3 : vector<512x128xi32>
    %60 = vector.extract_strided_slice %1 {offsets = [0, 6], sizes = [512, 1], strides = [1, 1]} : vector<512x8xf32> to vector<512x1xf32>
    %cst_10 = arith.constant 0.000000e+00 : f32
    %61 = vector.shape_cast %60 : vector<512x1xf32> to vector<512x1xf32>
    %62 = vector.broadcast %61 : vector<512x1xf32> to vector<512x128xf32>
    %63 = vector.broadcast %cst_10 : f32 to vector<512x128xf32>
    %64 = arith.select %59, %62, %63 : vector<512x128xi1>, vector<512x128xf32>
    %65 = arith.addf %56, %64 : vector<512x128xf32>
    %66 = vector.extract_strided_slice %0 {offsets = [0, 7], sizes = [512, 1], strides = [1, 1]} : vector<512x8xi32> to vector<512x1xi32>
    %67 = vector.broadcast %66 : vector<512x1xi32> to vector<512x128xi32>
    %68 = arith.cmpi eq, %67, %3 : vector<512x128xi32>
    %69 = vector.extract_strided_slice %1 {offsets = [0, 7], sizes = [512, 1], strides = [1, 1]} : vector<512x8xf32> to vector<512x1xf32>
    %cst_11 = arith.constant 0.000000e+00 : f32
    %70 = vector.shape_cast %69 : vector<512x1xf32> to vector<512x1xf32>
    %71 = vector.broadcast %70 : vector<512x1xf32> to vector<512x128xf32>
    %72 = vector.broadcast %cst_11 : f32 to vector<512x128xf32>
    %73 = arith.select %68, %71, %72 : vector<512x128xi1>, vector<512x128xf32>
    %74 = arith.addf %65, %73 : vector<512x128xf32>
    %cst_12 = arith.constant dense<0.000000e+00> : vector<512x32xf32>
    %75 = tpu.matmul %74, %2, %cst_12 {dimension_numbers = #tpu.dot_dimension_numbers<[1], [0], [0], [1], [0, 0, 1, 1], [], []>} : vector<512x128xf32>, vector<128x32xf32>, vector<512x32xf32> -> vector<512x32xf32>
    %c0_13 = arith.constant 0 : index
    %c0_14 = arith.constant 0 : index
    %76 = vector.load %arg4[%c0_13, %c0_14] : memref<512x32xf32, #tpu.memory_space<vmem>>, vector<512x32xf32>
    tpu.vector_store %arg4[%c0_13, %c0_14], %75 {strides = array<i32>} : memref<512x32xf32, #tpu.memory_space<vmem>>, vector<512x32xf32>,
    return
  }
  func.func @transform_0(%arg0: i32) -> (i32, i32) {
    %c0_i32 = arith.constant 0 : i32
    %c0_i32_0 = arith.constant 0 : i32
    return %arg0, %c0_i32 : i32, i32
  }
  func.func @transform_1(%arg0: i32) -> (i32, i32) {
    %c0_i32 = arith.constant 0 : i32
    %c0_i32_0 = arith.constant 0 : i32
    return %arg0, %c0_i32 : i32, i32
  }
  func.func @transform_2(%arg0: i32) -> (i32, i32) {
    %c0_i32 = arith.constant 0 : i32
    %c0_i32_0 = arith.constant 0 : i32
    %c0_i32_1 = arith.constant 0 : i32
    return %c0_i32, %c0_i32_0 : i32, i32
  }
  func.func @transform_3(%arg0: i32) -> (i32, i32) {
    %c0_i32 = arith.constant 0 : i32
    %c0_i32_0 = arith.constant 0 : i32
    return %arg0, %c0_i32 : i32, i32
  }
}

</mosaic_0001>

<llo_original>
// kernel: tpu_custom_call.1
$region0: #{tpu_custom_call.1}
  #allocation0 [shape = 'u32[]', space=smem, size = 0x4, offset = 0x4, fixed_abs, tag = 'smem constant byte address 0x4 - core index']
  #allocation1 [shape = 'u32[144,128]{1,0:T(1,128)}', space=vmem, size = 0x12000, scoped, tag = 'internal scratch']
  %s0 = inlined_call_operand.vmem [shape: s32[512,8], index: 0, kind: input, shape index: {}]
  %s1 = inlined_call_operand.vmem [shape: f32[512,8], index: 1, kind: input, shape index: {}]
  %s2 = inlined_call_operand.vmem [shape: f32[128,32], index: 2, kind: input, shape index: {}]
  %s3 = inlined_call_operand.vmem [shape: f32[512,32], index: 3, kind: output, shape index: {}]
  %s4 = sld [smem:[#allocation0]]
  $region22: #{tpu_custom_call.1} parent=0
    _
  %s6 = ssub.s32 1, %s4
  %s7 = scalar_select 0, %s6, %s4
  // Predicated region
  $region2: #{tpu_custom_call.1} parent=0 // pred_check
    _
  $region3: #{tpu_custom_call.1} parent=0 // pred_check_branch
    %9 = sbr.rel (0) target = $region5
  $region4: #{tpu_custom_call.1} parent=0 // pred_region
    _
  $region5: #{tpu_custom_call.1} parent=0 // pred_fallthru
    _
  // Predicated region
  $region6: #{tpu_custom_call.1} parent=0 // pred_check
    _
  $region7: #{tpu_custom_call.1} parent=0 // pred_check_branch
    %11 = sbr.rel (0) target = $region9
  $region8: #{tpu_custom_call.1} parent=0 // pred_region
    _
  $region9: #{tpu_custom_call.1} parent=0 // pred_fallthru
    _
  // Predicated region
  $region10: #{tpu_custom_call.1} parent=0 // pred_check
    _
  $region11: #{tpu_custom_call.1} parent=0 // pred_check_branch
    %13 = sbr.rel (0) target = $region13
  $region12: #{tpu_custom_call.1} parent=0 // pred_region
    _
  $region13: #{tpu_custom_call.1} parent=0 // pred_fallthru
    _
  %v14 = vld [vmem:[%s0] sm:$0xff]
  %v15 = vld [vmem:[%s0 + $0x8] sm:$0xff]
  %v16 = vld [vmem:[%s0 + $0x10] sm:$0xff]
  %v17 = vld [vmem:[%s0 + $0x18] sm:$0xff]
  %v18 = vld [vmem:[%s0 + $0x20] sm:$0xff]
  %v19 = vld [vmem:[%s0 + $0x28] sm:$0xff]
  %v20 = vld [vmem:[%s0 + $0x30] sm:$0xff]
  %v21 = vld [vmem:[%s0 + $0x38] sm:$0xff]
  %v22 = vld [vmem:[%s0 + $0x40] sm:$0xff]
  %v23 = vld [vmem:[%s0 + $0x48] sm:$0xff]
  %v24 = vld [vmem:[%s0 + $0x50] sm:$0xff]
  %v25 = vld [vmem:[%s0 + $0x58] sm:$0xff]
  %v26 = vld [vmem:[%s0 + $0x60] sm:$0xff]
  %v27 = vld [vmem:[%s0 + $0x68] sm:$0xff]
  %v28 = vld [vmem:[%s0 + $0x70] sm:$0xff]
  %v29 = vld [vmem:[%s0 + $0x78] sm:$0xff]
  %v30 = vld [vmem:[%s0 + $0x80] sm:$0xff]
  %v31 = vld [vmem:[%s0 + $0x88] sm:$0xff]
  %v32 = vld [vmem:[%s0 + $0x90] sm:$0xff]
  %v33 = vld [vmem:[%s0 + $0x98] sm:$0xff]
  %v34 = vld [vmem:[%s0 + $0xa0] sm:$0xff]
  %v35 = vld [vmem:[%s0 + $0xa8] sm:$0xff]
  %v36 = vld [vmem:[%s0 + $0xb0] sm:$0xff]
  %v37 = vld [vmem:[%s0 + $0xb8] sm:$0xff]
  %v38 = vld [vmem:[%s0 + $0xc0] sm:$0xff]
  %v39 = vld [vmem:[%s0 + $0xc8] sm:$0xff]
  %v40 = vld [vmem:[%s0 + $0xd0] sm:$0xff]
  %v41 = vld [vmem:[%s0 + $0xd8] sm:$0xff]
  %v42 = vld [vmem:[%s0 + $0xe0] sm:$0xff]
  %v43 = vld [vmem:[%s0 + $0xe8] sm:$0xff]
  %v44 = vld [vmem:[%s0 + $0xf0] sm:$0xff]
  %v45 = vld [vmem:[%s0 + $0xf8] sm:$0xff]
  %v46 = vld [vmem:[%s0 + $0x100] sm:$0xff]
  %v47 = vld [vmem:[%s0 + $0x108] sm:$0xff]
  %v48 = vld [vmem:[%s0 + $0x110] sm:$0xff]
  %v49 = vld [vmem:[%s0 + $0x118] sm:$0xff]
  %v50 = vld [vmem:[%s0 + $0x120] sm:$0xff]
  %v51 = vld [vmem:[%s0 + $0x128] sm:$0xff]
  %v52 = vld [vmem:[%s0 + $0x130] sm:$0xff]
  %v53 = vld [vmem:[%s0 + $0x138] sm:$0xff]
  %v54 = vld [vmem:[%s0 + $0x140] sm:$0xff]
  %v55 = vld [vmem:[%s0 + $0x148] sm:$0xff]
  %v56 = vld [vmem:[%s0 + $0x150] sm:$0xff]
  %v57 = vld [vmem:[%s0 + $0x158] sm:$0xff]
  %v58 = vld [vmem:[%s0 + $0x160] sm:$0xff]
  %v59 = vld [vmem:[%s0 + $0x168] sm:$0xff]
  %v60 = vld [vmem:[%s0 + $0x170] sm:$0xff]
  %v61 = vld [vmem:[%s0 + $0x178] sm:$0xff]
  %v62 = vld [vmem:[%s0 + $0x180] sm:$0xff]
  %v63 = vld [vmem:[%s0 + $0x188] sm:$0xff]
  %v64 = vld [vmem:[%s0 + $0x190] sm:$0xff]
  %v65 = vld [vmem:[%s0 + $0x198] sm:$0xff]
  %v66 = vld [vmem:[%s0 + $0x1a0] sm:$0xff]
  %v67 = vld [vmem:[%s0 + $0x1a8] sm:$0xff]
  %v68 = vld [vmem:[%s0 + $0x1b0] sm:$0xff]
  %v69 = vld [vmem:[%s0 + $0x1b8] sm:$0xff]
  %v70 = vld [vmem:[%s0 + $0x1c0] sm:$0xff]
  %v71 = vld [vmem:[%s0 + $0x1c8] sm:$0xff]
  %v72 = vld [vmem:[%s0 + $0x1d0] sm:$0xff]
  %v73 = vld [vmem:[%s0 + $0x1d8] sm:$0xff]
  %v74 = vld [vmem:[%s0 + $0x1e0] sm:$0xff]
  %v75 = vld [vmem:[%s0 + $0x1e8] sm:$0xff]
  %v76 = vld [vmem:[%s0 + $0x1f0] sm:$0xff]
  %v77 = vld [vmem:[%s0 + $0x1f8] sm:$0xff]
  %v78 = vld [vmem:[%s1] sm:$0xff]
  %v79 = vld [vmem:[%s1 + $0x8] sm:$0xff]
  %v80 = vld [vmem:[%s1 + $0x10] sm:$0xff]
  %v81 = vld [vmem:[%s1 + $0x18] sm:$0xff]
  %v82 = vld [vmem:[%s1 + $0x20] sm:$0xff]
  %v83 = vld [vmem:[%s1 + $0x28] sm:$0xff]
  %v84 = vld [vmem:[%s1 + $0x30] sm:$0xff]
  %v85 = vld [vmem:[%s1 + $0x38] sm:$0xff]
  %v86 = vld [vmem:[%s1 + $0x40] sm:$0xff]
  %v87 = vld [vmem:[%s1 + $0x48] sm:$0xff]
  %v88 = vld [vmem:[%s1 + $0x50] sm:$0xff]
  %v89 = vld [vmem:[%s1 + $0x58] sm:$0xff]
  %v90 = vld [vmem:[%s1 + $0x60] sm:$0xff]
  %v91 = vld [vmem:[%s1 + $0x68] sm:$0xff]
  %v92 = vld [vmem:[%s1 + $0x70] sm:$0xff]
  %v93 = vld [vmem:[%s1 + $0x78] sm:$0xff]
  %v94 = vld [vmem:[%s1 + $0x80] sm:$0xff]
  %v95 = vld [vmem:[%s1 + $0x88] sm:$0xff]
  %v96 = vld [vmem:[%s1 + $0x90] sm:$0xff]
  %v97 = vld [vmem:[%s1 + $0x98] sm:$0xff]
  %v98 = vld [vmem:[%s1 + $0xa0] sm:$0xff]
  %v99 = vld [vmem:[%s1 + $0xa8] sm:$0xff]
  %v100 = vld [vmem:[%s1 + $0xb0] sm:$0xff]
  %v101 = vld [vmem:[%s1 + $0xb8] sm:$0xff]
  %v102 = vld [vmem:[%s1 + $0xc0] sm:$0xff]
  %v103 = vld [vmem:[%s1 + $0xc8] sm:$0xff]
  %v104 = vld [vmem:[%s1 + $0xd0] sm:$0xff]
  %v105 = vld [vmem:[%s1 + $0xd8] sm:$0xff]
  %v106 = vld [vmem:[%s1 + $0xe0] sm:$0xff]
  %v107 = vld [vmem:[%s1 + $0xe8] sm:$0xff]
  %v108 = vld [vmem:[%s1 + $0xf0] sm:$0xff]
  %v109 = vld [vmem:[%s1 + $0xf8] sm:$0xff]
  %v110 = vld [vmem:[%s1 + $0x100] sm:$0xff]
  %v111 = vld [vmem:[%s1 + $0x108] sm:$0xff]
  %v112 = vld [vmem:[%s1 + $0x110] sm:$0xff]
  %v113 = vld [vmem:[%s1 + $0x118] sm:$0xff]
  %v114 = vld [vmem:[%s1 + $0x120] sm:$0xff]
  %v115 = vld [vmem:[%s1 + $0x128] sm:$0xff]
  %v116 = vld [vmem:[%s1 + $0x130] sm:$0xff]
  %v117 = vld [vmem:[%s1 + $0x138] sm:$0xff]
  %v118 = vld [vmem:[%s1 + $0x140] sm:$0xff]
  %v119 = vld [vmem:[%s1 + $0x148] sm:$0xff]
  %v120 = vld [vmem:[%s1 + $0x150] sm:$0xff]
  %v121 = vld [vmem:[%s1 + $0x158] sm:$0xff]
  %v122 = vld [vmem:[%s1 + $0x160] sm:$0xff]
  %v123 = vld [vmem:[%s1 + $0x168] sm:$0xff]
  %v124 = vld [vmem:[%s1 + $0x170] sm:$0xff]
  %v125 = vld [vmem:[%s1 + $0x178] sm:$0xff]
  %v126 = vld [vmem:[%s1 + $0x180] sm:$0xff]
  %v127 = vld [vmem:[%s1 + $0x188] sm:$0xff]
  %v128 = vld [vmem:[%s1 + $0x190] sm:$0xff]
  %v129 = vld [vmem:[%s1 + $0x198] sm:$0xff]
  %v130 = vld [vmem:[%s1 + $0x1a0] sm:$0xff]
  %v131 = vld [vmem:[%s1 + $0x1a8] sm:$0xff]
  %v132 = vld [vmem:[%s1 + $0x1b0] sm:$0xff]
  %v133 = vld [vmem:[%s1 + $0x1b8] sm:$0xff]
  %v134 = vld [vmem:[%s1 + $0x1c0] sm:$0xff]
  %v135 = vld [vmem:[%s1 + $0x1c8] sm:$0xff]
  %v136 = vld [vmem:[%s1 + $0x1d0] sm:$0xff]
  %v137 = vld [vmem:[%s1 + $0x1d8] sm:$0xff]
  %v138 = vld [vmem:[%s1 + $0x1e0] sm:$0xff]
  %v139 = vld [vmem:[%s1 + $0x1e8] sm:$0xff]
  %v140 = vld [vmem:[%s1 + $0x1f0] sm:$0xff]
  %v141 = vld [vmem:[%s1 + $0x1f8] sm:$0xff]
  %v142 = vld [vmem:[%s2] sm:$0xff]
  %v143 = vld [vmem:[%s2 + $0x8] sm:$0xff]
  %v144 = vld [vmem:[%s2 + $0x10] sm:$0xff]
  %v145 = vld [vmem:[%s2 + $0x18] sm:$0xff]
  %v146 = vld [vmem:[%s2 + $0x20] sm:$0xff]
  %v147 = vld [vmem:[%s2 + $0x28] sm:$0xff]
  %v148 = vld [vmem:[%s2 + $0x30] sm:$0xff]
  %v149 = vld [vmem:[%s2 + $0x38] sm:$0xff]
  %v150 = vld [vmem:[%s2 + $0x40] sm:$0xff]
  %v151 = vld [vmem:[%s2 + $0x48] sm:$0xff]
  %v152 = vld [vmem:[%s2 + $0x50] sm:$0xff]
  %v153 = vld [vmem:[%s2 + $0x58] sm:$0xff]
  %v154 = vld [vmem:[%s2 + $0x60] sm:$0xff]
  %v155 = vld [vmem:[%s2 + $0x68] sm:$0xff]
  %v156 = vld [vmem:[%s2 + $0x70] sm:$0xff]
  %v157 = vld [vmem:[%s2 + $0x78] sm:$0xff]
  %v158 = vlaneseq
  %v159 = vand.u32 %v158, 127
  %160 = vset.pattern.permute.xlu0 0
  %161 = vperm.xlu0 %160, %v14
  %v162 = vpop.permute.xlu0 %161
  %163 = vset.pattern.permute.xlu0 0
  %164 = vperm.xlu0 %163, %v15
  %v165 = vpop.permute.xlu0 %164
  %166 = vset.pattern.permute.xlu0 0
  %167 = vperm.xlu0 %166, %v16
  %v168 = vpop.permute.xlu0 %167
  %169 = vset.pattern.permute.xlu0 0
  %170 = vperm.xlu0 %169, %v17
  %v171 = vpop.permute.xlu0 %170
  %172 = vset.pattern.permute.xlu0 0
  %173 = vperm.xlu0 %172, %v18
  %v174 = vpop.permute.xlu0 %173
  %175 = vset.pattern.permute.xlu0 0
  %176 = vperm.xlu0 %175, %v19
  %v177 = vpop.permute.xlu0 %176
  %178 = vset.pattern.permute.xlu0 0
  %179 = vperm.xlu0 %178, %v20
  %v180 = vpop.permute.xlu0 %179
  %181 = vset.pattern.permute.xlu0 0
  %182 = vperm.xlu0 %181, %v21
  %v183 = vpop.permute.xlu0 %182
  %184 = vset.pattern.permute.xlu0 0
  %185 = vperm.xlu0 %184, %v22
  %v186 = vpop.permute.xlu0 %185
  %187 = vset.pattern.permute.xlu0 0
  %188 = vperm.xlu0 %187, %v23
  %v189 = vpop.permute.xlu0 %188
  %190 = vset.pattern.permute.xlu0 0
  %191 = vperm.xlu0 %190, %v24
  %v192 = vpop.permute.xlu0 %191
  %193 = vset.pattern.permute.xlu0 0
  %194 = vperm.xlu0 %193, %v25
  %v195 = vpop.permute.xlu0 %194
  %196 = vset.pattern.permute.xlu0 0
  %197 = vperm.xlu0 %196, %v26
  %v198 = vpop.permute.xlu0 %197
  %199 = vset.pattern.permute.xlu0 0
  %200 = vperm.xlu0 %199, %v27
  %v201 = vpop.permute.xlu0 %200
  %202 = vset.pattern.permute.xlu0 0
  %203 = vperm.xlu0 %202, %v28
  %v204 = vpop.permute.xlu0 %203
  %205 = vset.pattern.permute.xlu0 0
  %206 = vperm.xlu0 %205, %v29
  %v207 = vpop.permute.xlu0 %206
  %208 = vset.pattern.permute.xlu0 0
  %209 = vperm.xlu0 %208, %v30
  %v210 = vpop.permute.xlu0 %209
  %211 = vset.pattern.permute.xlu0 0
  %212 = vperm.xlu0 %211, %v31
  %v213 = vpop.permute.xlu0 %212
  %214 = vset.pattern.permute.xlu0 0
  %215 = vperm.xlu0 %214, %v32
  %v216 = vpop.permute.xlu0 %215
  %217 = vset.pattern.permute.xlu0 0
  %218 = vperm.xlu0 %217, %v33
  %v219 = vpop.permute.xlu0 %218
  %220 = vset.pattern.permute.xlu0 0
  %221 = vperm.xlu0 %220, %v34
  %v222 = vpop.permute.xlu0 %221
  %223 = vset.pattern.permute.xlu0 0
  %224 = vperm.xlu0 %223, %v35
  %v225 = vpop.permute.xlu0 %224
  %226 = vset.pattern.permute.xlu0 0
  %227 = vperm.xlu0 %226, %v36
  %v228 = vpop.permute.xlu0 %227
  %229 = vset.pattern.permute.xlu0 0
  %230 = vperm.xlu0 %229, %v37
  %v231 = vpop.permute.xlu0 %230
  %232 = vset.pattern.permute.xlu0 0
  %233 = vperm.xlu0 %232, %v38
  %v234 = vpop.permute.xlu0 %233
  %235 = vset.pattern.permute.xlu0 0
  %236 = vperm.xlu0 %235, %v39
  %v237 = vpop.permute.xlu0 %236
  %238 = vset.pattern.permute.xlu0 0
  %239 = vperm.xlu0 %238, %v40
  %v240 = vpop.permute.xlu0 %239
  %241 = vset.pattern.permute.xlu0 0
  %242 = vperm.xlu0 %241, %v41
  %v243 = vpop.permute.xlu0 %242
  %244 = vset.pattern.permute.xlu0 0
  %245 = vperm.xlu0 %244, %v42
  %v246 = vpop.permute.xlu0 %245
  %247 = vset.pattern.permute.xlu0 0
  %248 = vperm.xlu0 %247, %v43
  %v249 = vpop.permute.xlu0 %248
  %250 = vset.pattern.permute.xlu0 0
  %251 = vperm.xlu0 %250, %v44
  %v252 = vpop.permute.xlu0 %251
  %253 = vset.pattern.permute.xlu0 0
  %254 = vperm.xlu0 %253, %v45
  %v255 = vpop.permute.xlu0 %254
  %256 = vset.pattern.permute.xlu0 0
  %257 = vperm.xlu0 %256, %v46
  %v258 = vpop.permute.xlu0 %257
  %259 = vset.pattern.permute.xlu0 0
  %260 = vperm.xlu0 %259, %v47
  %v261 = vpop.permute.xlu0 %260
  %262 = vset.pattern.permute.xlu0 0
  %263 = vperm.xlu0 %262, %v48
  %v264 = vpop.permute.xlu0 %263
  %265 = vset.pattern.permute.xlu0 0
  %266 = vperm.xlu0 %265, %v49
  %v267 = vpop.permute.xlu0 %266
  %268 = vset.pattern.permute.xlu0 0
  %269 = vperm.xlu0 %268, %v50
  %v270 = vpop.permute.xlu0 %269
  %271 = vset.pattern.permute.xlu0 0
  %272 = vperm.xlu0 %271, %v51
  %v273 = vpop.permute.xlu0 %272
  %274 = vset.pattern.permute.xlu0 0
  %275 = vperm.xlu0 %274, %v52
  %v276 = vpop.permute.xlu0 %275
  %277 = vset.pattern.permute.xlu0 0
  %278 = vperm.xlu0 %277, %v53
  %v279 = vpop.permute.xlu0 %278
  %280 = vset.pattern.permute.xlu0 0
  %281 = vperm.xlu0 %280, %v54
  %v282 = vpop.permute.xlu0 %281
  %283 = vset.pattern.permute.xlu0 0
  %284 = vperm.xlu0 %283, %v55
  %v285 = vpop.permute.xlu0 %284
  %286 = vset.pattern.permute.xlu0 0
  %287 = vperm.xlu0 %286, %v56
  %v288 = vpop.permute.xlu0 %287
  %289 = vset.pattern.permute.xlu0 0
  %290 = vperm.xlu0 %289, %v57
  %v291 = vpop.permute.xlu0 %290
  %292 = vset.pattern.permute.xlu0 0
  %293 = vperm.xlu0 %292, %v58
  %v294 = vpop.permute.xlu0 %293
  %295 = vset.pattern.permute.xlu0 0
  %296 = vperm.xlu0 %295, %v59
  %v297 = vpop.permute.xlu0 %296
  %298 = vset.pattern.permute.xlu0 0
  %299 = vperm.xlu0 %298, %v60
  %v300 = vpop.permute.xlu0 %299
  %301 = vset.pattern.permute.xlu0 0
  %302 = vperm.xlu0 %301, %v61
  %v303 = vpop.permute.xlu0 %302
  %304 = vset.pattern.permute.xlu0 0
  %305 = vperm.xlu0 %304, %v62
  %v306 = vpop.permute.xlu0 %305
  %307 = vset.pattern.permute.xlu0 0
  %308 = vperm.xlu0 %307, %v63
  %v309 = vpop.permute.xlu0 %308
  %310 = vset.pattern.permute.xlu0 0
  %311 = vperm.xlu0 %310, %v64
  %v312 = vpop.permute.xlu0 %311
  %313 = vset.pattern.permute.xlu0 0
  %314 = vperm.xlu0 %313, %v65
  %v315 = vpop.permute.xlu0 %314
  %316 = vset.pattern.permute.xlu0 0
  %317 = vperm.xlu0 %316, %v66
  %v318 = vpop.permute.xlu0 %317
  %319 = vset.pattern.permute.xlu0 0
  %320 = vperm.xlu0 %319, %v67
  %v321 = vpop.permute.xlu0 %320
  %322 = vset.pattern.permute.xlu0 0
  %323 = vperm.xlu0 %322, %v68
  %v324 = vpop.permute.xlu0 %323
  %325 = vset.pattern.permute.xlu0 0
  %326 = vperm.xlu0 %325, %v69
  %v327 = vpop.permute.xlu0 %326
  %328 = vset.pattern.permute.xlu0 0
  %329 = vperm.xlu0 %328, %v70
  %v330 = vpop.permute.xlu0 %329
  %331 = vset.pattern.permute.xlu0 0
  %332 = vperm.xlu0 %331, %v71
  %v333 = vpop.permute.xlu0 %332
  %334 = vset.pattern.permute.xlu0 0
  %335 = vperm.xlu0 %334, %v72
  %v336 = vpop.permute.xlu0 %335
  %337 = vset.pattern.permute.xlu0 0
  %338 = vperm.xlu0 %337, %v73
  %v339 = vpop.permute.xlu0 %338
  %340 = vset.pattern.permute.xlu0 0
  %341 = vperm.xlu0 %340, %v74
  %v342 = vpop.permute.xlu0 %341
  %343 = vset.pattern.permute.xlu0 0
  %344 = vperm.xlu0 %343, %v75
  %v345 = vpop.permute.xlu0 %344
  %346 = vset.pattern.permute.xlu0 0
  %347 = vperm.xlu0 %346, %v76
  %v348 = vpop.permute.xlu0 %347
  %349 = vset.pattern.permute.xlu0 0
  %350 = vperm.xlu0 %349, %v77
  %v351 = vpop.permute.xlu0 %350
  %vm352 = vcmp.eq.s32.totalorder %v162, %v159
  %vm353 = vcmp.eq.s32.totalorder %v165, %v159
  %vm354 = vcmp.eq.s32.totalorder %v168, %v159
  %vm355 = vcmp.eq.s32.totalorder %v171, %v159
  %vm356 = vcmp.eq.s32.totalorder %v174, %v159
  %vm357 = vcmp.eq.s32.totalorder %v177, %v159
  %vm358 = vcmp.eq.s32.totalorder %v180, %v159
  %vm359 = vcmp.eq.s32.totalorder %v183, %v159
  %vm360 = vcmp.eq.s32.totalorder %v186, %v159
  %vm361 = vcmp.eq.s32.totalorder %v189, %v159
  %vm362 = vcmp.eq.s32.totalorder %v192, %v159
  %vm363 = vcmp.eq.s32.totalorder %v195, %v159
  %vm364 = vcmp.eq.s32.totalorder %v198, %v159
  %vm365 = vcmp.eq.s32.totalorder %v201, %v159
  %vm366 = vcmp.eq.s32.totalorder %v204, %v159
  %vm367 = vcmp.eq.s32.totalorder %v207, %v159
  %vm368 = vcmp.eq.s32.totalorder %v210, %v159
  %vm369 = vcmp.eq.s32.totalorder %v213, %v159
  %vm370 = vcmp.eq.s32.totalorder %v216, %v159
  %vm371 = vcmp.eq.s32.totalorder %v219, %v159
  %vm372 = vcmp.eq.s32.totalorder %v222, %v159
  %vm373 = vcmp.eq.s32.totalorder %v225, %v159
  %vm374 = vcmp.eq.s32.totalorder %v228, %v159
  %vm375 = vcmp.eq.s32.totalorder %v231, %v159
  %vm376 = vcmp.eq.s32.totalorder %v234, %v159
  %vm377 = vcmp.eq.s32.totalorder %v237, %v159
  %vm378 = vcmp.eq.s32.totalorder %v240, %v159
  %vm379 = vcmp.eq.s32.totalorder %v243, %v159
  %vm380 = vcmp.eq.s32.totalorder %v246, %v159
  %vm381 = vcmp.eq.s32.totalorder %v249, %v159
  %vm382 = vcmp.eq.s32.totalorder %v252, %v159
  %vm383 = vcmp.eq.s32.totalorder %v255, %v159
  %vm384 = vcmp.eq.s32.totalorder %v258, %v159
  %vm385 = vcmp.eq.s32.totalorder %v261, %v159
  %vm386 = vcmp.eq.s32.totalorder %v264, %v159
  %vm387 = vcmp.eq.s32.totalorder %v267, %v159
  %vm388 = vcmp.eq.s32.totalorder %v270, %v159
  %vm389 = vcmp.eq.s32.totalorder %v273, %v159
  %vm390 = vcmp.eq.s32.totalorder %v276, %v159
  %vm391 = vcmp.eq.s32.totalorder %v279, %v159
  %vm392 = vcmp.eq.s32.totalorder %v282, %v159
  %vm393 = vcmp.eq.s32.totalorder %v285, %v159
  %vm394 = vcmp.eq.s32.totalorder %v288, %v159
  %vm395 = vcmp.eq.s32.totalorder %v291, %v159
  %vm396 = vcmp.eq.s32.totalorder %v294, %v159
  %vm397 = vcmp.eq.s32.totalorder %v297, %v159
  %vm398 = vcmp.eq.s32.totalorder %v300, %v159
  %vm399 = vcmp.eq.s32.totalorder %v303, %v159
  %vm400 = vcmp.eq.s32.totalorder %v306, %v159
  %vm401 = vcmp.eq.s32.totalorder %v309, %v159
  %vm402 = vcmp.eq.s32.totalorder %v312, %v159
  %vm403 = vcmp.eq.s32.totalorder %v315, %v159
  %vm404 = vcmp.eq.s32.totalorder %v318, %v159
  %vm405 = vcmp.eq.s32.totalorder %v321, %v159
  %vm406 = vcmp.eq.s32.totalorder %v324, %v159
  %vm407 = vcmp.eq.s32.totalorder %v327, %v159
  %vm408 = vcmp.eq.s32.totalorder %v330, %v159
  %vm409 = vcmp.eq.s32.totalorder %v333, %v159
  %vm410 = vcmp.eq.s32.totalorder %v336, %v159
  %vm411 = vcmp.eq.s32.totalorder %v339, %v159
  %vm412 = vcmp.eq.s32.totalorder %v342, %v159
  %vm413 = vcmp.eq.s32.totalorder %v345, %v159
  %vm414 = vcmp.eq.s32.totalorder %v348, %v159
  %vm415 = vcmp.eq.s32.totalorder %v351, %v159
  %417 = vset.pattern.permute.xlu0 0
  %418 = vperm.xlu0 %417, %v78
  %v419 = vpop.permute.xlu0 %418
  %422 = vset.pattern.permute.xlu0 0
  %423 = vperm.xlu0 %422, %v79
  %v424 = vpop.permute.xlu0 %423
  %427 = vset.pattern.permute.xlu0 0
  %428 = vperm.xlu0 %427, %v80
  %v429 = vpop.permute.xlu0 %428
  %432 = vset.pattern.permute.xlu0 0
  %433 = vperm.xlu0 %432, %v81
  %v434 = vpop.permute.xlu0 %433
  %437 = vset.pattern.permute.xlu0 0
  %438 = vperm.xlu0 %437, %v82
  %v439 = vpop.permute.xlu0 %438
  %442 = vset.pattern.permute.xlu0 0
  %443 = vperm.xlu0 %442, %v83
  %v444 = vpop.permute.xlu0 %443
  %447 = vset.pattern.permute.xlu0 0
  %448 = vperm.xlu0 %447, %v84
  %v449 = vpop.permute.xlu0 %448
  %452 = vset.pattern.permute.xlu0 0
  %453 = vperm.xlu0 %452, %v85
  %v454 = vpop.permute.xlu0 %453
  %457 = vset.pattern.permute.xlu0 0
  %458 = vperm.xlu0 %457, %v86
  %v459 = vpop.permute.xlu0 %458
  %462 = vset.pattern.permute.xlu0 0
  %463 = vperm.xlu0 %462, %v87
  %v464 = vpop.permute.xlu0 %463
  %467 = vset.pattern.permute.xlu0 0
  %468 = vperm.xlu0 %467, %v88
  %v469 = vpop.permute.xlu0 %468
  %472 = vset.pattern.permute.xlu0 0
  %473 = vperm.xlu0 %472, %v89
  %v474 = vpop.permute.xlu0 %473
  %477 = vset.pattern.permute.xlu0 0
  %478 = vperm.xlu0 %477, %v90
  %v479 = vpop.permute.xlu0 %478
  %482 = vset.pattern.permute.xlu0 0
  %483 = vperm.xlu0 %482, %v91
  %v484 = vpop.permute.xlu0 %483
  %487 = vset.pattern.permute.xlu0 0
  %488 = vperm.xlu0 %487, %v92
  %v489 = vpop.permute.xlu0 %488
  %492 = vset.pattern.permute.xlu0 0
  %493 = vperm.xlu0 %492, %v93
  %v494 = vpop.permute.xlu0 %493
  %497 = vset.pattern.permute.xlu0 0
  %498 = vperm.xlu0 %497, %v94
  %v499 = vpop.permute.xlu0 %498
  %502 = vset.pattern.permute.xlu0 0
  %503 = vperm.xlu0 %502, %v95
  %v504 = vpop.permute.xlu0 %503
  %507 = vset.pattern.permute.xlu0 0
  %508 = vperm.xlu0 %507, %v96
  %v509 = vpop.permute.xlu0 %508
  %512 = vset.pattern.permute.xlu0 0
  %513 = vperm.xlu0 %512, %v97
  %v514 = vpop.permute.xlu0 %513
  %517 = vset.pattern.permute.xlu0 0
  %518 = vperm.xlu0 %517, %v98
  %v519 = vpop.permute.xlu0 %518
  %522 = vset.pattern.permute.xlu0 0
  %523 = vperm.xlu0 %522, %v99
  %v524 = vpop.permute.xlu0 %523
  %527 = vset.pattern.permute.xlu0 0
  %528 = vperm.xlu0 %527, %v100
  %v529 = vpop.permute.xlu0 %528
  %532 = vset.pattern.permute.xlu0 0
  %533 = vperm.xlu0 %532, %v101
  %v534 = vpop.permute.xlu0 %533
  %537 = vset.pattern.permute.xlu0 0
  %538 = vperm.xlu0 %537, %v102
  %v539 = vpop.permute.xlu0 %538
  %542 = vset.pattern.permute.xlu0 0
  %543 = vperm.xlu0 %542, %v103
  %v544 = vpop.permute.xlu0 %543
  %547 = vset.pattern.permute.xlu0 0
  %548 = vperm.xlu0 %547, %v104
  %v549 = vpop.permute.xlu0 %548
  %552 = vset.pattern.permute.xlu0 0
  %553 = vperm.xlu0 %552, %v105
  %v554 = vpop.permute.xlu0 %553
  %557 = vset.pattern.permute.xlu0 0
  %558 = vperm.xlu0 %557, %v106
  %v559 = vpop.permute.xlu0 %558
  %562 = vset.pattern.permute.xlu0 0
  %563 = vperm.xlu0 %562, %v107
  %v564 = vpop.permute.xlu0 %563
  %567 = vset.pattern.permute.xlu0 0
  %568 = vperm.xlu0 %567, %v108
  %v569 = vpop.permute.xlu0 %568
  %572 = vset.pattern.permute.xlu0 0
  %573 = vperm.xlu0 %572, %v109
  %v574 = vpop.permute.xlu0 %573
  %577 = vset.pattern.permute.xlu0 0
  %578 = vperm.xlu0 %577, %v110
  %v579 = vpop.permute.xlu0 %578
  %582 = vset.pattern.permute.xlu0 0
  %583 = vperm.xlu0 %582, %v111
  %v584 = vpop.permute.xlu0 %583
  %587 = vset.pattern.permute.xlu0 0
  %588 = vperm.xlu0 %587, %v112
  %v589 = vpop.permute.xlu0 %588
  %592 = vset.pattern.permute.xlu0 0
  %593 = vperm.xlu0 %592, %v113
  %v594 = vpop.permute.xlu0 %593
  %597 = vset.pattern.permute.xlu0 0
  %598 = vperm.xlu0 %597, %v114
  %v599 = vpop.permute.xlu0 %598
  %602 = vset.pattern.permute.xlu0 0
  %603 = vperm.xlu0 %602, %v115
  %v604 = vpop.permute.xlu0 %603
  %607 = vset.pattern.permute.xlu0 0
  %608 = vperm.xlu0 %607, %v116
  %v609 = vpop.permute.xlu0 %608
  %612 = vset.pattern.permute.xlu0 0
  %613 = vperm.xlu0 %612, %v117
  %v614 = vpop.permute.xlu0 %613
  %617 = vset.pattern.permute.xlu0 0
  %618 = vperm.xlu0 %617, %v118
  %v619 = vpop.permute.xlu0 %618
  %622 = vset.pattern.permute.xlu0 0
  %623 = vperm.xlu0 %622, %v119
  %v624 = vpop.permute.xlu0 %623
  %627 = vset.pattern.permute.xlu0 0
  %628 = vperm.xlu0 %627, %v120
  %v629 = vpop.permute.xlu0 %628
  %632 = vset.pattern.permute.xlu0 0
  %633 = vperm.xlu0 %632, %v121
  %v634 = vpop.permute.xlu0 %633
  %637 = vset.pattern.permute.xlu0 0
  %638 = vperm.xlu0 %637, %v122
  %v639 = vpop.permute.xlu0 %638
  %642 = vset.pattern.permute.xlu0 0
  %643 = vperm.xlu0 %642, %v123
  %v644 = vpop.permute.xlu0 %643
  %647 = vset.pattern.permute.xlu0 0
  %648 = vperm.xlu0 %647, %v124
  %v649 = vpop.permute.xlu0 %648
  %652 = vset.pattern.permute.xlu0 0
  %653 = vperm.xlu0 %652, %v125
  %v654 = vpop.permute.xlu0 %653
  %657 = vset.pattern.permute.xlu0 0
  %658 = vperm.xlu0 %657, %v126
  %v659 = vpop.permute.xlu0 %658
  %662 = vset.pattern.permute.xlu0 0
  %663 = vperm.xlu0 %662, %v127
  %v664 = vpop.permute.xlu0 %663
  %667 = vset.pattern.permute.xlu0 0
  %668 = vperm.xlu0 %667, %v128
  %v669 = vpop.permute.xlu0 %668
  %672 = vset.pattern.permute.xlu0 0
  %673 = vperm.xlu0 %672, %v129
  %v674 = vpop.permute.xlu0 %673
  %677 = vset.pattern.permute.xlu0 0
  %678 = vperm.xlu0 %677, %v130
  %v679 = vpop.permute.xlu0 %678
  %682 = vset.pattern.permute.xlu0 0
  %683 = vperm.xlu0 %682, %v131
  %v684 = vpop.permute.xlu0 %683
  %687 = vset.pattern.permute.xlu0 0
  %688 = vperm.xlu0 %687, %v132
  %v689 = vpop.permute.xlu0 %688
  %692 = vset.pattern.permute.xlu0 0
  %693 = vperm.xlu0 %692, %v133
  %v694 = vpop.permute.xlu0 %693
  %697 = vset.pattern.permute.xlu0 0
  %698 = vperm.xlu0 %697, %v134
  %v699 = vpop.permute.xlu0 %698
  %702 = vset.pattern.permute.xlu0 0
  %703 = vperm.xlu0 %702, %v135
  %v704 = vpop.permute.xlu0 %703
  %707 = vset.pattern.permute.xlu0 0
  %708 = vperm.xlu0 %707, %v136
  %v709 = vpop.permute.xlu0 %708
  %712 = vset.pattern.permute.xlu0 0
  %713 = vperm.xlu0 %712, %v137
  %v714 = vpop.permute.xlu0 %713
  %717 = vset.pattern.permute.xlu0 0
  %718 = vperm.xlu0 %717, %v138
  %v719 = vpop.permute.xlu0 %718
  %722 = vset.pattern.permute.xlu0 0
  %723 = vperm.xlu0 %722, %v139
  %v724 = vpop.permute.xlu0 %723
  %727 = vset.pattern.permute.xlu0 0
  %728 = vperm.xlu0 %727, %v140
  %v729 = vpop.permute.xlu0 %728
  %732 = vset.pattern.permute.xlu0 0
  %733 = vperm.xlu0 %732, %v141
  %v734 = vpop.permute.xlu0 %733
  %v736 = vsel %vm352, %v419, 0.0
  %v737 = vsel %vm353, %v424, 0.0
  %v738 = vsel %vm354, %v429, 0.0
  %v739 = vsel %vm355, %v434, 0.0
  %v740 = vsel %vm356, %v439, 0.0
  %v741 = vsel %vm357, %v444, 0.0
  %v742 = vsel %vm358, %v449, 0.0
  %v743 = vsel %vm359, %v454, 0.0
  %v744 = vsel %vm360, %v459, 0.0
  %v745 = vsel %vm361, %v464, 0.0
  %v746 = vsel %vm362, %v469, 0.0
  %v747 = vsel %vm363, %v474, 0.0
  %v748 = vsel %vm364, %v479, 0.0
  %v749 = vsel %vm365, %v484, 0.0
  %v750 = vsel %vm366, %v489, 0.0
  %v751 = vsel %vm367, %v494, 0.0
  %v752 = vsel %vm368, %v499, 0.0
  %v753 = vsel %vm369, %v504, 0.0
  %v754 = vsel %vm370, %v509, 0.0
  %v755 = vsel %vm371, %v514, 0.0
  %v756 = vsel %vm372, %v519, 0.0
  %v757 = vsel %vm373, %v524, 0.0
  %v758 = vsel %vm374, %v529, 0.0
  %v759 = vsel %vm375, %v534, 0.0
  %v760 = vsel %vm376, %v539, 0.0
  %v761 = vsel %vm377, %v544, 0.0
  %v762 = vsel %vm378, %v549, 0.0
  %v763 = vsel %vm379, %v554, 0.0
  %v764 = vsel %vm380, %v559, 0.0
  %v765 = vsel %vm381, %v564, 0.0
  %v766 = vsel %vm382, %v569, 0.0
  %v767 = vsel %vm383, %v574, 0.0
  %v768 = vsel %vm384, %v579, 0.0
  %v769 = vsel %vm385, %v584, 0.0
  %v770 = vsel %vm386, %v589, 0.0
  %v771 = vsel %vm387, %v594, 0.0
  %v772 = vsel %vm388, %v599, 0.0
  %v773 = vsel %vm389, %v604, 0.0
  %v774 = vsel %vm390, %v609, 0.0
  %v775 = vsel %vm391, %v614, 0.0
  %v776 = vsel %vm392, %v619, 0.0
  %v777 = vsel %vm393, %v624, 0.0
  %v778 = vsel %vm394, %v629, 0.0
  %v779 = vsel %vm395, %v634, 0.0
  %v780 = vsel %vm396, %v639, 0.0
  %v781 = vsel %vm397, %v644, 0.0
  %v782 = vsel %vm398, %v649, 0.0
  %v783 = vsel %vm399, %v654, 0.0
  %v784 = vsel %vm400, %v659, 0.0
  %v785 = vsel %vm401, %v664, 0.0
  %v786 = vsel %vm402, %v669, 0.0
  %v787 = vsel %vm403, %v674, 0.0
  %v788 = vsel %vm404, %v679, 0.0
  %v789 = vsel %vm405, %v684, 0.0
  %v790 = vsel %vm406, %v689, 0.0
  %v791 = vsel %vm407, %v694, 0.0
  %v792 = vsel %vm408, %v699, 0.0
  %v793 = vsel %vm409, %v704, 0.0
  %v794 = vsel %vm410, %v709, 0.0
  %v795 = vsel %vm411, %v714, 0.0
  %v796 = vsel %vm412, %v719, 0.0
  %v797 = vsel %vm413, %v724, 0.0
  %v798 = vsel %vm414, %v729, 0.0
  %v799 = vsel %vm415, %v734, 0.0
  %800 = vset.pattern.permute.xlu0 1
  %801 = vperm.xlu0 %800, %v14
  %v802 = vpop.permute.xlu0 %801
  %803 = vset.pattern.permute.xlu0 1
  %804 = vperm.xlu0 %803, %v15
  %v805 = vpop.permute.xlu0 %804
  %806 = vset.pattern.permute.xlu0 1
  %807 = vperm.xlu0 %806, %v16
  %v808 = vpop.permute.xlu0 %807
  %809 = vset.pattern.permute.xlu0 1
  %810 = vperm.xlu0 %809, %v17
  %v811 = vpop.permute.xlu0 %810
  %812 = vset.pattern.permute.xlu0 1
  %813 = vperm.xlu0 %812, %v18
  %v814 = vpop.permute.xlu0 %813
  %815 = vset.pattern.permute.xlu0 1
  %816 = vperm.xlu0 %815, %v19
  %v817 = vpop.permute.xlu0 %816
  %818 = vset.pattern.permute.xlu0 1
  %819 = vperm.xlu0 %818, %v20
  %v820 = vpop.permute.xlu0 %819
  %821 = vset.pattern.permute.xlu0 1
  %822 = vperm.xlu0 %821, %v21
  %v823 = vpop.permute.xlu0 %822
  %824 = vset.pattern.permute.xlu0 1
  %825 = vperm.xlu0 %824, %v22
  %v826 = vpop.permute.xlu0 %825
  %827 = vset.pattern.permute.xlu0 1
  %828 = vperm.xlu0 %827, %v23
  %v829 = vpop.permute.xlu0 %828
  %830 = vset.pattern.permute.xlu0 1
  %831 = vperm.xlu0 %830, %v24
  %v832 = vpop.permute.xlu0 %831
  %833 = vset.pattern.permute.xlu0 1
  %834 = vperm.xlu0 %833, %v25
  %v835 = vpop.permute.xlu0 %834
  %836 = vset.pattern.permute.xlu0 1
  %837 = vperm.xlu0 %836, %v26
  %v838 = vpop.permute.xlu0 %837
  %839 = vset.pattern.permute.xlu0 1
  %840 = vperm.xlu0 %839, %v27
  %v841 = vpop.permute.xlu0 %840
  %842 = vset.pattern.permute.xlu0 1
  %843 = vperm.xlu0 %842, %v28
  %v844 = vpop.permute.xlu0 %843
  %845 = vset.pattern.permute.xlu0 1
  %846 = vperm.xlu0 %845, %v29
  %v847 = vpop.permute.xlu0 %846
  %848 = vset.pattern.permute.xlu0 1
  %849 = vperm.xlu0 %848, %v30
  %v850 = vpop.permute.xlu0 %849
  %851 = vset.pattern.permute.xlu0 1
  %852 = vperm.xlu0 %851, %v31
  %v853 = vpop.permute.xlu0 %852
  %854 = vset.pattern.permute.xlu0 1
  %855 = vperm.xlu0 %854, %v32
  %v856 = vpop.permute.xlu0 %855
  %857 = vset.pattern.permute.xlu0 1
  %858 = vperm.xlu0 %857, %v33
  %v859 = vpop.permute.xlu0 %858
  %860 = vset.pattern.permute.xlu0 1
  %861 = vperm.xlu0 %860, %v34
  %v862 = vpop.permute.xlu0 %861
  %863 = vset.pattern.permute.xlu0 1
  %864 = vperm.xlu0 %863, %v35
  %v865 = vpop.permute.xlu0 %864
  %866 = vset.pattern.permute.xlu0 1
  %867 = vperm.xlu0 %866, %v36
  %v868 = vpop.permute.xlu0 %867
  %869 = vset.pattern.permute.xlu0 1
  %870 = vperm.xlu0 %869, %v37
  %v871 = vpop.permute.xlu0 %870
  %872 = vset.pattern.permute.xlu0 1
  %873 = vperm.xlu0 %872, %v38
  %v874 = vpop.permute.xlu0 %873
  %875 = vset.pattern.permute.xlu0 1
  %876 = vperm.xlu0 %875, %v39
  %v877 = vpop.permute.xlu0 %876
  %878 = vset.pattern.permute.xlu0 1
  %879 = vperm.xlu0 %878, %v40
  %v880 = vpop.permute.xlu0 %879
  %881 = vset.pattern.permute.xlu0 1
  %882 = vperm.xlu0 %881, %v41
  %v883 = vpop.permute.xlu0 %882
  %884 = vset.pattern.permute.xlu0 1
  %885 = vperm.xlu0 %884, %v42
  %v886 = vpop.permute.xlu0 %885
  %887 = vset.pattern.permute.xlu0 1
  %888 = vperm.xlu0 %887, %v43
  %v889 = vpop.permute.xlu0 %888
  %890 = vset.pattern.permute.xlu0 1
  %891 = vperm.xlu0 %890, %v44
  %v892 = vpop.permute.xlu0 %891
  %893 = vset.pattern.permute.xlu0 1
  %894 = vperm.xlu0 %893, %v45
  %v895 = vpop.permute.xlu0 %894
  %896 = vset.pattern.permute.xlu0 1
  %897 = vperm.xlu0 %896, %v46
  %v898 = vpop.permute.xlu0 %897
  %899 = vset.pattern.permute.xlu0 1
  %900 = vperm.xlu0 %899, %v47
  %v901 = vpop.permute.xlu0 %900
  %902 = vset.pattern.permute.xlu0 1
  %903 = vperm.xlu0 %902, %v48
  %v904 = vpop.permute.xlu0 %903
  %905 = vset.pattern.permute.xlu0 1
  %906 = vperm.xlu0 %905, %v49
  %v907 = vpop.permute.xlu0 %906
  %908 = vset.pattern.permute.xlu0 1
  %909 = vperm.xlu0 %908, %v50
  %v910 = vpop.permute.xlu0 %909
  %911 = vset.pattern.permute.xlu0 1
  %912 = vperm.xlu0 %911, %v51
  %v913 = vpop.permute.xlu0 %912
  %914 = vset.pattern.permute.xlu0 1
  %915 = vperm.xlu0 %914, %v52
  %v916 = vpop.permute.xlu0 %915
  %917 = vset.pattern.permute.xlu0 1
  %918 = vperm.xlu0 %917, %v53
  %v919 = vpop.permute.xlu0 %918
  %920 = vset.pattern.permute.xlu0 1
  %921 = vperm.xlu0 %920, %v54
  %v922 = vpop.permute.xlu0 %921
  %923 = vset.pattern.permute.xlu0 1
  %924 = vperm.xlu0 %923, %v55
  %v925 = vpop.permute.xlu0 %924
  %926 = vset.pattern.permute.xlu0 1
  %927 = vperm.xlu0 %926, %v56
  %v928 = vpop.permute.xlu0 %927
  %929 = vset.pattern.permute.xlu0 1
  %930 = vperm.xlu0 %929, %v57
  %v931 = vpop.permute.xlu0 %930
  %932 = vset.pattern.permute.xlu0 1
  %933 = vperm.xlu0 %932, %v58
  %v934 = vpop.permute.xlu0 %933
  %935 = vset.pattern.permute.xlu0 1
  %936 = vperm.xlu0 %935, %v59
  %v937 = vpop.permute.xlu0 %936
  %938 = vset.pattern.permute.xlu0 1
  %939 = vperm.xlu0 %938, %v60
  %v940 = vpop.permute.xlu0 %939
  %941 = vset.pattern.permute.xlu0 1
  %942 = vperm.xlu0 %941, %v61
  %v943 = vpop.permute.xlu0 %942
  %944 = vset.pattern.permute.xlu0 1
  %945 = vperm.xlu0 %944, %v62
  %v946 = vpop.permute.xlu0 %945
  %947 = vset.pattern.permute.xlu0 1
  %948 = vperm.xlu0 %947, %v63
  %v949 = vpop.permute.xlu0 %948
  %950 = vset.pattern.permute.xlu0 1
  %951 = vperm.xlu0 %950, %v64
  %v952 = vpop.permute.xlu0 %951
  %953 = vset.pattern.permute.xlu0 1
  %954 = vperm.xlu0 %953, %v65
  %v955 = vpop.permute.xlu0 %954
  %956 = vset.pattern.permute.xlu0 1
  %957 = vperm.xlu0 %956, %v66
  %v958 = vpop.permute.xlu0 %957
  %959 = vset.pattern.permute.xlu0 1
  %960 = vperm.xlu0 %959, %v67
  %v961 = vpop.permute.xlu0 %960
  %962 = vset.pattern.permute.xlu0 1
  %963 = vperm.xlu0 %962, %v68
  %v964 = vpop.permute.xlu0 %963
  %965 = vset.pattern.permute.xlu0 1
  %966 = vperm.xlu0 %965, %v69
  %v967 = vpop.permute.xlu0 %966
  %968 = vset.pattern.permute.xlu0 1
  %969 = vperm.xlu0 %968, %v70
  %v970 = vpop.permute.xlu0 %969
  %971 = vset.pattern.permute.xlu0 1
  %972 = vperm.xlu0 %971, %v71
  %v973 = vpop.permute.xlu0 %972
  %974 = vset.pattern.permute.xlu0 1
  %975 = vperm.xlu0 %974, %v72
  %v976 = vpop.permute.xlu0 %975
  %977 = vset.pattern.permute.xlu0 1
  %978 = vperm.xlu0 %977, %v73
  %v979 = vpop.permute.xlu0 %978
  %980 = vset.pattern.permute.xlu0 1
  %981 = vperm.xlu0 %980, %v74
  %v982 = vpop.permute.xlu0 %981
  %983 = vset.pattern.permute.xlu0 1
  %984 = vperm.xlu0 %983, %v75
  %v985 = vpop.permute.xlu0 %984
  %986 = vset.pattern.permute.xlu0 1
  %987 = vperm.xlu0 %986, %v76
  %v988 = vpop.permute.xlu0 %987
  %989 = vset.pattern.permute.xlu0 1
  %990 = vperm.xlu0 %989, %v77
  %v991 = vpop.permute.xlu0 %990
  %vm992 = vcmp.eq.s32.totalorder %v802, %v159
  %vm993 = vcmp.eq.s32.totalorder %v805, %v159
  %vm994 = vcmp.eq.s32.totalorder %v808, %v159
  %vm995 = vcmp.eq.s32.totalorder %v811, %v159
  %vm996 = vcmp.eq.s32.totalorder %v814, %v159
  %vm997 = vcmp.eq.s32.totalorder %v817, %v159
  %vm998 = vcmp.eq.s32.totalorder %v820, %v159
  %vm999 = vcmp.eq.s32.totalorder %v823, %v159
  %vm1000 = vcmp.eq.s32.totalorder %v826, %v159
  %vm1001 = vcmp.eq.s32.totalorder %v829, %v159
  %vm1002 = vcmp.eq.s32.totalorder %v832, %v159
  %vm1003 = vcmp.eq.s32.totalorder %v835, %v159
  %vm1004 = vcmp.eq.s32.totalorder %v838, %v159
  %vm1005 = vcmp.eq.s32.totalorder %v841, %v159
  %vm1006 = vcmp.eq.s32.totalorder %v844, %v159
  %vm1007 = vcmp.eq.s32.totalorder %v847, %v159
  %vm1008 = vcmp.eq.s32.totalorder %v850, %v159
  %vm1009 = vcmp.eq.s32.totalorder %v853, %v159
  %vm1010 = vcmp.eq.s32.totalorder %v856, %v159
  %vm1011 = vcmp.eq.s32.totalorder %v859, %v159
  %vm1012 = vcmp.eq.s32.totalorder %v862, %v159
  %vm1013 = vcmp.eq.s32.totalorder %v865, %v159
  %vm1014 = vcmp.eq.s32.totalorder %v868, %v159
  %vm1015 = vcmp.eq.s32.totalorder %v871, %v159
  %vm1016 = vcmp.eq.s32.totalorder %v874, %v159
  %vm1017 = vcmp.eq.s32.totalorder %v877, %v159
  %vm1018 = vcmp.eq.s32.totalorder %v880, %v159
  %vm1019 = vcmp.eq.s32.totalorder %v883, %v159
  %vm1020 = vcmp.eq.s32.totalorder %v886, %v159
  %vm1021 = vcmp.eq.s32.totalorder %v889, %v159
  %vm1022 = vcmp.eq.s32.totalorder %v892, %v159
  %vm1023 = vcmp.eq.s32.totalorder %v895, %v159
  %vm1024 = vcmp.eq.s32.totalorder %v898, %v159
  %vm1025 = vcmp.eq.s32.totalorder %v901, %v159
  %vm1026 = vcmp.eq.s32.totalorder %v904, %v159
  %vm1027 = vcmp.eq.s32.totalorder %v907, %v159
  %vm1028 = vcmp.eq.s32.totalorder %v910, %v159
  %vm1029 = vcmp.eq.s32.totalorder %v913, %v159
  %vm1030 = vcmp.eq.s32.totalorder %v916, %v159
  %vm1031 = vcmp.eq.s32.totalorder %v919, %v159
  %vm1032 = vcmp.eq.s32.totalorder %v922, %v159
  %vm1033 = vcmp.eq.s32.totalorder %v925, %v159
  %vm1034 = vcmp.eq.s32.totalorder %v928, %v159
  %vm1035 = vcmp.eq.s32.totalorder %v931, %v159
  %vm1036 = vcmp.eq.s32.totalorder %v934, %v159
  %vm1037 = vcmp.eq.s32.totalorder %v937, %v159
  %vm1038 = vcmp.eq.s32.totalorder %v940, %v159
  %vm1039 = vcmp.eq.s32.totalorder %v943, %v159
  %vm1040 = vcmp.eq.s32.totalorder %v946, %v159
  %vm1041 = vcmp.eq.s32.totalorder %v949, %v159
  %vm1042 = vcmp.eq.s32.totalorder %v952, %v159
  %vm1043 = vcmp.eq.s32.totalorder %v955, %v159
  %vm1044 = vcmp.eq.s32.totalorder %v958, %v159
  %vm1045 = vcmp.eq.s32.totalorder %v961, %v159
  %vm1046 = vcmp.eq.s32.totalorder %v964, %v159
  %vm1047 = vcmp.eq.s32.totalorder %v967, %v159
  %vm1048 = vcmp.eq.s32.totalorder %v970, %v159
  %vm1049 = vcmp.eq.s32.totalorder %v973, %v159
  %vm1050 = vcmp.eq.s32.totalorder %v976, %v159
  %vm1051 = vcmp.eq.s32.totalorder %v979, %v159
  %vm1052 = vcmp.eq.s32.totalorder %v982, %v159
  %vm1053 = vcmp.eq.s32.totalorder %v985, %v159
  %vm1054 = vcmp.eq.s32.totalorder %v988, %v159
  %vm1055 = vcmp.eq.s32.totalorder %v991, %v159
  %1056 = vset.pattern.permute.xlu0 1
  %1057 = vperm.xlu0 %1056, %v78
  %v1058 = vpop.permute.xlu0 %1057
  %1060 = vset.pattern.permute.xlu0 1
  %1061 = vperm.xlu0 %1060, %v79
  %v1062 = vpop.permute.xlu0 %1061
  %1064 = vset.pattern.permute.xlu0 1
  %1065 = vperm.xlu0 %1064, %v80
  %v1066 = vpop.permute.xlu0 %1065
  %1068 = vset.pattern.permute.xlu0 1
  %1069 = vperm.xlu0 %1068, %v81
  %v1070 = vpop.permute.xlu0 %1069
  %1072 = vset.pattern.permute.xlu0 1
  %1073 = vperm.xlu0 %1072, %v82
  %v1074 = vpop.permute.xlu0 %1073
  %1076 = vset.pattern.permute.xlu0 1
  %1077 = vperm.xlu0 %1076, %v83
  %v1078 = vpop.permute.xlu0 %1077
  %1080 = vset.pattern.permute.xlu0 1
  %1081 = vperm.xlu0 %1080, %v84
  %v1082 = vpop.permute.xlu0 %1081
  %1084 = vset.pattern.permute.xlu0 1
  %1085 = vperm.xlu0 %1084, %v85
  %v1086 = vpop.permute.xlu0 %1085
  %1088 = vset.pattern.permute.xlu0 1
  %1089 = vperm.xlu0 %1088, %v86
  %v1090 = vpop.permute.xlu0 %1089
  %1092 = vset.pattern.permute.xlu0 1
  %1093 = vperm.xlu0 %1092, %v87
  %v1094 = vpop.permute.xlu0 %1093
  %1096 = vset.pattern.permute.xlu0 1
  %1097 = vperm.xlu0 %1096, %v88
  %v1098 = vpop.permute.xlu0 %1097
  %1100 = vset.pattern.permute.xlu0 1
  %1101 = vperm.xlu0 %1100, %v89
  %v1102 = vpop.permute.xlu0 %1101
  %1104 = vset.pattern.permute.xlu0 1
  %1105 = vperm.xlu0 %1104, %v90
  %v1106 = vpop.permute.xlu0 %1105
  %1108 = vset.pattern.permute.xlu0 1
  %1109 = vperm.xlu0 %1108, %v91
  %v1110 = vpop.permute.xlu0 %1109
  %1112 = vset.pattern.permute.xlu0 1
  %1113 = vperm.xlu0 %1112, %v92
  %v1114 = vpop.permute.xlu0 %1113
  %1116 = vset.pattern.permute.xlu0 1
  %1117 = vperm.xlu0 %1116, %v93
  %v1118 = vpop.permute.xlu0 %1117
  %1120 = vset.pattern.permute.xlu0 1
  %1121 = vperm.xlu0 %1120, %v94
  %v1122 = vpop.permute.xlu0 %1121
  %1124 = vset.pattern.permute.xlu0 1
  %1125 = vperm.xlu0 %1124, %v95
  %v1126 = vpop.permute.xlu0 %1125
  %1128 = vset.pattern.permute.xlu0 1
  %1129 = vperm.xlu0 %1128, %v96
  %v1130 = vpop.permute.xlu0 %1129
  %1132 = vset.pattern.permute.xlu0 1
  %1133 = vperm.xlu0 %1132, %v97
  %v1134 = vpop.permute.xlu0 %1133
  %1136 = vset.pattern.permute.xlu0 1
  %1137 = vperm.xlu0 %1136, %v98
  %v1138 = vpop.permute.xlu0 %1137
  %1140 = vset.pattern.permute.xlu0 1
  %1141 = vperm.xlu0 %1140, %v99
  %v1142 = vpop.permute.xlu0 %1141
  %1144 = vset.pattern.permute.xlu0 1
  %1145 = vperm.xlu0 %1144, %v100
  %v1146 = vpop.permute.xlu0 %1145
  %1148 = vset.pattern.permute.xlu0 1
  %1149 = vperm.xlu0 %1148, %v101
  %v1150 = vpop.permute.xlu0 %1149
  %1152 = vset.pattern.permute.xlu0 1
  %1153 = vperm.xlu0 %1152, %v102
  %v1154 = vpop.permute.xlu0 %1153
  %1156 = vset.pattern.permute.xlu0 1
  %1157 = vperm.xlu0 %1156, %v103
  %v1158 = vpop.permute.xlu0 %1157
  %1160 = vset.pattern.permute.xlu0 1
  %1161 = vperm.xlu0 %1160, %v104
  %v1162 = vpop.permute.xlu0 %1161
  %1164 = vset.pattern.permute.xlu0 1
  %1165 = vperm.xlu0 %1164, %v105
  %v1166 = vpop.permute.xlu0 %1165
  %1168 = vset.pattern.permute.xlu0 1
  %1169 = vperm.xlu0 %1168, %v106
  %v1170 = vpop.permute.xlu0 %1169
  %1172 = vset.pattern.permute.xlu0 1
  %1173 = vperm.xlu0 %1172, %v107
  %v1174 = vpop.permute.xlu0 %1173
  %1176 = vset.pattern.permute.xlu0 1
  %1177 = vperm.xlu0 %1176, %v108
  %v1178 = vpop.permute.xlu0 %1177
  %1180 = vset.pattern.permute.xlu0 1
  %1181 = vperm.xlu0 %1180, %v109
  %v1182 = vpop.permute.xlu0 %1181
  %1184 = vset.pattern.permute.xlu0 1
  %1185 = vperm.xlu0 %1184, %v110
  %v1186 = vpop.permute.xlu0 %1185
  %1188 = vset.pattern.permute.xlu0 1
  %1189 = vperm.xlu0 %1188, %v111
  %v1190 = vpop.permute.xlu0 %1189
  %1192 = vset.pattern.permute.xlu0 1
  %1193 = vperm.xlu0 %1192, %v112
  %v1194 = vpop.permute.xlu0 %1193
  %1196 = vset.pattern.permute.xlu0 1
  %1197 = vperm.xlu0 %1196, %v113
  %v1198 = vpop.permute.xlu0 %1197
  %1200 = vset.pattern.permute.xlu0 1
  %1201 = vperm.xlu0 %1200, %v114
  %v1202 = vpop.permute.xlu0 %1201
  %1204 = vset.pattern.permute.xlu0 1
  %1205 = vperm.xlu0 %1204, %v115
  %v1206 = vpop.permute.xlu0 %1205
  %1208 = vset.pattern.permute.xlu0 1
  %1209 = vperm.xlu0 %1208, %v116
  %v1210 = vpop.permute.xlu0 %1209
  %1212 = vset.pattern.permute.xlu0 1
  %1213 = vperm.xlu0 %1212, %v117
  %v1214 = vpop.permute.xlu0 %1213
  %1216 = vset.pattern.permute.xlu0 1
  %1217 = vperm.xlu0 %1216, %v118
  %v1218 = vpop.permute.xlu0 %1217
  %1220 = vset.pattern.permute.xlu0 1
  %1221 = vperm.xlu0 %1220, %v119
  %v1222 = vpop.permute.xlu0 %1221
  %1224 = vset.pattern.permute.xlu0 1
  %1225 = vperm.xlu0 %1224, %v120
  %v1226 = vpop.permute.xlu0 %1225
  %1228 = vset.pattern.permute.xlu0 1
  %1229 = vperm.xlu0 %1228, %v121
  %v1230 = vpop.permute.xlu0 %1229
  %1232 = vset.pattern.permute.xlu0 1
  %1233 = vperm.xlu0 %1232, %v122
  %v1234 = vpop.permute.xlu0 %1233
  %1236 = vset.pattern.permute.xlu0 1
  %1237 = vperm.xlu0 %1236, %v123
  %v1238 = vpop.permute.xlu0 %1237
  %1240 = vset.pattern.permute.xlu0 1
  %1241 = vperm.xlu0 %1240, %v124
  %v1242 = vpop.permute.xlu0 %1241
  %1244 = vset.pattern.permute.xlu0 1
  %1245 = vperm.xlu0 %1244, %v125
  %v1246 = vpop.permute.xlu0 %1245
  %1248 = vset.pattern.permute.xlu0 1
  %1249 = vperm.xlu0 %1248, %v126
  %v1250 = vpop.permute.xlu0 %1249
  %1252 = vset.pattern.permute.xlu0 1
  %1253 = vperm.xlu0 %1252, %v127
  %v1254 = vpop.permute.xlu0 %1253
  %1256 = vset.pattern.permute.xlu0 1
  %1257 = vperm.xlu0 %1256, %v128
  %v1258 = vpop.permute.xlu0 %1257
  %1260 = vset.pattern.permute.xlu0 1
  %1261 = vperm.xlu0 %1260, %v129
  %v1262 = vpop.permute.xlu0 %1261
  %1264 = vset.pattern.permute.xlu0 1
  %1265 = vperm.xlu0 %1264, %v130
  %v1266 = vpop.permute.xlu0 %1265
  %1268 = vset.pattern.permute.xlu0 1
  %1269 = vperm.xlu0 %1268, %v131
  %v1270 = vpop.permute.xlu0 %1269
  %1272 = vset.pattern.permute.xlu0 1
  %1273 = vperm.xlu0 %1272, %v132
  %v1274 = vpop.permute.xlu0 %1273
  %1276 = vset.pattern.permute.xlu0 1
  %1277 = vperm.xlu0 %1276, %v133
  %v1278 = vpop.permute.xlu0 %1277
  %1280 = vset.pattern.permute.xlu0 1
  %1281 = vperm.xlu0 %1280, %v134
  %v1282 = vpop.permute.xlu0 %1281
  %1284 = vset.pattern.permute.xlu0 1
  %1285 = vperm.xlu0 %1284, %v135
  %v1286 = vpop.permute.xlu0 %1285
  %1288 = vset.pattern.permute.xlu0 1
  %1289 = vperm.xlu0 %1288, %v136
  %v1290 = vpop.permute.xlu0 %1289
  %1292 = vset.pattern.permute.xlu0 1
  %1293 = vperm.xlu0 %1292, %v137
  %v1294 = vpop.permute.xlu0 %1293
  %1296 = vset.pattern.permute.xlu0 1
  %1297 = vperm.xlu0 %1296, %v138
  %v1298 = vpop.permute.xlu0 %1297
  %1300 = vset.pattern.permute.xlu0 1
  %1301 = vperm.xlu0 %1300, %v139
  %v1302 = vpop.permute.xlu0 %1301
  %1304 = vset.pattern.permute.xlu0 1
  %1305 = vperm.xlu0 %1304, %v140
  %v1306 = vpop.permute.xlu0 %1305
  %1308 = vset.pattern.permute.xlu0 1
  %1309 = vperm.xlu0 %1308, %v141
  %v1310 = vpop.permute.xlu0 %1309
  %v1312 = vsel %vm992, %v1058, 0.0
  %v1313 = vsel %vm993, %v1062, 0.0
  %v1314 = vsel %vm994, %v1066, 0.0
  %v1315 = vsel %vm995, %v1070, 0.0
  %v1316 = vsel %vm996, %v1074, 0.0
  %v1317 = vsel %vm997, %v1078, 0.0
  %v1318 = vsel %vm998, %v1082, 0.0
  %v1319 = vsel %vm999, %v1086, 0.0
  %v1320 = vsel %vm1000, %v1090, 0.0
  %v1321 = vsel %vm1001, %v1094, 0.0
  %v1322 = vsel %vm1002, %v1098, 0.0
  %v1323 = vsel %vm1003, %v1102, 0.0
  %v1324 = vsel %vm1004, %v1106, 0.0
  %v1325 = vsel %vm1005, %v1110, 0.0
  %v1326 = vsel %vm1006, %v1114, 0.0
  %v1327 = vsel %vm1007, %v1118, 0.0
  %v1328 = vsel %vm1008, %v1122, 0.0
  %v1329 = vsel %vm1009, %v1126, 0.0
  %v1330 = vsel %vm1010, %v1130, 0.0
  %v1331 = vsel %vm1011, %v1134, 0.0
  %v1332 = vsel %vm1012, %v1138, 0.0
  %v1333 = vsel %vm1013, %v1142, 0.0
  %v1334 = vsel %vm1014, %v1146, 0.0
  %v1335 = vsel %vm1015, %v1150, 0.0
  %v1336 = vsel %vm1016, %v1154, 0.0
  %v1337 = vsel %vm1017, %v1158, 0.0
  %v1338 = vsel %vm1018, %v1162, 0.0
  %v1339 = vsel %vm1019, %v1166, 0.0
  %v1340 = vsel %vm1020, %v1170, 0.0
  %v1341 = vsel %vm1021, %v1174, 0.0
  %v1342 = vsel %vm1022, %v1178, 0.0
  %v1343 = vsel %vm1023, %v1182, 0.0
  %v1344 = vsel %vm1024, %v1186, 0.0
  %v1345 = vsel %vm1025, %v1190, 0.0
  %v1346 = vsel %vm1026, %v1194, 0.0
  %v1347 = vsel %vm1027, %v1198, 0.0
  %v1348 = vsel %vm1028, %v1202, 0.0
  %v1349 = vsel %vm1029, %v1206, 0.0
  %v1350 = vsel %vm1030, %v1210, 0.0
  %v1351 = vsel %vm1031, %v1214, 0.0
  %v1352 = vsel %vm1032, %v1218, 0.0
  %v1353 = vsel %vm1033, %v1222, 0.0
  %v1354 = vsel %vm1034, %v1226, 0.0
  %v1355 = vsel %vm1035, %v1230, 0.0
  %v1356 = vsel %vm1036, %v1234, 0.0
  %v1357 = vsel %vm1037, %v1238, 0.0
  %v1358 = vsel %vm1038, %v1242, 0.0
  %v1359 = vsel %vm1039, %v1246, 0.0
  %v1360 = vsel %vm1040, %v1250, 0.0
  %v1361 = vsel %vm1041, %v1254, 0.0
  %v1362 = vsel %vm1042, %v1258, 0.0
  %v1363 = vsel %vm1043, %v1262, 0.0
  %v1364 = vsel %vm1044, %v1266, 0.0
  %v1365 = vsel %vm1045, %v1270, 0.0
  %v1366 = vsel %vm1046, %v1274, 0.0
  %v1367 = vsel %vm1047, %v1278, 0.0
  %v1368 = vsel %vm1048, %v1282, 0.0
  %v1369 = vsel %vm1049, %v1286, 0.0
  %v1370 = vsel %vm1050, %v1290, 0.0
  %v1371 = vsel %vm1051, %v1294, 0.0
  %v1372 = vsel %vm1052, %v1298, 0.0
  %v1373 = vsel %vm1053, %v1302, 0.0
  %v1374 = vsel %vm1054, %v1306, 0.0
  %v1375 = vsel %vm1055, %v1310, 0.0
  %v1376 = vadd.f32 %v736, %v1312
  %v1377 = vadd.f32 %v737, %v1313
  %v1378 = vadd.f32 %v738, %v1314
  %v1379 = vadd.f32 %v739, %v1315
  %v1380 = vadd.f32 %v740, %v1316
  %v1381 = vadd.f32 %v741, %v1317
  %v1382 = vadd.f32 %v742, %v1318
  %v1383 = vadd.f32 %v743, %v1319
  %v1384 = vadd.f32 %v744, %v1320
  %v1385 = vadd.f32 %v745, %v1321
  %v1386 = vadd.f32 %v746, %v1322
  %v1387 = vadd.f32 %v747, %v1323
  %v1388 = vadd.f32 %v748, %v1324
  %v1389 = vadd.f32 %v749, %v1325
  %v1390 = vadd.f32 %v750, %v1326
  %v1391 = vadd.f32 %v751, %v1327
  %v1392 = vadd.f32 %v752, %v1328
  %v1393 = vadd.f32 %v753, %v1329
  %v1394 = vadd.f32 %v754, %v1330
  %v1395 = vadd.f32 %v755, %v1331
  %v1396 = vadd.f32 %v756, %v1332
  %v1397 = vadd.f32 %v757, %v1333
  %v1398 = vadd.f32 %v758, %v1334
  %v1399 = vadd.f32 %v759, %v1335
  %v1400 = vadd.f32 %v760, %v1336
  %v1401 = vadd.f32 %v761, %v1337
  %v1402 = vadd.f32 %v762, %v1338
  %v1403 = vadd.f32 %v763, %v1339
  %v1404 = vadd.f32 %v764, %v1340
  %v1405 = vadd.f32 %v765, %v1341
  %v1406 = vadd.f32 %v766, %v1342
  %v1407 = vadd.f32 %v767, %v1343
  %v1408 = vadd.f32 %v768, %v1344
  %v1409 = vadd.f32 %v769, %v1345
  %v1410 = vadd.f32 %v770, %v1346
  %v1411 = vadd.f32 %v771, %v1347
  %v1412 = vadd.f32 %v772, %v1348
  %v1413 = vadd.f32 %v773, %v1349
  %v1414 = vadd.f32 %v774, %v1350
  %v1415 = vadd.f32 %v775, %v1351
  %v1416 = vadd.f32 %v776, %v1352
  %v1417 = vadd.f32 %v777, %v1353
  %v1418 = vadd.f32 %v778, %v1354
  %v1419 = vadd.f32 %v779, %v1355
  %v1420 = vadd.f32 %v780, %v1356
  %v1421 = vadd.f32 %v781, %v1357
  %v1422 = vadd.f32 %v782, %v1358
  %v1423 = vadd.f32 %v783, %v1359
  %v1424 = vadd.f32 %v784, %v1360
  %v1425 = vadd.f32 %v785, %v1361
  %v1426 = vadd.f32 %v786, %v1362
  %v1427 = vadd.f32 %v787, %v1363
  %v1428 = vadd.f32 %v788, %v1364
  %v1429 = vadd.f32 %v789, %v1365
  %v1430 = vadd.f32 %v790, %v1366
  %v1431 = vadd.f32 %v791, %v1367
  %v1432 = vadd.f32 %v792, %v1368
  %v1433 = vadd.f32 %v793, %v1369
  %v1434 = vadd.f32 %v794, %v1370
  %v1435 = vadd.f32 %v795, %v1371
  %v1436 = vadd.f32 %v796, %v1372
  %v1437 = vadd.f32 %v797, %v1373
  %v1438 = vadd.f32 %v798, %v1374
  %v1439 = vadd.f32 %v799, %v1375
  %1440 = vset.pattern.permute.xlu0 2
  %1441 = vperm.xlu0 %1440, %v14
  %v1442 = vpop.permute.xlu0 %1441
  %1443 = vset.pattern.permute.xlu0 2
  %1444 = vperm.xlu0 %1443, %v15
  %v1445 = vpop.permute.xlu0 %1444
  %1446 = vset.pattern.permute.xlu0 2
  %1447 = vperm.xlu0 %1446, %v16
  %v1448 = vpop.permute.xlu0 %1447
  %1449 = vset.pattern.permute.xlu0 2
  %1450 = vperm.xlu0 %1449, %v17
  %v1451 = vpop.permute.xlu0 %1450
  %1452 = vset.pattern.permute.xlu0 2
  %1453 = vperm.xlu0 %1452, %v18
  %v1454 = vpop.permute.xlu0 %1453
  %1455 = vset.pattern.permute.xlu0 2
  %1456 = vperm.xlu0 %1455, %v19
  %v1457 = vpop.permute.xlu0 %1456
  %1458 = vset.pattern.permute.xlu0 2
  %1459 = vperm.xlu0 %1458, %v20
  %v1460 = vpop.permute.xlu0 %1459
  %1461 = vset.pattern.permute.xlu0 2
  %1462 = vperm.xlu0 %1461, %v21
  %v1463 = vpop.permute.xlu0 %1462
  %1464 = vset.pattern.permute.xlu0 2
  %1465 = vperm.xlu0 %1464, %v22
  %v1466 = vpop.permute.xlu0 %1465
  %1467 = vset.pattern.permute.xlu0 2
  %1468 = vperm.xlu0 %1467, %v23
  %v1469 = vpop.permute.xlu0 %1468
  %1470 = vset.pattern.permute.xlu0 2
  %1471 = vperm.xlu0 %1470, %v24
  %v1472 = vpop.permute.xlu0 %1471
  %1473 = vset.pattern.permute.xlu0 2
  %1474 = vperm.xlu0 %1473, %v25
  %v1475 = vpop.permute.xlu0 %1474
  %1476 = vset.pattern.permute.xlu0 2
  %1477 = vperm.xlu0 %1476, %v26
  %v1478 = vpop.permute.xlu0 %1477
  %1479 = vset.pattern.permute.xlu0 2
  %1480 = vperm.xlu0 %1479, %v27
  %v1481 = vpop.permute.xlu0 %1480
  %1482 = vset.pattern.permute.xlu0 2
  %1483 = vperm.xlu0 %1482, %v28
  %v1484 = vpop.permute.xlu0 %1483
  %1485 = vset.pattern.permute.xlu0 2
  %1486 = vperm.xlu0 %1485, %v29
  %v1487 = vpop.permute.xlu0 %1486
  %1488 = vset.pattern.permute.xlu0 2
  %1489 = vperm.xlu0 %1488, %v30
  %v1490 = vpop.permute.xlu0 %1489
  %1491 = vset.pattern.permute.xlu0 2
  %1492 = vperm.xlu0 %1491, %v31
  %v1493 = vpop.permute.xlu0 %1492
  %1494 = vset.pattern.permute.xlu0 2
  %1495 = vperm.xlu0 %1494, %v32
  %v1496 = vpop.permute.xlu0 %1495
  %1497 = vset.pattern.permute.xlu0 2
  %1498 = vperm.xlu0 %1497, %v33
  %v1499 = vpop.permute.xlu0 %1498
  %1500 = vset.pattern.permute.xlu0 2
  %1501 = vperm.xlu0 %1500, %v34
  %v1502 = vpop.permute.xlu0 %1501
  %1503 = vset.pattern.permute.xlu0 2
  %1504 = vperm.xlu0 %1503, %v35
  %v1505 = vpop.permute.xlu0 %1504
  %1506 = vset.pattern.permute.xlu0 2
  %1507 = vperm.xlu0 %1506, %v36
  %v1508 = vpop.permute.xlu0 %1507
  %1509 = vset.pattern.permute.xlu0 2
  %1510 = vperm.xlu0 %1509, %v37
  %v1511 = vpop.permute.xlu0 %1510
  %1512 = vset.pattern.permute.xlu0 2
  %1513 = vperm.xlu0 %1512, %v38
  %v1514 = vpop.permute.xlu0 %1513
  %1515 = vset.pattern.permute.xlu0 2
  %1516 = vperm.xlu0 %1515, %v39
  %v1517 = vpop.permute.xlu0 %1516
  %1518 = vset.pattern.permute.xlu0 2
  %1519 = vperm.xlu0 %1518, %v40
  %v1520 = vpop.permute.xlu0 %1519
  %1521 = vset.pattern.permute.xlu0 2
  %1522 = vperm.xlu0 %1521, %v41
  %v1523 = vpop.permute.xlu0 %1522
  %1524 = vset.pattern.permute.xlu0 2
  %1525 = vperm.xlu0 %1524, %v42
  %v1526 = vpop.permute.xlu0 %1525
  %1527 = vset.pattern.permute.xlu0 2
  %1528 = vperm.xlu0 %1527, %v43
  %v1529 = vpop.permute.xlu0 %1528
  %1530 = vset.pattern.permute.xlu0 2
  %1531 = vperm.xlu0 %1530, %v44
  %v1532 = vpop.permute.xlu0 %1531
  %1533 = vset.pattern.permute.xlu0 2
  %1534 = vperm.xlu0 %1533, %v45
  %v1535 = vpop.permute.xlu0 %1534
  %1536 = vset.pattern.permute.xlu0 2
  %1537 = vperm.xlu0 %1536, %v46
  %v1538 = vpop.permute.xlu0 %1537
  %1539 = vset.pattern.permute.xlu0 2
  %1540 = vperm.xlu0 %1539, %v47
  %v1541 = vpop.permute.xlu0 %1540
  %1542 = vset.pattern.permute.xlu0 2
  %1543 = vperm.xlu0 %1542, %v48
  %v1544 = vpop.permute.xlu0 %1543
  %1545 = vset.pattern.permute.xlu0 2
  %1546 = vperm.xlu0 %1545, %v49
  %v1547 = vpop.permute.xlu0 %1546
  %1548 = vset.pattern.permute.xlu0 2
  %1549 = vperm.xlu0 %1548, %v50
  %v1550 = vpop.permute.xlu0 %1549
  %1551 = vset.pattern.permute.xlu0 2
  %1552 = vperm.xlu0 %1551, %v51
  %v1553 = vpop.permute.xlu0 %1552
  %1554 = vset.pattern.permute.xlu0 2
  %1555 = vperm.xlu0 %1554, %v52
  %v1556 = vpop.permute.xlu0 %1555
  %1557 = vset.pattern.permute.xlu0 2
  %1558 = vperm.xlu0 %1557, %v53
  %v1559 = vpop.permute.xlu0 %1558
  %1560 = vset.pattern.permute.xlu0 2
  %1561 = vperm.xlu0 %1560, %v54
  %v1562 = vpop.permute.xlu0 %1561
  %1563 = vset.pattern.permute.xlu0 2
  %1564 = vperm.xlu0 %1563, %v55
  %v1565 = vpop.permute.xlu0 %1564
  %1566 = vset.pattern.permute.xlu0 2
  %1567 = vperm.xlu0 %1566, %v56
  %v1568 = vpop.permute.xlu0 %1567
  %1569 = vset.pattern.permute.xlu0 2
  %1570 = vperm.xlu0 %1569, %v57
  %v1571 = vpop.permute.xlu0 %1570
  %1572 = vset.pattern.permute.xlu0 2
  %1573 = vperm.xlu0 %1572, %v58
  %v1574 = vpop.permute.xlu0 %1573
  %1575 = vset.pattern.permute.xlu0 2
  %1576 = vperm.xlu0 %1575, %v59
  %v1577 = vpop.permute.xlu0 %1576
  %1578 = vset.pattern.permute.xlu0 2
  %1579 = vperm.xlu0 %1578, %v60
  %v1580 = vpop.permute.xlu0 %1579
  %1581 = vset.pattern.permute.xlu0 2
  %1582 = vperm.xlu0 %1581, %v61
  %v1583 = vpop.permute.xlu0 %1582
  %1584 = vset.pattern.permute.xlu0 2
  %1585 = vperm.xlu0 %1584, %v62
  %v1586 = vpop.permute.xlu0 %1585
  %1587 = vset.pattern.permute.xlu0 2
  %1588 = vperm.xlu0 %1587, %v63
  %v1589 = vpop.permute.xlu0 %1588
  %1590 = vset.pattern.permute.xlu0 2
  %1591 = vperm.xlu0 %1590, %v64
  %v1592 = vpop.permute.xlu0 %1591
  %1593 = vset.pattern.permute.xlu0 2
  %1594 = vperm.xlu0 %1593, %v65
  %v1595 = vpop.permute.xlu0 %1594
  %1596 = vset.pattern.permute.xlu0 2
  %1597 = vperm.xlu0 %1596, %v66
  %v1598 = vpop.permute.xlu0 %1597
  %1599 = vset.pattern.permute.xlu0 2
  %1600 = vperm.xlu0 %1599, %v67
  %v1601 = vpop.permute.xlu0 %1600
  %1602 = vset.pattern.permute.xlu0 2
  %1603 = vperm.xlu0 %1602, %v68
  %v1604 = vpop.permute.xlu0 %1603
  %1605 = vset.pattern.permute.xlu0 2
  %1606 = vperm.xlu0 %1605, %v69
  %v1607 = vpop.permute.xlu0 %1606
  %1608 = vset.pattern.permute.xlu0 2
  %1609 = vperm.xlu0 %1608, %v70
  %v1610 = vpop.permute.xlu0 %1609
  %1611 = vset.pattern.permute.xlu0 2
  %1612 = vperm.xlu0 %1611, %v71
  %v1613 = vpop.permute.xlu0 %1612
  %1614 = vset.pattern.permute.xlu0 2
  %1615 = vperm.xlu0 %1614, %v72
  %v1616 = vpop.permute.xlu0 %1615
  %1617 = vset.pattern.permute.xlu0 2
  %1618 = vperm.xlu0 %1617, %v73
  %v1619 = vpop.permute.xlu0 %1618
  %1620 = vset.pattern.permute.xlu0 2
  %1621 = vperm.xlu0 %1620, %v74
  %v1622 = vpop.permute.xlu0 %1621
  %1623 = vset.pattern.permute.xlu0 2
  %1624 = vperm.xlu0 %1623, %v75
  %v1625 = vpop.permute.xlu0 %1624
  %1626 = vset.pattern.permute.xlu0 2
  %1627 = vperm.xlu0 %1626, %v76
  %v1628 = vpop.permute.xlu0 %1627
  %1629 = vset.pattern.permute.xlu0 2
  %1630 = vperm.xlu0 %1629, %v77
  %v1631 = vpop.permute.xlu0 %1630
  %vm1632 = vcmp.eq.s32.totalorder %v1442, %v159
  %vm1633 = vcmp.eq.s32.totalorder %v1445, %v159
  %vm1634 = vcmp.eq.s32.totalorder %v1448, %v159
  %vm1635 = vcmp.eq.s32.totalorder %v1451, %v159
  %vm1636 = vcmp.eq.s32.totalorder %v1454, %v159
  %vm1637 = vcmp.eq.s32.totalorder %v1457, %v159
  %vm1638 = vcmp.eq.s32.totalorder %v1460, %v159
  %vm1639 = vcmp.eq.s32.totalorder %v1463, %v159
  %vm1640 = vcmp.eq.s32.totalorder %v1466, %v159
  %vm1641 = vcmp.eq.s32.totalorder %v1469, %v159
  %vm1642 = vcmp.eq.s32.totalorder %v1472, %v159
  %vm1643 = vcmp.eq.s32.totalorder %v1475, %v159
  %vm1644 = vcmp.eq.s32.totalorder %v1478, %v159
  %vm1645 = vcmp.eq.s32.totalorder %v1481, %v159
  %vm1646 = vcmp.eq.s32.totalorder %v1484, %v159
  %vm1647 = vcmp.eq.s32.totalorder %v1487, %v159
  %vm1648 = vcmp.eq.s32.totalorder %v1490, %v159
  %vm1649 = vcmp.eq.s32.totalorder %v1493, %v159
  %vm1650 = vcmp.eq.s32.totalorder %v1496, %v159
  %vm1651 = vcmp.eq.s32.totalorder %v1499, %v159
  %vm1652 = vcmp.eq.s32.totalorder %v1502, %v159
  %vm1653 = vcmp.eq.s32.totalorder %v1505, %v159
  %vm1654 = vcmp.eq.s32.totalorder %v1508, %v159
  %vm1655 = vcmp.eq.s32.totalorder %v1511, %v159
  %vm1656 = vcmp.eq.s32.totalorder %v1514, %v159
  %vm1657 = vcmp.eq.s32.totalorder %v1517, %v159
  %vm1658 = vcmp.eq.s32.totalorder %v1520, %v159
  %vm1659 = vcmp.eq.s32.totalorder %v1523, %v159
  %vm1660 = vcmp.eq.s32.totalorder %v1526, %v159
  %vm1661 = vcmp.eq.s32.totalorder %v1529, %v159
  %vm1662 = vcmp.eq.s32.totalorder %v1532, %v159
  %vm1663 = vcmp.eq.s32.totalorder %v1535, %v159
  %vm1664 = vcmp.eq.s32.totalorder %v1538, %v159
  %vm1665 = vcmp.eq.s32.totalorder %v1541, %v159
  %vm1666 = vcmp.eq.s32.totalorder %v1544, %v159
  %vm1667 = vcmp.eq.s32.totalorder %v1547, %v159
  %vm1668 = vcmp.eq.s32.totalorder %v1550, %v159
  %vm1669 = vcmp.eq.s32.totalorder %v1553, %v159
  %vm1670 = vcmp.eq.s32.totalorder %v1556, %v159
  %vm1671 = vcmp.eq.s32.totalorder %v1559, %v159
  %vm1672 = vcmp.eq.s32.totalorder %v1562, %v159
  %vm1673 = vcmp.eq.s32.totalorder %v1565, %v159
  %vm1674 = vcmp.eq.s32.totalorder %v1568, %v159
  %vm1675 = vcmp.eq.s32.totalorder %v1571, %v159
  %vm1676 = vcmp.eq.s32.totalorder %v1574, %v159
  %vm1677 = vcmp.eq.s32.totalorder %v1577, %v159
  %vm1678 = vcmp.eq.s32.totalorder %v1580, %v159
  %vm1679 = vcmp.eq.s32.totalorder %v1583, %v159
  %vm1680 = vcmp.eq.s32.totalorder %v1586, %v159
  %vm1681 = vcmp.eq.s32.totalorder %v1589, %v159
  %vm1682 = vcmp.eq.s32.totalorder %v1592, %v159
  %vm1683 = vcmp.eq.s32.totalorder %v1595, %v159
  %vm1684 = vcmp.eq.s32.totalorder %v1598, %v159
  %vm1685 = vcmp.eq.s32.totalorder %v1601, %v159
  %vm1686 = vcmp.eq.s32.totalorder %v1604, %v159
  %vm1687 = vcmp.eq.s32.totalorder %v1607, %v159
  %vm1688 = vcmp.eq.s32.totalorder %v1610, %v159
  %vm1689 = vcmp.eq.s32.totalorder %v1613, %v159
  %vm1690 = vcmp.eq.s32.totalorder %v1616, %v159
  %vm1691 = vcmp.eq.s32.totalorder %v1619, %v159
  %vm1692 = vcmp.eq.s32.totalorder %v1622, %v159
  %vm1693 = vcmp.eq.s32.totalorder %v1625, %v159
  %vm1694 = vcmp.eq.s32.totalorder %v1628, %v159
  %vm1695 = vcmp.eq.s32.totalorder %v1631, %v159
  %1696 = vset.pattern.permute.xlu0 2
  %1697 = vperm.xlu0 %1696, %v78
  %v1698 = vpop.permute.xlu0 %1697
  %1700 = vset.pattern.permute.xlu0 2
  %1701 = vperm.xlu0 %1700, %v79
  %v1702 = vpop.permute.xlu0 %1701
  %1704 = vset.pattern.permute.xlu0 2
  %1705 = vperm.xlu0 %1704, %v80
  %v1706 = vpop.permute.xlu0 %1705
  %1708 = vset.pattern.permute.xlu0 2
  %1709 = vperm.xlu0 %1708, %v81
  %v1710 = vpop.permute.xlu0 %1709
  %1712 = vset.pattern.permute.xlu0 2
  %1713 = vperm.xlu0 %1712, %v82
  %v1714 = vpop.permute.xlu0 %1713
  %1716 = vset.pattern.permute.xlu0 2
  %1717 = vperm.xlu0 %1716, %v83
  %v1718 = vpop.permute.xlu0 %1717
  %1720 = vset.pattern.permute.xlu0 2
  %1721 = vperm.xlu0 %1720, %v84
  %v1722 = vpop.permute.xlu0 %1721
  %1724 = vset.pattern.permute.xlu0 2
  %1725 = vperm.xlu0 %1724, %v85
  %v1726 = vpop.permute.xlu0 %1725
  %1728 = vset.pattern.permute.xlu0 2
  %1729 = vperm.xlu0 %1728, %v86
  %v1730 = vpop.permute.xlu0 %1729
  %1732 = vset.pattern.permute.xlu0 2
  %1733 = vperm.xlu0 %1732, %v87
  %v1734 = vpop.permute.xlu0 %1733
  %1736 = vset.pattern.permute.xlu0 2
  %1737 = vperm.xlu0 %1736, %v88
  %v1738 = vpop.permute.xlu0 %1737
  %1740 = vset.pattern.permute.xlu0 2
  %1741 = vperm.xlu0 %1740, %v89
  %v1742 = vpop.permute.xlu0 %1741
  %1744 = vset.pattern.permute.xlu0 2
  %1745 = vperm.xlu0 %1744, %v90
  %v1746 = vpop.permute.xlu0 %1745
  %1748 = vset.pattern.permute.xlu0 2
  %1749 = vperm.xlu0 %1748, %v91
  %v1750 = vpop.permute.xlu0 %1749
  %1752 = vset.pattern.permute.xlu0 2
  %1753 = vperm.xlu0 %1752, %v92
  %v1754 = vpop.permute.xlu0 %1753
  %1756 = vset.pattern.permute.xlu0 2
  %1757 = vperm.xlu0 %1756, %v93
  %v1758 = vpop.permute.xlu0 %1757
  %1760 = vset.pattern.permute.xlu0 2
  %1761 = vperm.xlu0 %1760, %v94
  %v1762 = vpop.permute.xlu0 %1761
  %1764 = vset.pattern.permute.xlu0 2
  %1765 = vperm.xlu0 %1764, %v95
  %v1766 = vpop.permute.xlu0 %1765
  %1768 = vset.pattern.permute.xlu0 2
  %1769 = vperm.xlu0 %1768, %v96
  %v1770 = vpop.permute.xlu0 %1769
  %1772 = vset.pattern.permute.xlu0 2
  %1773 = vperm.xlu0 %1772, %v97
  %v1774 = vpop.permute.xlu0 %1773
  %1776 = vset.pattern.permute.xlu0 2
  %1777 = vperm.xlu0 %1776, %v98
  %v1778 = vpop.permute.xlu0 %1777
  %1780 = vset.pattern.permute.xlu0 2
  %1781 = vperm.xlu0 %1780, %v99
  %v1782 = vpop.permute.xlu0 %1781
  %1784 = vset.pattern.permute.xlu0 2
  %1785 = vperm.xlu0 %1784, %v100
  %v1786 = vpop.permute.xlu0 %1785
  %1788 = vset.pattern.permute.xlu0 2
  %1789 = vperm.xlu0 %1788, %v101
  %v1790 = vpop.permute.xlu0 %1789
  %1792 = vset.pattern.permute.xlu0 2
  %1793 = vperm.xlu0 %1792, %v102
  %v1794 = vpop.permute.xlu0 %1793
  %1796 = vset.pattern.permute.xlu0 2
  %1797 = vperm.xlu0 %1796, %v103
  %v1798 = vpop.permute.xlu0 %1797
  %1800 = vset.pattern.permute.xlu0 2
  %1801 = vperm.xlu0 %1800, %v104
  %v1802 = vpop.permute.xlu0 %1801
  %1804 = vset.pattern.permute.xlu0 2
  %1805 = vperm.xlu0 %1804, %v105
  %v1806 = vpop.permute.xlu0 %1805
  %1808 = vset.pattern.permute.xlu0 2
  %1809 = vperm.xlu0 %1808, %v106
  %v1810 = vpop.permute.xlu0 %1809
  %1812 = vset.pattern.permute.xlu0 2
  %1813 = vperm.xlu0 %1812, %v107
  %v1814 = vpop.permute.xlu0 %1813
  %1816 = vset.pattern.permute.xlu0 2
  %1817 = vperm.xlu0 %1816, %v108
  %v1818 = vpop.permute.xlu0 %1817
  %1820 = vset.pattern.permute.xlu0 2
  %1821 = vperm.xlu0 %1820, %v109
  %v1822 = vpop.permute.xlu0 %1821
  %1824 = vset.pattern.permute.xlu0 2
  %1825 = vperm.xlu0 %1824, %v110
  %v1826 = vpop.permute.xlu0 %1825
  %1828 = vset.pattern.permute.xlu0 2
  %1829 = vperm.xlu0 %1828, %v111
  %v1830 = vpop.permute.xlu0 %1829
  %1832 = vset.pattern.permute.xlu0 2
  %1833 = vperm.xlu0 %1832, %v112
  %v1834 = vpop.permute.xlu0 %1833
  %1836 = vset.pattern.permute.xlu0 2
  %1837 = vperm.xlu0 %1836, %v113
  %v1838 = vpop.permute.xlu0 %1837
  %1840 = vset.pattern.permute.xlu0 2
  %1841 = vperm.xlu0 %1840, %v114
  %v1842 = vpop.permute.xlu0 %1841
  %1844 = vset.pattern.permute.xlu0 2
  %1845 = vperm.xlu0 %1844, %v115
  %v1846 = vpop.permute.xlu0 %1845
  %1848 = vset.pattern.permute.xlu0 2
  %1849 = vperm.xlu0 %1848, %v116
  %v1850 = vpop.permute.xlu0 %1849
  %1852 = vset.pattern.permute.xlu0 2
  %1853 = vperm.xlu0 %1852, %v117
  %v1854 = vpop.permute.xlu0 %1853
  %1856 = vset.pattern.permute.xlu0 2
  %1857 = vperm.xlu0 %1856, %v118
  %v1858 = vpop.permute.xlu0 %1857
  %1860 = vset.pattern.permute.xlu0 2
  %1861 = vperm.xlu0 %1860, %v119
  %v1862 = vpop.permute.xlu0 %1861
  %1864 = vset.pattern.permute.xlu0 2
  %1865 = vperm.xlu0 %1864, %v120
  %v1866 = vpop.permute.xlu0 %1865
  %1868 = vset.pattern.permute.xlu0 2
  %1869 = vperm.xlu0 %1868, %v121
  %v1870 = vpop.permute.xlu0 %1869
  %1872 = vset.pattern.permute.xlu0 2
  %1873 = vperm.xlu0 %1872, %v122
  %v1874 = vpop.permute.xlu0 %1873
  %1876 = vset.pattern.permute.xlu0 2
  %1877 = vperm.xlu0 %1876, %v123
  %v1878 = vpop.permute.xlu0 %1877
  %1880 = vset.pattern.permute.xlu0 2
  %1881 = vperm.xlu0 %1880, %v124
  %v1882 = vpop.permute.xlu0 %1881
  %1884 = vset.pattern.permute.xlu0 2
  %1885 = vperm.xlu0 %1884, %v125
  %v1886 = vpop.permute.xlu0 %1885
  %1888 = vset.pattern.permute.xlu0 2
  %1889 = vperm.xlu0 %1888, %v126
  %v1890 = vpop.permute.xlu0 %1889
  %1892 = vset.pattern.permute.xlu0 2
  %1893 = vperm.xlu0 %1892, %v127
  %v1894 = vpop.permute.xlu0 %1893
  %1896 = vset.pattern.permute.xlu0 2
  %1897 = vperm.xlu0 %1896, %v128
  %v1898 = vpop.permute.xlu0 %1897
  %1900 = vset.pattern.permute.xlu0 2
  %1901 = vperm.xlu0 %1900, %v129
  %v1902 = vpop.permute.xlu0 %1901
  %1904 = vset.pattern.permute.xlu0 2
  %1905 = vperm.xlu0 %1904, %v130
  %v1906 = vpop.permute.xlu0 %1905
  %1908 = vset.pattern.permute.xlu0 2
  %1909 = vperm.xlu0 %1908, %v131
  %v1910 = vpop.permute.xlu0 %1909
  %1912 = vset.pattern.permute.xlu0 2
  %1913 = vperm.xlu0 %1912, %v132
  %v1914 = vpop.permute.xlu0 %1913
  %1916 = vset.pattern.permute.xlu0 2
  %1917 = vperm.xlu0 %1916, %v133
  %v1918 = vpop.permute.xlu0 %1917
  %1920 = vset.pattern.permute.xlu0 2
  %1921 = vperm.xlu0 %1920, %v134
  %v1922 = vpop.permute.xlu0 %1921
  %1924 = vset.pattern.permute.xlu0 2
  %1925 = vperm.xlu0 %1924, %v135
  %v1926 = vpop.permute.xlu0 %1925
  %1928 = vset.pattern.permute.xlu0 2
  %1929 = vperm.xlu0 %1928, %v136
  %v1930 = vpop.permute.xlu0 %1929
  %1932 = vset.pattern.permute.xlu0 2
  %1933 = vperm.xlu0 %1932, %v137
  %v1934 = vpop.permute.xlu0 %1933
  %1936 = vset.pattern.permute.xlu0 2
  %1937 = vperm.xlu0 %1936, %v138
  %v1938 = vpop.permute.xlu0 %1937
  %1940 = vset.pattern.permute.xlu0 2
  %1941 = vperm.xlu0 %1940, %v139
  %v1942 = vpop.permute.xlu0 %1941
  %1944 = vset.pattern.permute.xlu0 2
  %1945 = vperm.xlu0 %1944, %v140
  %v1946 = vpop.permute.xlu0 %1945
  %1948 = vset.pattern.permute.xlu0 2
  %1949 = vperm.xlu0 %1948, %v141
  %v1950 = vpop.permute.xlu0 %1949
  %v1952 = vsel %vm1632, %v1698, 0.0
  %v1953 = vsel %vm1633, %v1702, 0.0
  %v1954 = vsel %vm1634, %v1706, 0.0
  %v1955 = vsel %vm1635, %v1710, 0.0
  %v1956 = vsel %vm1636, %v1714, 0.0
  %v1957 = vsel %vm1637, %v1718, 0.0
  %v1958 = vsel %vm1638, %v1722, 0.0
  %v1959 = vsel %vm1639, %v1726, 0.0
  %v1960 = vsel %vm1640, %v1730, 0.0
  %v1961 = vsel %vm1641, %v1734, 0.0
  %v1962 = vsel %vm1642, %v1738, 0.0
  %v1963 = vsel %vm1643, %v1742, 0.0
  %v1964 = vsel %vm1644, %v1746, 0.0
  %v1965 = vsel %vm1645, %v1750, 0.0
  %v1966 = vsel %vm1646, %v1754, 0.0
  %v1967 = vsel %vm1647, %v1758, 0.0
  %v1968 = vsel %vm1648, %v1762, 0.0
  %v1969 = vsel %vm1649, %v1766, 0.0
  %v1970 = vsel %vm1650, %v1770, 0.0
  %v1971 = vsel %vm1651, %v1774, 0.0
  %v1972 = vsel %vm1652, %v1778, 0.0
  %v1973 = vsel %vm1653, %v1782, 0.0
  %v1974 = vsel %vm1654, %v1786, 0.0
  %v1975 = vsel %vm1655, %v1790, 0.0
  %v1976 = vsel %vm1656, %v1794, 0.0
  %v1977 = vsel %vm1657, %v1798, 0.0
  %v1978 = vsel %vm1658, %v1802, 0.0
  %v1979 = vsel %vm1659, %v1806, 0.0
  %v1980 = vsel %vm1660, %v1810, 0.0
  %v1981 = vsel %vm1661, %v1814, 0.0
  %v1982 = vsel %vm1662, %v1818, 0.0
  %v1983 = vsel %vm1663, %v1822, 0.0
  %v1984 = vsel %vm1664, %v1826, 0.0
  %v1985 = vsel %vm1665, %v1830, 0.0
  %v1986 = vsel %vm1666, %v1834, 0.0
  %v1987 = vsel %vm1667, %v1838, 0.0
  %v1988 = vsel %vm1668, %v1842, 0.0
  %v1989 = vsel %vm1669, %v1846, 0.0
  %v1990 = vsel %vm1670, %v1850, 0.0
  %v1991 = vsel %vm1671, %v1854, 0.0
  %v1992 = vsel %vm1672, %v1858, 0.0
  %v1993 = vsel %vm1673, %v1862, 0.0
  %v1994 = vsel %vm1674, %v1866, 0.0
  %v1995 = vsel %vm1675, %v1870, 0.0
  %v1996 = vsel %vm1676, %v1874, 0.0
  %v1997 = vsel %vm1677, %v1878, 0.0
  %v1998 = vsel %vm1678, %v1882, 0.0
  %v1999 = vsel %vm1679, %v1886, 0.0
  %v2000 = vsel %vm1680, %v1890, 0.0
  %v2001 = vsel %vm1681, %v1894, 0.0
  %v2002 = vsel %vm1682, %v1898, 0.0
  %v2003 = vsel %vm1683, %v1902, 0.0
  %v2004 = vsel %vm1684, %v1906, 0.0
  %v2005 = vsel %vm1685, %v1910, 0.0
  %v2006 = vsel %vm1686, %v1914, 0.0
  %v2007 = vsel %vm1687, %v1918, 0.0
  %v2008 = vsel %vm1688, %v1922, 0.0
  %v2009 = vsel %vm1689, %v1926, 0.0
  %v2010 = vsel %vm1690, %v1930, 0.0
  %v2011 = vsel %vm1691, %v1934, 0.0
  %v2012 = vsel %vm1692, %v1938, 0.0
  %v2013 = vsel %vm1693, %v1942, 0.0
  %v2014 = vsel %vm1694, %v1946, 0.0
  %v2015 = vsel %vm1695, %v1950, 0.0
  %v2016 = vadd.f32 %v1376, %v1952
  %v2017 = vadd.f32 %v1377, %v1953
  %v2018 = vadd.f32 %v1378, %v1954
  %v2019 = vadd.f32 %v1379, %v1955
  %v2020 = vadd.f32 %v1380, %v1956
  %v2021 = vadd.f32 %v1381, %v1957
  %v2022 = vadd.f32 %v1382, %v1958
  %v2023 = vadd.f32 %v1383, %v1959
  %v2024 = vadd.f32 %v1384, %v1960
  %v2025 = vadd.f32 %v1385, %v1961
  %v2026 = vadd.f32 %v1386, %v1962
  %v2027 = vadd.f32 %v1387, %v1963
  %v2028 = vadd.f32 %v1388, %v1964
  %v2029 = vadd.f32 %v1389, %v1965
  %v2030 = vadd.f32 %v1390, %v1966
  %v2031 = vadd.f32 %v1391, %v1967
  %v2032 = vadd.f32 %v1392, %v1968
  %v2033 = vadd.f32 %v1393, %v1969
  %v2034 = vadd.f32 %v1394, %v1970
  %v2035 = vadd.f32 %v1395, %v1971
  %v2036 = vadd.f32 %v1396, %v1972
  %v2037 = vadd.f32 %v1397, %v1973
  %v2038 = vadd.f32 %v1398, %v1974
  %v2039 = vadd.f32 %v1399, %v1975
  %v2040 = vadd.f32 %v1400, %v1976
  %v2041 = vadd.f32 %v1401, %v1977
  %v2042 = vadd.f32 %v1402, %v1978
  %v2043 = vadd.f32 %v1403, %v1979
  %v2044 = vadd.f32 %v1404, %v1980
  %v2045 = vadd.f32 %v1405, %v1981
  %v2046 = vadd.f32 %v1406, %v1982
  %v2047 = vadd.f32 %v1407, %v1983
  %v2048 = vadd.f32 %v1408, %v1984
  %v2049 = vadd.f32 %v1409, %v1985
  %v2050 = vadd.f32 %v1410, %v1986
  %v2051 = vadd.f32 %v1411, %v1987
  %v2052 = vadd.f32 %v1412, %v1988
  %v2053 = vadd.f32 %v1413, %v1989
  %v2054 = vadd.f32 %v1414, %v1990
  %v2055 = vadd.f32 %v1415, %v1991
  %v2056 = vadd.f32 %v1416, %v1992
  %v2057 = vadd.f32 %v1417, %v1993
  %v2058 = vadd.f32 %v1418, %v1994
  %v2059 = vadd.f32 %v1419, %v1995
  %v2060 = vadd.f32 %v1420, %v1996
  %v2061 = vadd.f32 %v1421, %v1997
  %v2062 = vadd.f32 %v1422, %v1998
  %v2063 = vadd.f32 %v1423, %v1999
  %v2064 = vadd.f32 %v1424, %v2000
  %v2065 = vadd.f32 %v1425, %v2001
  %v2066 = vadd.f32 %v1426, %v2002
  %v2067 = vadd.f32 %v1427, %v2003
  %v2068 = vadd.f32 %v1428, %v2004
  %v2069 = vadd.f32 %v1429, %v2005
  %v2070 = vadd.f32 %v1430, %v2006
  %v2071 = vadd.f32 %v1431, %v2007
  %v2072 = vadd.f32 %v1432, %v2008
  %v2073 = vadd.f32 %v1433, %v2009
  %v2074 = vadd.f32 %v1434, %v2010
  %v2075 = vadd.f32 %v1435, %v2011
  %v2076 = vadd.f32 %v1436, %v2012
  %v2077 = vadd.f32 %v1437, %v2013
  %v2078 = vadd.f32 %v1438, %v2014
  %v2079 = vadd.f32 %v1439, %v2015
  %2080 = vset.pattern.permute.xlu0 3
  %2081 = vperm.xlu0 %2080, %v14
  %v2082 = vpop.permute.xlu0 %2081
  %2083 = vset.pattern.permute.xlu0 3
  %2084 = vperm.xlu0 %2083, %v15
  %v2085 = vpop.permute.xlu0 %2084
  %2086 = vset.pattern.permute.xlu0 3
  %2087 = vperm.xlu0 %2086, %v16
  %v2088 = vpop.permute.xlu0 %2087
  %2089 = vset.pattern.permute.xlu0 3
  %2090 = vperm.xlu0 %2089, %v17
  %v2091 = vpop.permute.xlu0 %2090
  %2092 = vset.pattern.permute.xlu0 3
  %2093 = vperm.xlu0 %2092, %v18
  %v2094 = vpop.permute.xlu0 %2093
  %2095 = vset.pattern.permute.xlu0 3
  %2096 = vperm.xlu0 %2095, %v19
  %v2097 = vpop.permute.xlu0 %2096
  %2098 = vset.pattern.permute.xlu0 3
  %2099 = vperm.xlu0 %2098, %v20
  %v2100 = vpop.permute.xlu0 %2099
  %2101 = vset.pattern.permute.xlu0 3
  %2102 = vperm.xlu0 %2101, %v21
  %v2103 = vpop.permute.xlu0 %2102
  %2104 = vset.pattern.permute.xlu0 3
  %2105 = vperm.xlu0 %2104, %v22
  %v2106 = vpop.permute.xlu0 %2105
  %2107 = vset.pattern.permute.xlu0 3
  %2108 = vperm.xlu0 %2107, %v23
  %v2109 = vpop.permute.xlu0 %2108
  %2110 = vset.pattern.permute.xlu0 3
  %2111 = vperm.xlu0 %2110, %v24
  %v2112 = vpop.permute.xlu0 %2111
  %2113 = vset.pattern.permute.xlu0 3
  %2114 = vperm.xlu0 %2113, %v25
  %v2115 = vpop.permute.xlu0 %2114
  %2116 = vset.pattern.permute.xlu0 3
  %2117 = vperm.xlu0 %2116, %v26
  %v2118 = vpop.permute.xlu0 %2117
  %2119 = vset.pattern.permute.xlu0 3
  %2120 = vperm.xlu0 %2119, %v27
  %v2121 = vpop.permute.xlu0 %2120
  %2122 = vset.pattern.permute.xlu0 3
  %2123 = vperm.xlu0 %2122, %v28
  %v2124 = vpop.permute.xlu0 %2123
  %2125 = vset.pattern.permute.xlu0 3
  %2126 = vperm.xlu0 %2125, %v29
  %v2127 = vpop.permute.xlu0 %2126
  %2128 = vset.pattern.permute.xlu0 3
  %2129 = vperm.xlu0 %2128, %v30
  %v2130 = vpop.permute.xlu0 %2129
  %2131 = vset.pattern.permute.xlu0 3
  %2132 = vperm.xlu0 %2131, %v31
  %v2133 = vpop.permute.xlu0 %2132
  %2134 = vset.pattern.permute.xlu0 3
  %2135 = vperm.xlu0 %2134, %v32
  %v2136 = vpop.permute.xlu0 %2135
  %2137 = vset.pattern.permute.xlu0 3
  %2138 = vperm.xlu0 %2137, %v33
  %v2139 = vpop.permute.xlu0 %2138
  %2140 = vset.pattern.permute.xlu0 3
  %2141 = vperm.xlu0 %2140, %v34
  %v2142 = vpop.permute.xlu0 %2141
  %2143 = vset.pattern.permute.xlu0 3
  %2144 = vperm.xlu0 %2143, %v35
  %v2145 = vpop.permute.xlu0 %2144
  %2146 = vset.pattern.permute.xlu0 3
  %2147 = vperm.xlu0 %2146, %v36
  %v2148 = vpop.permute.xlu0 %2147
  %2149 = vset.pattern.permute.xlu0 3
  %2150 = vperm.xlu0 %2149, %v37
  %v2151 = vpop.permute.xlu0 %2150
  %2152 = vset.pattern.permute.xlu0 3
  %2153 = vperm.xlu0 %2152, %v38
  %v2154 = vpop.permute.xlu0 %2153
  %2155 = vset.pattern.permute.xlu0 3
  %2156 = vperm.xlu0 %2155, %v39
  %v2157 = vpop.permute.xlu0 %2156
  %2158 = vset.pattern.permute.xlu0 3
  %2159 = vperm.xlu0 %2158, %v40
  %v2160 = vpop.permute.xlu0 %2159
  %2161 = vset.pattern.permute.xlu0 3
  %2162 = vperm.xlu0 %2161, %v41
  %v2163 = vpop.permute.xlu0 %2162
  %2164 = vset.pattern.permute.xlu0 3
  %2165 = vperm.xlu0 %2164, %v42
  %v2166 = vpop.permute.xlu0 %2165
  %2167 = vset.pattern.permute.xlu0 3
  %2168 = vperm.xlu0 %2167, %v43
  %v2169 = vpop.permute.xlu0 %2168
  %2170 = vset.pattern.permute.xlu0 3
  %2171 = vperm.xlu0 %2170, %v44
  %v2172 = vpop.permute.xlu0 %2171
  %2173 = vset.pattern.permute.xlu0 3
  %2174 = vperm.xlu0 %2173, %v45
  %v2175 = vpop.permute.xlu0 %2174
  %2176 = vset.pattern.permute.xlu0 3
  %2177 = vperm.xlu0 %2176, %v46
  %v2178 = vpop.permute.xlu0 %2177
  %2179 = vset.pattern.permute.xlu0 3
  %2180 = vperm.xlu0 %2179, %v47
  %v2181 = vpop.permute.xlu0 %2180
  %2182 = vset.pattern.permute.xlu0 3
  %2183 = vperm.xlu0 %2182, %v48
  %v2184 = vpop.permute.xlu0 %2183
  %2185 = vset.pattern.permute.xlu0 3
  %2186 = vperm.xlu0 %2185, %v49
  %v2187 = vpop.permute.xlu0 %2186
  %2188 = vset.pattern.permute.xlu0 3
  %2189 = vperm.xlu0 %2188, %v50
  %v2190 = vpop.permute.xlu0 %2189
  %2191 = vset.pattern.permute.xlu0 3
  %2192 = vperm.xlu0 %2191, %v51
  %v2193 = vpop.permute.xlu0 %2192
  %2194 = vset.pattern.permute.xlu0 3
  %2195 = vperm.xlu0 %2194, %v52
  %v2196 = vpop.permute.xlu0 %2195
  %2197 = vset.pattern.permute.xlu0 3
  %2198 = vperm.xlu0 %2197, %v53
  %v2199 = vpop.permute.xlu0 %2198
  %2200 = vset.pattern.permute.xlu0 3
  %2201 = vperm.xlu0 %2200, %v54
  %v2202 = vpop.permute.xlu0 %2201
  %2203 = vset.pattern.permute.xlu0 3
  %2204 = vperm.xlu0 %2203, %v55
  %v2205 = vpop.permute.xlu0 %2204
  %2206 = vset.pattern.permute.xlu0 3
  %2207 = vperm.xlu0 %2206, %v56
  %v2208 = vpop.permute.xlu0 %2207
  %2209 = vset.pattern.permute.xlu0 3
  %2210 = vperm.xlu0 %2209, %v57
  %v2211 = vpop.permute.xlu0 %2210
  %2212 = vset.pattern.permute.xlu0 3
  %2213 = vperm.xlu0 %2212, %v58
  %v2214 = vpop.permute.xlu0 %2213
  %2215 = vset.pattern.permute.xlu0 3
  %2216 = vperm.xlu0 %2215, %v59
  %v2217 = vpop.permute.xlu0 %2216
  %2218 = vset.pattern.permute.xlu0 3
  %2219 = vperm.xlu0 %2218, %v60
  %v2220 = vpop.permute.xlu0 %2219
  %2221 = vset.pattern.permute.xlu0 3
  %2222 = vperm.xlu0 %2221, %v61
  %v2223 = vpop.permute.xlu0 %2222
  %2224 = vset.pattern.permute.xlu0 3
  %2225 = vperm.xlu0 %2224, %v62
  %v2226 = vpop.permute.xlu0 %2225
  %2227 = vset.pattern.permute.xlu0 3
  %2228 = vperm.xlu0 %2227, %v63
  %v2229 = vpop.permute.xlu0 %2228
  %2230 = vset.pattern.permute.xlu0 3
  %2231 = vperm.xlu0 %2230, %v64
  %v2232 = vpop.permute.xlu0 %2231
  %2233 = vset.pattern.permute.xlu0 3
  %2234 = vperm.xlu0 %2233, %v65
  %v2235 = vpop.permute.xlu0 %2234
  %2236 = vset.pattern.permute.xlu0 3
  %2237 = vperm.xlu0 %2236, %v66
  %v2238 = vpop.permute.xlu0 %2237
  %2239 = vset.pattern.permute.xlu0 3
  %2240 = vperm.xlu0 %2239, %v67
  %v2241 = vpop.permute.xlu0 %2240
  %2242 = vset.pattern.permute.xlu0 3
  %2243 = vperm.xlu0 %2242, %v68
  %v2244 = vpop.permute.xlu0 %2243
  %2245 = vset.pattern.permute.xlu0 3
  %2246 = vperm.xlu0 %2245, %v69
  %v2247 = vpop.permute.xlu0 %2246
  %2248 = vset.pattern.permute.xlu0 3
  %2249 = vperm.xlu0 %2248, %v70
  %v2250 = vpop.permute.xlu0 %2249
  %2251 = vset.pattern.permute.xlu0 3
  %2252 = vperm.xlu0 %2251, %v71
  %v2253 = vpop.permute.xlu0 %2252
  %2254 = vset.pattern.permute.xlu0 3
  %2255 = vperm.xlu0 %2254, %v72
  %v2256 = vpop.permute.xlu0 %2255
  %2257 = vset.pattern.permute.xlu0 3
  %2258 = vperm.xlu0 %2257, %v73
  %v2259 = vpop.permute.xlu0 %2258
  %2260 = vset.pattern.permute.xlu0 3
  %2261 = vperm.xlu0 %2260, %v74
  %v2262 = vpop.permute.xlu0 %2261
  %2263 = vset.pattern.permute.xlu0 3
  %2264 = vperm.xlu0 %2263, %v75
  %v2265 = vpop.permute.xlu0 %2264
  %2266 = vset.pattern.permute.xlu0 3
  %2267 = vperm.xlu0 %2266, %v76
  %v2268 = vpop.permute.xlu0 %2267
  %2269 = vset.pattern.permute.xlu0 3
  %2270 = vperm.xlu0 %2269, %v77
  %v2271 = vpop.permute.xlu0 %2270
  %vm2272 = vcmp.eq.s32.totalorder %v2082, %v159
  %vm2273 = vcmp.eq.s32.totalorder %v2085, %v159
  %vm2274 = vcmp.eq.s32.totalorder %v2088, %v159
  %vm2275 = vcmp.eq.s32.totalorder %v2091, %v159
  %vm2276 = vcmp.eq.s32.totalorder %v2094, %v159
  %vm2277 = vcmp.eq.s32.totalorder %v2097, %v159
  %vm2278 = vcmp.eq.s32.totalorder %v2100, %v159
  %vm2279 = vcmp.eq.s32.totalorder %v2103, %v159
  %vm2280 = vcmp.eq.s32.totalorder %v2106, %v159
  %vm2281 = vcmp.eq.s32.totalorder %v2109, %v159
  %vm2282 = vcmp.eq.s32.totalorder %v2112, %v159
  %vm2283 = vcmp.eq.s32.totalorder %v2115, %v159
  %vm2284 = vcmp.eq.s32.totalorder %v2118, %v159
  %vm2285 = vcmp.eq.s32.totalorder %v2121, %v159
  %vm2286 = vcmp.eq.s32.totalorder %v2124, %v159
  %vm2287 = vcmp.eq.s32.totalorder %v2127, %v159
  %vm2288 = vcmp.eq.s32.totalorder %v2130, %v159
  %vm2289 = vcmp.eq.s32.totalorder %v2133, %v159
  %vm2290 = vcmp.eq.s32.totalorder %v2136, %v159
  %vm2291 = vcmp.eq.s32.totalorder %v2139, %v159
  %vm2292 = vcmp.eq.s32.totalorder %v2142, %v159
  %vm2293 = vcmp.eq.s32.totalorder %v2145, %v159
  %vm2294 = vcmp.eq.s32.totalorder %v2148, %v159
  %vm2295 = vcmp.eq.s32.totalorder %v2151, %v159
  %vm2296 = vcmp.eq.s32.totalorder %v2154, %v159
  %vm2297 = vcmp.eq.s32.totalorder %v2157, %v159
  %vm2298 = vcmp.eq.s32.totalorder %v2160, %v159
  %vm2299 = vcmp.eq.s32.totalorder %v2163, %v159
  %vm2300 = vcmp.eq.s32.totalorder %v2166, %v159
  %vm2301 = vcmp.eq.s32.totalorder %v2169, %v159
  %vm2302 = vcmp.eq.s32.totalorder %v2172, %v159
  %vm2303 = vcmp.eq.s32.totalorder %v2175, %v159
  %vm2304 = vcmp.eq.s32.totalorder %v2178, %v159
  %vm2305 = vcmp.eq.s32.totalorder %v2181, %v159
  %vm2306 = vcmp.eq.s32.totalorder %v2184, %v159
  %vm2307 = vcmp.eq.s32.totalorder %v2187, %v159
  %vm2308 = vcmp.eq.s32.totalorder %v2190, %v159
  %vm2309 = vcmp.eq.s32.totalorder %v2193, %v159
  %vm2310 = vcmp.eq.s32.totalorder %v2196, %v159
  %vm2311 = vcmp.eq.s32.totalorder %v2199, %v159
  %vm2312 = vcmp.eq.s32.totalorder %v2202, %v159
  %vm2313 = vcmp.eq.s32.totalorder %v2205, %v159
  %vm2314 = vcmp.eq.s32.totalorder %v2208, %v159
  %vm2315 = vcmp.eq.s32.totalorder %v2211, %v159
  %vm2316 = vcmp.eq.s32.totalorder %v2214, %v159
  %vm2317 = vcmp.eq.s32.totalorder %v2217, %v159
  %vm2318 = vcmp.eq.s32.totalorder %v2220, %v159
  %vm2319 = vcmp.eq.s32.totalorder %v2223, %v159
  %vm2320 = vcmp.eq.s32.totalorder %v2226, %v159
  %vm2321 = vcmp.eq.s32.totalorder %v2229, %v159
  %vm2322 = vcmp.eq.s32.totalorder %v2232, %v159
  %vm2323 = vcmp.eq.s32.totalorder %v2235, %v159
  %vm2324 = vcmp.eq.s32.totalorder %v2238, %v159
  %vm2325 = vcmp.eq.s32.totalorder %v2241, %v159
  %vm2326 = vcmp.eq.s32.totalorder %v2244, %v159
  %vm2327 = vcmp.eq.s32.totalorder %v2247, %v159
  %vm2328 = vcmp.eq.s32.totalorder %v2250, %v159
  %vm2329 = vcmp.eq.s32.totalorder %v2253, %v159
  %vm2330 = vcmp.eq.s32.totalorder %v2256, %v159
  %vm2331 = vcmp.eq.s32.totalorder %v2259, %v159
  %vm2332 = vcmp.eq.s32.totalorder %v2262, %v159
  %vm2333 = vcmp.eq.s32.totalorder %v2265, %v159
  %vm2334 = vcmp.eq.s32.totalorder %v2268, %v159
  %vm2335 = vcmp.eq.s32.totalorder %v2271, %v159
  %2336 = vset.pattern.permute.xlu0 3
  %2337 = vperm.xlu0 %2336, %v78
  %v2338 = vpop.permute.xlu0 %2337
  %2340 = vset.pattern.permute.xlu0 3
  %2341 = vperm.xlu0 %2340, %v79
  %v2342 = vpop.permute.xlu0 %2341
  %2344 = vset.pattern.permute.xlu0 3
  %2345 = vperm.xlu0 %2344, %v80
  %v2346 = vpop.permute.xlu0 %2345
  %2348 = vset.pattern.permute.xlu0 3
  %2349 = vperm.xlu0 %2348, %v81
  %v2350 = vpop.permute.xlu0 %2349
  %2352 = vset.pattern.permute.xlu0 3
  %2353 = vperm.xlu0 %2352, %v82
  %v2354 = vpop.permute.xlu0 %2353
  %2356 = vset.pattern.permute.xlu0 3
  %2357 = vperm.xlu0 %2356, %v83
  %v2358 = vpop.permute.xlu0 %2357
  %2360 = vset.pattern.permute.xlu0 3
  %2361 = vperm.xlu0 %2360, %v84
  %v2362 = vpop.permute.xlu0 %2361
  %2364 = vset.pattern.permute.xlu0 3
  %2365 = vperm.xlu0 %2364, %v85
  %v2366 = vpop.permute.xlu0 %2365
  %2368 = vset.pattern.permute.xlu0 3
  %2369 = vperm.xlu0 %2368, %v86
  %v2370 = vpop.permute.xlu0 %2369
  %2372 = vset.pattern.permute.xlu0 3
  %2373 = vperm.xlu0 %2372, %v87
  %v2374 = vpop.permute.xlu0 %2373
  %2376 = vset.pattern.permute.xlu0 3
  %2377 = vperm.xlu0 %2376, %v88
  %v2378 = vpop.permute.xlu0 %2377
  %2380 = vset.pattern.permute.xlu0 3
  %2381 = vperm.xlu0 %2380, %v89
  %v2382 = vpop.permute.xlu0 %2381
  %2384 = vset.pattern.permute.xlu0 3
  %2385 = vperm.xlu0 %2384, %v90
  %v2386 = vpop.permute.xlu0 %2385
  %2388 = vset.pattern.permute.xlu0 3
  %2389 = vperm.xlu0 %2388, %v91
  %v2390 = vpop.permute.xlu0 %2389
  %2392 = vset.pattern.permute.xlu0 3
  %2393 = vperm.xlu0 %2392, %v92
  %v2394 = vpop.permute.xlu0 %2393
  %2396 = vset.pattern.permute.xlu0 3
  %2397 = vperm.xlu0 %2396, %v93
  %v2398 = vpop.permute.xlu0 %2397
  %2400 = vset.pattern.permute.xlu0 3
  %2401 = vperm.xlu0 %2400, %v94
  %v2402 = vpop.permute.xlu0 %2401
  %2404 = vset.pattern.permute.xlu0 3
  %2405 = vperm.xlu0 %2404, %v95
  %v2406 = vpop.permute.xlu0 %2405
  %2408 = vset.pattern.permute.xlu0 3
  %2409 = vperm.xlu0 %2408, %v96
  %v2410 = vpop.permute.xlu0 %2409
  %2412 = vset.pattern.permute.xlu0 3
  %2413 = vperm.xlu0 %2412, %v97
  %v2414 = vpop.permute.xlu0 %2413
  %2416 = vset.pattern.permute.xlu0 3
  %2417 = vperm.xlu0 %2416, %v98
  %v2418 = vpop.permute.xlu0 %2417
  %2420 = vset.pattern.permute.xlu0 3
  %2421 = vperm.xlu0 %2420, %v99
  %v2422 = vpop.permute.xlu0 %2421
  %2424 = vset.pattern.permute.xlu0 3
  %2425 = vperm.xlu0 %2424, %v100
  %v2426 = vpop.permute.xlu0 %2425
  %2428 = vset.pattern.permute.xlu0 3
  %2429 = vperm.xlu0 %2428, %v101
  %v2430 = vpop.permute.xlu0 %2429
  %2432 = vset.pattern.permute.xlu0 3
  %2433 = vperm.xlu0 %2432, %v102
  %v2434 = vpop.permute.xlu0 %2433
  %2436 = vset.pattern.permute.xlu0 3
  %2437 = vperm.xlu0 %2436, %v103
  %v2438 = vpop.permute.xlu0 %2437
  %2440 = vset.pattern.permute.xlu0 3
  %2441 = vperm.xlu0 %2440, %v104
  %v2442 = vpop.permute.xlu0 %2441
  %2444 = vset.pattern.permute.xlu0 3
  %2445 = vperm.xlu0 %2444, %v105
  %v2446 = vpop.permute.xlu0 %2445
  %2448 = vset.pattern.permute.xlu0 3
  %2449 = vperm.xlu0 %2448, %v106
  %v2450 = vpop.permute.xlu0 %2449
  %2452 = vset.pattern.permute.xlu0 3
  %2453 = vperm.xlu0 %2452, %v107
  %v2454 = vpop.permute.xlu0 %2453
  %2456 = vset.pattern.permute.xlu0 3
  %2457 = vperm.xlu0 %2456, %v108
  %v2458 = vpop.permute.xlu0 %2457
  %2460 = vset.pattern.permute.xlu0 3
  %2461 = vperm.xlu0 %2460, %v109
  %v2462 = vpop.permute.xlu0 %2461
  %2464 = vset.pattern.permute.xlu0 3
  %2465 = vperm.xlu0 %2464, %v110
  %v2466 = vpop.permute.xlu0 %2465
  %2468 = vset.pattern.permute.xlu0 3
  %2469 = vperm.xlu0 %2468, %v111
  %v2470 = vpop.permute.xlu0 %2469
  %2472 = vset.pattern.permute.xlu0 3
  %2473 = vperm.xlu0 %2472, %v112
  %v2474 = vpop.permute.xlu0 %2473
  %2476 = vset.pattern.permute.xlu0 3
  %2477 = vperm.xlu0 %2476, %v113
  %v2478 = vpop.permute.xlu0 %2477
  %2480 = vset.pattern.permute.xlu0 3
  %2481 = vperm.xlu0 %2480, %v114
  %v2482 = vpop.permute.xlu0 %2481
  %2484 = vset.pattern.permute.xlu0 3
  %2485 = vperm.xlu0 %2484, %v115
  %v2486 = vpop.permute.xlu0 %2485
  %2488 = vset.pattern.permute.xlu0 3
  %2489 = vperm.xlu0 %2488, %v116
  %v2490 = vpop.permute.xlu0 %2489
  %2492 = vset.pattern.permute.xlu0 3
  %2493 = vperm.xlu0 %2492, %v117
  %v2494 = vpop.permute.xlu0 %2493
  %2496 = vset.pattern.permute.xlu0 3
  %2497 = vperm.xlu0 %2496, %v118
  %v2498 = vpop.permute.xlu0 %2497
  %2500 = vset.pattern.permute.xlu0 3
  %2501 = vperm.xlu0 %2500, %v119
  %v2502 = vpop.permute.xlu0 %2501
  %2504 = vset.pattern.permute.xlu0 3
  %2505 = vperm.xlu0 %2504, %v120
  %v2506 = vpop.permute.xlu0 %2505
  %2508 = vset.pattern.permute.xlu0 3
  %2509 = vperm.xlu0 %2508, %v121
  %v2510 = vpop.permute.xlu0 %2509
  %2512 = vset.pattern.permute.xlu0 3
  %2513 = vperm.xlu0 %2512, %v122
  %v2514 = vpop.permute.xlu0 %2513
  %2516 = vset.pattern.permute.xlu0 3
  %2517 = vperm.xlu0 %2516, %v123
  %v2518 = vpop.permute.xlu0 %2517
  %2520 = vset.pattern.permute.xlu0 3
  %2521 = vperm.xlu0 %2520, %v124
  %v2522 = vpop.permute.xlu0 %2521
  %2524 = vset.pattern.permute.xlu0 3
  %2525 = vperm.xlu0 %2524, %v125
  %v2526 = vpop.permute.xlu0 %2525
  %2528 = vset.pattern.permute.xlu0 3
  %2529 = vperm.xlu0 %2528, %v126
  %v2530 = vpop.permute.xlu0 %2529
  %2532 = vset.pattern.permute.xlu0 3
  %2533 = vperm.xlu0 %2532, %v127
  %v2534 = vpop.permute.xlu0 %2533
  %2536 = vset.pattern.permute.xlu0 3
  %2537 = vperm.xlu0 %2536, %v128
  %v2538 = vpop.permute.xlu0 %2537
  %2540 = vset.pattern.permute.xlu0 3
  %2541 = vperm.xlu0 %2540, %v129
  %v2542 = vpop.permute.xlu0 %2541
  %2544 = vset.pattern.permute.xlu0 3
  %2545 = vperm.xlu0 %2544, %v130
  %v2546 = vpop.permute.xlu0 %2545
  %2548 = vset.pattern.permute.xlu0 3
  %2549 = vperm.xlu0 %2548, %v131
  %v2550 = vpop.permute.xlu0 %2549
  %2552 = vset.pattern.permute.xlu0 3
  %2553 = vperm.xlu0 %2552, %v132
  %v2554 = vpop.permute.xlu0 %2553
  %2556 = vset.pattern.permute.xlu0 3
  %2557 = vperm.xlu0 %2556, %v133
  %v2558 = vpop.permute.xlu0 %2557
  %2560 = vset.pattern.permute.xlu0 3
  %2561 = vperm.xlu0 %2560, %v134
  %v2562 = vpop.permute.xlu0 %2561
  %2564 = vset.pattern.permute.xlu0 3
  %2565 = vperm.xlu0 %2564, %v135
  %v2566 = vpop.permute.xlu0 %2565
  %2568 = vset.pattern.permute.xlu0 3
  %2569 = vperm.xlu0 %2568, %v136
  %v2570 = vpop.permute.xlu0 %2569
  %2572 = vset.pattern.permute.xlu0 3
  %2573 = vperm.xlu0 %2572, %v137
  %v2574 = vpop.permute.xlu0 %2573
  %2576 = vset.pattern.permute.xlu0 3
  %2577 = vperm.xlu0 %2576, %v138
  %v2578 = vpop.permute.xlu0 %2577
  %2580 = vset.pattern.permute.xlu0 3
  %2581 = vperm.xlu0 %2580, %v139
  %v2582 = vpop.permute.xlu0 %2581
  %2584 = vset.pattern.permute.xlu0 3
  %2585 = vperm.xlu0 %2584, %v140
  %v2586 = vpop.permute.xlu0 %2585
  %2588 = vset.pattern.permute.xlu0 3
  %2589 = vperm.xlu0 %2588, %v141
  %v2590 = vpop.permute.xlu0 %2589
  %v2592 = vsel %vm2272, %v2338, 0.0
  %v2593 = vsel %vm2273, %v2342, 0.0
  %v2594 = vsel %vm2274, %v2346, 0.0
  %v2595 = vsel %vm2275, %v2350, 0.0
  %v2596 = vsel %vm2276, %v2354, 0.0
  %v2597 = vsel %vm2277, %v2358, 0.0
  %v2598 = vsel %vm2278, %v2362, 0.0
  %v2599 = vsel %vm2279, %v2366, 0.0
  %v2600 = vsel %vm2280, %v2370, 0.0
  %v2601 = vsel %vm2281, %v2374, 0.0
  %v2602 = vsel %vm2282, %v2378, 0.0
  %v2603 = vsel %vm2283, %v2382, 0.0
  %v2604 = vsel %vm2284, %v2386, 0.0
  %v2605 = vsel %vm2285, %v2390, 0.0
  %v2606 = vsel %vm2286, %v2394, 0.0
  %v2607 = vsel %vm2287, %v2398, 0.0
  %v2608 = vsel %vm2288, %v2402, 0.0
  %v2609 = vsel %vm2289, %v2406, 0.0
  %v2610 = vsel %vm2290, %v2410, 0.0
  %v2611 = vsel %vm2291, %v2414, 0.0
  %v2612 = vsel %vm2292, %v2418, 0.0
  %v2613 = vsel %vm2293, %v2422, 0.0
  %v2614 = vsel %vm2294, %v2426, 0.0
  %v2615 = vsel %vm2295, %v2430, 0.0
  %v2616 = vsel %vm2296, %v2434, 0.0
  %v2617 = vsel %vm2297, %v2438, 0.0
  %v2618 = vsel %vm2298, %v2442, 0.0
  %v2619 = vsel %vm2299, %v2446, 0.0
  %v2620 = vsel %vm2300, %v2450, 0.0
  %v2621 = vsel %vm2301, %v2454, 0.0
  %v2622 = vsel %vm2302, %v2458, 0.0
  %v2623 = vsel %vm2303, %v2462, 0.0
  %v2624 = vsel %vm2304, %v2466, 0.0
  %v2625 = vsel %vm2305, %v2470, 0.0
  %v2626 = vsel %vm2306, %v2474, 0.0
  %v2627 = vsel %vm2307, %v2478, 0.0
  %v2628 = vsel %vm2308, %v2482, 0.0
  %v2629 = vsel %vm2309, %v2486, 0.0
  %v2630 = vsel %vm2310, %v2490, 0.0
  %v2631 = vsel %vm2311, %v2494, 0.0
  %v2632 = vsel %vm2312, %v2498, 0.0
  %v2633 = vsel %vm2313, %v2502, 0.0
  %v2634 = vsel %vm2314, %v2506, 0.0
  %v2635 = vsel %vm2315, %v2510, 0.0
  %v2636 = vsel %vm2316, %v2514, 0.0
  %v2637 = vsel %vm2317, %v2518, 0.0
  %v2638 = vsel %vm2318, %v2522, 0.0
  %v2639 = vsel %vm2319, %v2526, 0.0
  %v2640 = vsel %vm2320, %v2530, 0.0
  %v2641 = vsel %vm2321, %v2534, 0.0
  %v2642 = vsel %vm2322, %v2538, 0.0
  %v2643 = vsel %vm2323, %v2542, 0.0
  %v2644 = vsel %vm2324, %v2546, 0.0
  %v2645 = vsel %vm2325, %v2550, 0.0
  %v2646 = vsel %vm2326, %v2554, 0.0
  %v2647 = vsel %vm2327, %v2558, 0.0
  %v2648 = vsel %vm2328, %v2562, 0.0
  %v2649 = vsel %vm2329, %v2566, 0.0
  %v2650 = vsel %vm2330, %v2570, 0.0
  %v2651 = vsel %vm2331, %v2574, 0.0
  %v2652 = vsel %vm2332, %v2578, 0.0
  %v2653 = vsel %vm2333, %v2582, 0.0
  %v2654 = vsel %vm2334, %v2586, 0.0
  %v2655 = vsel %vm2335, %v2590, 0.0
  %v2656 = vadd.f32 %v2016, %v2592
  %v2657 = vadd.f32 %v2017, %v2593
  %v2658 = vadd.f32 %v2018, %v2594
  %v2659 = vadd.f32 %v2019, %v2595
  %v2660 = vadd.f32 %v2020, %v2596
  %v2661 = vadd.f32 %v2021, %v2597
  %v2662 = vadd.f32 %v2022, %v2598
  %v2663 = vadd.f32 %v2023, %v2599
  %v2664 = vadd.f32 %v2024, %v2600
  %v2665 = vadd.f32 %v2025, %v2601
  %v2666 = vadd.f32 %v2026, %v2602
  %v2667 = vadd.f32 %v2027, %v2603
  %v2668 = vadd.f32 %v2028, %v2604
  %v2669 = vadd.f32 %v2029, %v2605
  %v2670 = vadd.f32 %v2030, %v2606
  %v2671 = vadd.f32 %v2031, %v2607
  %v2672 = vadd.f32 %v2032, %v2608
  %v2673 = vadd.f32 %v2033, %v2609
  %v2674 = vadd.f32 %v2034, %v2610
  %v2675 = vadd.f32 %v2035, %v2611
  %v2676 = vadd.f32 %v2036, %v2612
  %v2677 = vadd.f32 %v2037, %v2613
  %v2678 = vadd.f32 %v2038, %v2614
  %v2679 = vadd.f32 %v2039, %v2615
  %v2680 = vadd.f32 %v2040, %v2616
  %v2681 = vadd.f32 %v2041, %v2617
  %v2682 = vadd.f32 %v2042, %v2618
  %v2683 = vadd.f32 %v2043, %v2619
  %v2684 = vadd.f32 %v2044, %v2620
  %v2685 = vadd.f32 %v2045, %v2621
  %v2686 = vadd.f32 %v2046, %v2622
  %v2687 = vadd.f32 %v2047, %v2623
  %v2688 = vadd.f32 %v2048, %v2624
  %v2689 = vadd.f32 %v2049, %v2625
  %v2690 = vadd.f32 %v2050, %v2626
  %v2691 = vadd.f32 %v2051, %v2627
  %v2692 = vadd.f32 %v2052, %v2628
  %v2693 = vadd.f32 %v2053, %v2629
  %v2694 = vadd.f32 %v2054, %v2630
  %v2695 = vadd.f32 %v2055, %v2631
  %v2696 = vadd.f32 %v2056, %v2632
  %v2697 = vadd.f32 %v2057, %v2633
  %v2698 = vadd.f32 %v2058, %v2634
  %v2699 = vadd.f32 %v2059, %v2635
  %v2700 = vadd.f32 %v2060, %v2636
  %v2701 = vadd.f32 %v2061, %v2637
  %v2702 = vadd.f32 %v2062, %v2638
  %v2703 = vadd.f32 %v2063, %v2639
  %v2704 = vadd.f32 %v2064, %v2640
  %v2705 = vadd.f32 %v2065, %v2641
  %v2706 = vadd.f32 %v2066, %v2642
  %v2707 = vadd.f32 %v2067, %v2643
  %v2708 = vadd.f32 %v2068, %v2644
  %v2709 = vadd.f32 %v2069, %v2645
  %v2710 = vadd.f32 %v2070, %v2646
  %v2711 = vadd.f32 %v2071, %v2647
  %v2712 = vadd.f32 %v2072, %v2648
  %v2713 = vadd.f32 %v2073, %v2649
  %v2714 = vadd.f32 %v2074, %v2650
  %v2715 = vadd.f32 %v2075, %v2651
  %v2716 = vadd.f32 %v2076, %v2652
  %v2717 = vadd.f32 %v2077, %v2653
  %v2718 = vadd.f32 %v2078, %v2654
  %v2719 = vadd.f32 %v2079, %v2655
  %2720 = vset.pattern.permute.xlu0 4
  %2721 = vperm.xlu0 %2720, %v14
  %v2722 = vpop.permute.xlu0 %2721
  %2723 = vset.pattern.permute.xlu0 4
  %2724 = vperm.xlu0 %2723, %v15
  %v2725 = vpop.permute.xlu0 %2724
  %2726 = vset.pattern.permute.xlu0 4
  %2727 = vperm.xlu0 %2726, %v16
  %v2728 = vpop.permute.xlu0 %2727
  %2729 = vset.pattern.permute.xlu0 4
  %2730 = vperm.xlu0 %2729, %v17
  %v2731 = vpop.permute.xlu0 %2730
  %2732 = vset.pattern.permute.xlu0 4
  %2733 = vperm.xlu0 %2732, %v18
  %v2734 = vpop.permute.xlu0 %2733
  %2735 = vset.pattern.permute.xlu0 4
  %2736 = vperm.xlu0 %2735, %v19
  %v2737 = vpop.permute.xlu0 %2736
  %2738 = vset.pattern.permute.xlu0 4
  %2739 = vperm.xlu0 %2738, %v20
  %v2740 = vpop.permute.xlu0 %2739
  %2741 = vset.pattern.permute.xlu0 4
  %2742 = vperm.xlu0 %2741, %v21
  %v2743 = vpop.permute.xlu0 %2742
  %2744 = vset.pattern.permute.xlu0 4
  %2745 = vperm.xlu0 %2744, %v22
  %v2746 = vpop.permute.xlu0 %2745
  %2747 = vset.pattern.permute.xlu0 4
  %2748 = vperm.xlu0 %2747, %v23
  %v2749 = vpop.permute.xlu0 %2748
  %2750 = vset.pattern.permute.xlu0 4
  %2751 = vperm.xlu0 %2750, %v24
  %v2752 = vpop.permute.xlu0 %2751
  %2753 = vset.pattern.permute.xlu0 4
  %2754 = vperm.xlu0 %2753, %v25
  %v2755 = vpop.permute.xlu0 %2754
  %2756 = vset.pattern.permute.xlu0 4
  %2757 = vperm.xlu0 %2756, %v26
  %v2758 = vpop.permute.xlu0 %2757
  %2759 = vset.pattern.permute.xlu0 4
  %2760 = vperm.xlu0 %2759, %v27
  %v2761 = vpop.permute.xlu0 %2760
  %2762 = vset.pattern.permute.xlu0 4
  %2763 = vperm.xlu0 %2762, %v28
  %v2764 = vpop.permute.xlu0 %2763
  %2765 = vset.pattern.permute.xlu0 4
  %2766 = vperm.xlu0 %2765, %v29
  %v2767 = vpop.permute.xlu0 %2766
  %2768 = vset.pattern.permute.xlu0 4
  %2769 = vperm.xlu0 %2768, %v30
  %v2770 = vpop.permute.xlu0 %2769
  %2771 = vset.pattern.permute.xlu0 4
  %2772 = vperm.xlu0 %2771, %v31
  %v2773 = vpop.permute.xlu0 %2772
  %2774 = vset.pattern.permute.xlu0 4
  %2775 = vperm.xlu0 %2774, %v32
  %v2776 = vpop.permute.xlu0 %2775
  %2777 = vset.pattern.permute.xlu0 4
  %2778 = vperm.xlu0 %2777, %v33
  %v2779 = vpop.permute.xlu0 %2778
  %2780 = vset.pattern.permute.xlu0 4
  %2781 = vperm.xlu0 %2780, %v34
  %v2782 = vpop.permute.xlu0 %2781
  %2783 = vset.pattern.permute.xlu0 4
  %2784 = vperm.xlu0 %2783, %v35
  %v2785 = vpop.permute.xlu0 %2784
  %2786 = vset.pattern.permute.xlu0 4
  %2787 = vperm.xlu0 %2786, %v36
  %v2788 = vpop.permute.xlu0 %2787
  %2789 = vset.pattern.permute.xlu0 4
  %2790 = vperm.xlu0 %2789, %v37
  %v2791 = vpop.permute.xlu0 %2790
  %2792 = vset.pattern.permute.xlu0 4
  %2793 = vperm.xlu0 %2792, %v38
  %v2794 = vpop.permute.xlu0 %2793
  %2795 = vset.pattern.permute.xlu0 4
  %2796 = vperm.xlu0 %2795, %v39
  %v2797 = vpop.permute.xlu0 %2796
  %2798 = vset.pattern.permute.xlu0 4
  %2799 = vperm.xlu0 %2798, %v40
  %v2800 = vpop.permute.xlu0 %2799
  %2801 = vset.pattern.permute.xlu0 4
  %2802 = vperm.xlu0 %2801, %v41
  %v2803 = vpop.permute.xlu0 %2802
  %2804 = vset.pattern.permute.xlu0 4
  %2805 = vperm.xlu0 %2804, %v42
  %v2806 = vpop.permute.xlu0 %2805
  %2807 = vset.pattern.permute.xlu0 4
  %2808 = vperm.xlu0 %2807, %v43
  %v2809 = vpop.permute.xlu0 %2808
  %2810 = vset.pattern.permute.xlu0 4
  %2811 = vperm.xlu0 %2810, %v44
  %v2812 = vpop.permute.xlu0 %2811
  %2813 = vset.pattern.permute.xlu0 4
  %2814 = vperm.xlu0 %2813, %v45
  %v2815 = vpop.permute.xlu0 %2814
  %2816 = vset.pattern.permute.xlu0 4
  %2817 = vperm.xlu0 %2816, %v46
  %v2818 = vpop.permute.xlu0 %2817
  %2819 = vset.pattern.permute.xlu0 4
  %2820 = vperm.xlu0 %2819, %v47
  %v2821 = vpop.permute.xlu0 %2820
  %2822 = vset.pattern.permute.xlu0 4
  %2823 = vperm.xlu0 %2822, %v48
  %v2824 = vpop.permute.xlu0 %2823
  %2825 = vset.pattern.permute.xlu0 4
  %2826 = vperm.xlu0 %2825, %v49
  %v2827 = vpop.permute.xlu0 %2826
  %2828 = vset.pattern.permute.xlu0 4
  %2829 = vperm.xlu0 %2828, %v50
  %v2830 = vpop.permute.xlu0 %2829
  %2831 = vset.pattern.permute.xlu0 4
  %2832 = vperm.xlu0 %2831, %v51
  %v2833 = vpop.permute.xlu0 %2832
  %2834 = vset.pattern.permute.xlu0 4
  %2835 = vperm.xlu0 %2834, %v52
  %v2836 = vpop.permute.xlu0 %2835
  %2837 = vset.pattern.permute.xlu0 4
  %2838 = vperm.xlu0 %2837, %v53
  %v2839 = vpop.permute.xlu0 %2838
  %2840 = vset.pattern.permute.xlu0 4
  %2841 = vperm.xlu0 %2840, %v54
  %v2842 = vpop.permute.xlu0 %2841
  %2843 = vset.pattern.permute.xlu0 4
  %2844 = vperm.xlu0 %2843, %v55
  %v2845 = vpop.permute.xlu0 %2844
  %2846 = vset.pattern.permute.xlu0 4
  %2847 = vperm.xlu0 %2846, %v56
  %v2848 = vpop.permute.xlu0 %2847
  %2849 = vset.pattern.permute.xlu0 4
  %2850 = vperm.xlu0 %2849, %v57
  %v2851 = vpop.permute.xlu0 %2850
  %2852 = vset.pattern.permute.xlu0 4
  %2853 = vperm.xlu0 %2852, %v58
  %v2854 = vpop.permute.xlu0 %2853
  %2855 = vset.pattern.permute.xlu0 4
  %2856 = vperm.xlu0 %2855, %v59
  %v2857 = vpop.permute.xlu0 %2856
  %2858 = vset.pattern.permute.xlu0 4
  %2859 = vperm.xlu0 %2858, %v60
  %v2860 = vpop.permute.xlu0 %2859
  %2861 = vset.pattern.permute.xlu0 4
  %2862 = vperm.xlu0 %2861, %v61
  %v2863 = vpop.permute.xlu0 %2862
  %2864 = vset.pattern.permute.xlu0 4
  %2865 = vperm.xlu0 %2864, %v62
  %v2866 = vpop.permute.xlu0 %2865
  %2867 = vset.pattern.permute.xlu0 4
  %2868 = vperm.xlu0 %2867, %v63
  %v2869 = vpop.permute.xlu0 %2868
  %2870 = vset.pattern.permute.xlu0 4
  %2871 = vperm.xlu0 %2870, %v64
  %v2872 = vpop.permute.xlu0 %2871
  %2873 = vset.pattern.permute.xlu0 4
  %2874 = vperm.xlu0 %2873, %v65
  %v2875 = vpop.permute.xlu0 %2874
  %2876 = vset.pattern.permute.xlu0 4
  %2877 = vperm.xlu0 %2876, %v66
  %v2878 = vpop.permute.xlu0 %2877
  %2879 = vset.pattern.permute.xlu0 4
  %2880 = vperm.xlu0 %2879, %v67
  %v2881 = vpop.permute.xlu0 %2880
  %2882 = vset.pattern.permute.xlu0 4
  %2883 = vperm.xlu0 %2882, %v68
  %v2884 = vpop.permute.xlu0 %2883
  %2885 = vset.pattern.permute.xlu0 4
  %2886 = vperm.xlu0 %2885, %v69
  %v2887 = vpop.permute.xlu0 %2886
  %2888 = vset.pattern.permute.xlu0 4
  %2889 = vperm.xlu0 %2888, %v70
  %v2890 = vpop.permute.xlu0 %2889
  %2891 = vset.pattern.permute.xlu0 4
  %2892 = vperm.xlu0 %2891, %v71
  %v2893 = vpop.permute.xlu0 %2892
  %2894 = vset.pattern.permute.xlu0 4
  %2895 = vperm.xlu0 %2894, %v72
  %v2896 = vpop.permute.xlu0 %2895
  %2897 = vset.pattern.permute.xlu0 4
  %2898 = vperm.xlu0 %2897, %v73
  %v2899 = vpop.permute.xlu0 %2898
  %2900 = vset.pattern.permute.xlu0 4
  %2901 = vperm.xlu0 %2900, %v74
  %v2902 = vpop.permute.xlu0 %2901
  %2903 = vset.pattern.permute.xlu0 4
  %2904 = vperm.xlu0 %2903, %v75
  %v2905 = vpop.permute.xlu0 %2904
  %2906 = vset.pattern.permute.xlu0 4
  %2907 = vperm.xlu0 %2906, %v76
  %v2908 = vpop.permute.xlu0 %2907
  %2909 = vset.pattern.permute.xlu0 4
  %2910 = vperm.xlu0 %2909, %v77
  %v2911 = vpop.permute.xlu0 %2910
  %vm2912 = vcmp.eq.s32.totalorder %v2722, %v159
  %vm2913 = vcmp.eq.s32.totalorder %v2725, %v159
  %vm2914 = vcmp.eq.s32.totalorder %v2728, %v159
  %vm2915 = vcmp.eq.s32.totalorder %v2731, %v159
  %vm2916 = vcmp.eq.s32.totalorder %v2734, %v159
  %vm2917 = vcmp.eq.s32.totalorder %v2737, %v159
  %vm2918 = vcmp.eq.s32.totalorder %v2740, %v159
  %vm2919 = vcmp.eq.s32.totalorder %v2743, %v159
  %vm2920 = vcmp.eq.s32.totalorder %v2746, %v159
  %vm2921 = vcmp.eq.s32.totalorder %v2749, %v159
  %vm2922 = vcmp.eq.s32.totalorder %v2752, %v159
  %vm2923 = vcmp.eq.s32.totalorder %v2755, %v159
  %vm2924 = vcmp.eq.s32.totalorder %v2758, %v159
  %vm2925 = vcmp.eq.s32.totalorder %v2761, %v159
  %vm2926 = vcmp.eq.s32.totalorder %v2764, %v159
  %vm2927 = vcmp.eq.s32.totalorder %v2767, %v159
  %vm2928 = vcmp.eq.s32.totalorder %v2770, %v159
  %vm2929 = vcmp.eq.s32.totalorder %v2773, %v159
  %vm2930 = vcmp.eq.s32.totalorder %v2776, %v159
  %vm2931 = vcmp.eq.s32.totalorder %v2779, %v159
  %vm2932 = vcmp.eq.s32.totalorder %v2782, %v159
  %vm2933 = vcmp.eq.s32.totalorder %v2785, %v159
  %vm2934 = vcmp.eq.s32.totalorder %v2788, %v159
  %vm2935 = vcmp.eq.s32.totalorder %v2791, %v159
  %vm2936 = vcmp.eq.s32.totalorder %v2794, %v159
  %vm2937 = vcmp.eq.s32.totalorder %v2797, %v159
  %vm2938 = vcmp.eq.s32.totalorder %v2800, %v159
  %vm2939 = vcmp.eq.s32.totalorder %v2803, %v159
  %vm2940 = vcmp.eq.s32.totalorder %v2806, %v159
  %vm2941 = vcmp.eq.s32.totalorder %v2809, %v159
  %vm2942 = vcmp.eq.s32.totalorder %v2812, %v159
  %vm2943 = vcmp.eq.s32.totalorder %v2815, %v159
  %vm2944 = vcmp.eq.s32.totalorder %v2818, %v159
  %vm2945 = vcmp.eq.s32.totalorder %v2821, %v159
  %vm2946 = vcmp.eq.s32.totalorder %v2824, %v159
  %vm2947 = vcmp.eq.s32.totalorder %v2827, %v159
  %vm2948 = vcmp.eq.s32.totalorder %v2830, %v159
  %vm2949 = vcmp.eq.s32.totalorder %v2833, %v159
  %vm2950 = vcmp.eq.s32.totalorder %v2836, %v159
  %vm2951 = vcmp.eq.s32.totalorder %v2839, %v159
  %vm2952 = vcmp.eq.s32.totalorder %v2842, %v159
  %vm2953 = vcmp.eq.s32.totalorder %v2845, %v159
  %vm2954 = vcmp.eq.s32.totalorder %v2848, %v159
  %vm2955 = vcmp.eq.s32.totalorder %v2851, %v159
  %vm2956 = vcmp.eq.s32.totalorder %v2854, %v159
  %vm2957 = vcmp.eq.s32.totalorder %v2857, %v159
  %vm2958 = vcmp.eq.s32.totalorder %v2860, %v159
  %vm2959 = vcmp.eq.s32.totalorder %v2863, %v159
  %vm2960 = vcmp.eq.s32.totalorder %v2866, %v159
  %vm2961 = vcmp.eq.s32.totalorder %v2869, %v159
  %vm2962 = vcmp.eq.s32.totalorder %v2872, %v159
  %vm2963 = vcmp.eq.s32.totalorder %v2875, %v159
  %vm2964 = vcmp.eq.s32.totalorder %v2878, %v159
  %vm2965 = vcmp.eq.s32.totalorder %v2881, %v159
  %vm2966 = vcmp.eq.s32.totalorder %v2884, %v159
  %vm2967 = vcmp.eq.s32.totalorder %v2887, %v159
  %vm2968 = vcmp.eq.s32.totalorder %v2890, %v159
  %vm2969 = vcmp.eq.s32.totalorder %v2893, %v159
  %vm2970 = vcmp.eq.s32.totalorder %v2896, %v159
  %vm2971 = vcmp.eq.s32.totalorder %v2899, %v159
  %vm2972 = vcmp.eq.s32.totalorder %v2902, %v159
  %vm2973 = vcmp.eq.s32.totalorder %v2905, %v159
  %vm2974 = vcmp.eq.s32.totalorder %v2908, %v159
  %vm2975 = vcmp.eq.s32.totalorder %v2911, %v159
  %2976 = vset.pattern.permute.xlu0 4
  %2977 = vperm.xlu0 %2976, %v78
  %v2978 = vpop.permute.xlu0 %2977
  %2980 = vset.pattern.permute.xlu0 4
  %2981 = vperm.xlu0 %2980, %v79
  %v2982 = vpop.permute.xlu0 %2981
  %2984 = vset.pattern.permute.xlu0 4
  %2985 = vperm.xlu0 %2984, %v80
  %v2986 = vpop.permute.xlu0 %2985
  %2988 = vset.pattern.permute.xlu0 4
  %2989 = vperm.xlu0 %2988, %v81
  %v2990 = vpop.permute.xlu0 %2989
  %2992 = vset.pattern.permute.xlu0 4
  %2993 = vperm.xlu0 %2992, %v82
  %v2994 = vpop.permute.xlu0 %2993
  %2996 = vset.pattern.permute.xlu0 4
  %2997 = vperm.xlu0 %2996, %v83
  %v2998 = vpop.permute.xlu0 %2997
  %3000 = vset.pattern.permute.xlu0 4
  %3001 = vperm.xlu0 %3000, %v84
  %v3002 = vpop.permute.xlu0 %3001
  %3004 = vset.pattern.permute.xlu0 4
  %3005 = vperm.xlu0 %3004, %v85
  %v3006 = vpop.permute.xlu0 %3005
  %3008 = vset.pattern.permute.xlu0 4
  %3009 = vperm.xlu0 %3008, %v86
  %v3010 = vpop.permute.xlu0 %3009
  %3012 = vset.pattern.permute.xlu0 4
  %3013 = vperm.xlu0 %3012, %v87
  %v3014 = vpop.permute.xlu0 %3013
  %3016 = vset.pattern.permute.xlu0 4
  %3017 = vperm.xlu0 %3016, %v88
  %v3018 = vpop.permute.xlu0 %3017
  %3020 = vset.pattern.permute.xlu0 4
  %3021 = vperm.xlu0 %3020, %v89
  %v3022 = vpop.permute.xlu0 %3021
  %3024 = vset.pattern.permute.xlu0 4
  %3025 = vperm.xlu0 %3024, %v90
  %v3026 = vpop.permute.xlu0 %3025
  %3028 = vset.pattern.permute.xlu0 4
  %3029 = vperm.xlu0 %3028, %v91
  %v3030 = vpop.permute.xlu0 %3029
  %3032 = vset.pattern.permute.xlu0 4
  %3033 = vperm.xlu0 %3032, %v92
  %v3034 = vpop.permute.xlu0 %3033
  %3036 = vset.pattern.permute.xlu0 4
  %3037 = vperm.xlu0 %3036, %v93
  %v3038 = vpop.permute.xlu0 %3037
  %3040 = vset.pattern.permute.xlu0 4
  %3041 = vperm.xlu0 %3040, %v94
  %v3042 = vpop.permute.xlu0 %3041
  %3044 = vset.pattern.permute.xlu0 4
  %3045 = vperm.xlu0 %3044, %v95
  %v3046 = vpop.permute.xlu0 %3045
  %3048 = vset.pattern.permute.xlu0 4
  %3049 = vperm.xlu0 %3048, %v96
  %v3050 = vpop.permute.xlu0 %3049
  %3052 = vset.pattern.permute.xlu0 4
  %3053 = vperm.xlu0 %3052, %v97
  %v3054 = vpop.permute.xlu0 %3053
  %3056 = vset.pattern.permute.xlu0 4
  %3057 = vperm.xlu0 %3056, %v98
  %v3058 = vpop.permute.xlu0 %3057
  %3060 = vset.pattern.permute.xlu0 4
  %3061 = vperm.xlu0 %3060, %v99
  %v3062 = vpop.permute.xlu0 %3061
  %3064 = vset.pattern.permute.xlu0 4
  %3065 = vperm.xlu0 %3064, %v100
  %v3066 = vpop.permute.xlu0 %3065
  %3068 = vset.pattern.permute.xlu0 4
  %3069 = vperm.xlu0 %3068, %v101
  %v3070 = vpop.permute.xlu0 %3069
  %3072 = vset.pattern.permute.xlu0 4
  %3073 = vperm.xlu0 %3072, %v102
  %v3074 = vpop.permute.xlu0 %3073
  %3076 = vset.pattern.permute.xlu0 4
  %3077 = vperm.xlu0 %3076, %v103
  %v3078 = vpop.permute.xlu0 %3077
  %3080 = vset.pattern.permute.xlu0 4
  %3081 = vperm.xlu0 %3080, %v104
  %v3082 = vpop.permute.xlu0 %3081
  %3084 = vset.pattern.permute.xlu0 4
  %3085 = vperm.xlu0 %3084, %v105
  %v3086 = vpop.permute.xlu0 %3085
  %3088 = vset.pattern.permute.xlu0 4
  %3089 = vperm.xlu0 %3088, %v106
  %v3090 = vpop.permute.xlu0 %3089
  %3092 = vset.pattern.permute.xlu0 4
  %3093 = vperm.xlu0 %3092, %v107
  %v3094 = vpop.permute.xlu0 %3093
  %3096 = vset.pattern.permute.xlu0 4
  %3097 = vperm.xlu0 %3096, %v108
  %v3098 = vpop.permute.xlu0 %3097
  %3100 = vset.pattern.permute.xlu0 4
  %3101 = vperm.xlu0 %3100, %v109
  %v3102 = vpop.permute.xlu0 %3101
  %3104 = vset.pattern.permute.xlu0 4
  %3105 = vperm.xlu0 %3104, %v110
  %v3106 = vpop.permute.xlu0 %3105
  %3108 = vset.pattern.permute.xlu0 4
  %3109 = vperm.xlu0 %3108, %v111
  %v3110 = vpop.permute.xlu0 %3109
  %3112 = vset.pattern.permute.xlu0 4
  %3113 = vperm.xlu0 %3112, %v112
  %v3114 = vpop.permute.xlu0 %3113
  %3116 = vset.pattern.permute.xlu0 4
  %3117 = vperm.xlu0 %3116, %v113
  %v3118 = vpop.permute.xlu0 %3117
  %3120 = vset.pattern.permute.xlu0 4
  %3121 = vperm.xlu0 %3120, %v114
  %v3122 = vpop.permute.xlu0 %3121
  %3124 = vset.pattern.permute.xlu0 4
  %3125 = vperm.xlu0 %3124, %v115
  %v3126 = vpop.permute.xlu0 %3125
  %3128 = vset.pattern.permute.xlu0 4
  %3129 = vperm.xlu0 %3128, %v116
  %v3130 = vpop.permute.xlu0 %3129
  %3132 = vset.pattern.permute.xlu0 4
  %3133 = vperm.xlu0 %3132, %v117
  %v3134 = vpop.permute.xlu0 %3133
  %3136 = vset.pattern.permute.xlu0 4
  %3137 = vperm.xlu0 %3136, %v118
  %v3138 = vpop.permute.xlu0 %3137
  %3140 = vset.pattern.permute.xlu0 4
  %3141 = vperm.xlu0 %3140, %v119
  %v3142 = vpop.permute.xlu0 %3141
  %3144 = vset.pattern.permute.xlu0 4
  %3145 = vperm.xlu0 %3144, %v120
  %v3146 = vpop.permute.xlu0 %3145
  %3148 = vset.pattern.permute.xlu0 4
  %3149 = vperm.xlu0 %3148, %v121
  %v3150 = vpop.permute.xlu0 %3149
  %3152 = vset.pattern.permute.xlu0 4
  %3153 = vperm.xlu0 %3152, %v122
  %v3154 = vpop.permute.xlu0 %3153
  %3156 = vset.pattern.permute.xlu0 4
  %3157 = vperm.xlu0 %3156, %v123
  %v3158 = vpop.permute.xlu0 %3157
  %3160 = vset.pattern.permute.xlu0 4
  %3161 = vperm.xlu0 %3160, %v124
  %v3162 = vpop.permute.xlu0 %3161
  %3164 = vset.pattern.permute.xlu0 4
  %3165 = vperm.xlu0 %3164, %v125
  %v3166 = vpop.permute.xlu0 %3165
  %3168 = vset.pattern.permute.xlu0 4
  %3169 = vperm.xlu0 %3168, %v126
  %v3170 = vpop.permute.xlu0 %3169
  %3172 = vset.pattern.permute.xlu0 4
  %3173 = vperm.xlu0 %3172, %v127
  %v3174 = vpop.permute.xlu0 %3173
  %3176 = vset.pattern.permute.xlu0 4
  %3177 = vperm.xlu0 %3176, %v128
  %v3178 = vpop.permute.xlu0 %3177
  %3180 = vset.pattern.permute.xlu0 4
  %3181 = vperm.xlu0 %3180, %v129
  %v3182 = vpop.permute.xlu0 %3181
  %3184 = vset.pattern.permute.xlu0 4
  %3185 = vperm.xlu0 %3184, %v130
  %v3186 = vpop.permute.xlu0 %3185
  %3188 = vset.pattern.permute.xlu0 4
  %3189 = vperm.xlu0 %3188, %v131
  %v3190 = vpop.permute.xlu0 %3189
  %3192 = vset.pattern.permute.xlu0 4
  %3193 = vperm.xlu0 %3192, %v132
  %v3194 = vpop.permute.xlu0 %3193
  %3196 = vset.pattern.permute.xlu0 4
  %3197 = vperm.xlu0 %3196, %v133
  %v3198 = vpop.permute.xlu0 %3197
  %3200 = vset.pattern.permute.xlu0 4
  %3201 = vperm.xlu0 %3200, %v134
  %v3202 = vpop.permute.xlu0 %3201
  %3204 = vset.pattern.permute.xlu0 4
  %3205 = vperm.xlu0 %3204, %v135
  %v3206 = vpop.permute.xlu0 %3205
  %3208 = vset.pattern.permute.xlu0 4
  %3209 = vperm.xlu0 %3208, %v136
  %v3210 = vpop.permute.xlu0 %3209
  %3212 = vset.pattern.permute.xlu0 4
  %3213 = vperm.xlu0 %3212, %v137
  %v3214 = vpop.permute.xlu0 %3213
  %3216 = vset.pattern.permute.xlu0 4
  %3217 = vperm.xlu0 %3216, %v138
  %v3218 = vpop.permute.xlu0 %3217
  %3220 = vset.pattern.permute.xlu0 4
  %3221 = vperm.xlu0 %3220, %v139
  %v3222 = vpop.permute.xlu0 %3221
  %3224 = vset.pattern.permute.xlu0 4
  %3225 = vperm.xlu0 %3224, %v140
  %v3226 = vpop.permute.xlu0 %3225
  %3228 = vset.pattern.permute.xlu0 4
  %3229 = vperm.xlu0 %3228, %v141
  %v3230 = vpop.permute.xlu0 %3229
  %v3232 = vsel %vm2912, %v2978, 0.0
  %v3233 = vsel %vm2913, %v2982, 0.0
  %v3234 = vsel %vm2914, %v2986, 0.0
  %v3235 = vsel %vm2915, %v2990, 0.0
  %v3236 = vsel %vm2916, %v2994, 0.0
  %v3237 = vsel %vm2917, %v2998, 0.0
  %v3238 = vsel %vm2918, %v3002, 0.0
  %v3239 = vsel %vm2919, %v3006, 0.0
  %v3240 = vsel %vm2920, %v3010, 0.0
  %v3241 = vsel %vm2921, %v3014, 0.0
  %v3242 = vsel %vm2922, %v3018, 0.0
  %v3243 = vsel %vm2923, %v3022, 0.0
  %v3244 = vsel %vm2924, %v3026, 0.0
  %v3245 = vsel %vm2925, %v3030, 0.0
  %v3246 = vsel %vm2926, %v3034, 0.0
  %v3247 = vsel %vm2927, %v3038, 0.0
  %v3248 = vsel %vm2928, %v3042, 0.0
  %v3249 = vsel %vm2929, %v3046, 0.0
  %v3250 = vsel %vm2930, %v3050, 0.0
  %v3251 = vsel %vm2931, %v3054, 0.0
  %v3252 = vsel %vm2932, %v3058, 0.0
  %v3253 = vsel %vm2933, %v3062, 0.0
  %v3254 = vsel %vm2934, %v3066, 0.0
  %v3255 = vsel %vm2935, %v3070, 0.0
  %v3256 = vsel %vm2936, %v3074, 0.0
  %v3257 = vsel %vm2937, %v3078, 0.0
  %v3258 = vsel %vm2938, %v3082, 0.0
  %v3259 = vsel %vm2939, %v3086, 0.0
  %v3260 = vsel %vm2940, %v3090, 0.0
  %v3261 = vsel %vm2941, %v3094, 0.0
  %v3262 = vsel %vm2942, %v3098, 0.0
  %v3263 = vsel %vm2943, %v3102, 0.0
  %v3264 = vsel %vm2944, %v3106, 0.0
  %v3265 = vsel %vm2945, %v3110, 0.0
  %v3266 = vsel %vm2946, %v3114, 0.0
  %v3267 = vsel %vm2947, %v3118, 0.0
  %v3268 = vsel %vm2948, %v3122, 0.0
  %v3269 = vsel %vm2949, %v3126, 0.0
  %v3270 = vsel %vm2950, %v3130, 0.0
  %v3271 = vsel %vm2951, %v3134, 0.0
  %v3272 = vsel %vm2952, %v3138, 0.0
  %v3273 = vsel %vm2953, %v3142, 0.0
  %v3274 = vsel %vm2954, %v3146, 0.0
  %v3275 = vsel %vm2955, %v3150, 0.0
  %v3276 = vsel %vm2956, %v3154, 0.0
  %v3277 = vsel %vm2957, %v3158, 0.0
  %v3278 = vsel %vm2958, %v3162, 0.0
  %v3279 = vsel %vm2959, %v3166, 0.0
  %v3280 = vsel %vm2960, %v3170, 0.0
  %v3281 = vsel %vm2961, %v3174, 0.0
  %v3282 = vsel %vm2962, %v3178, 0.0
  %v3283 = vsel %vm2963, %v3182, 0.0
  %v3284 = vsel %vm2964, %v3186, 0.0
  %v3285 = vsel %vm2965, %v3190, 0.0
  %v3286 = vsel %vm2966, %v3194, 0.0
  %v3287 = vsel %vm2967, %v3198, 0.0
  %v3288 = vsel %vm2968, %v3202, 0.0
  %v3289 = vsel %vm2969, %v3206, 0.0
  %v3290 = vsel %vm2970, %v3210, 0.0
  %v3291 = vsel %vm2971, %v3214, 0.0
  %v3292 = vsel %vm2972, %v3218, 0.0
  %v3293 = vsel %vm2973, %v3222, 0.0
  %v3294 = vsel %vm2974, %v3226, 0.0
  %v3295 = vsel %vm2975, %v3230, 0.0
  %v3296 = vadd.f32 %v2656, %v3232
  %v3297 = vadd.f32 %v2657, %v3233
  %v3298 = vadd.f32 %v2658, %v3234
  %v3299 = vadd.f32 %v2659, %v3235
  %v3300 = vadd.f32 %v2660, %v3236
  %v3301 = vadd.f32 %v2661, %v3237
  %v3302 = vadd.f32 %v2662, %v3238
  %v3303 = vadd.f32 %v2663, %v3239
  %v3304 = vadd.f32 %v2664, %v3240
  %v3305 = vadd.f32 %v2665, %v3241
  %v3306 = vadd.f32 %v2666, %v3242
  %v3307 = vadd.f32 %v2667, %v3243
  %v3308 = vadd.f32 %v2668, %v3244
  %v3309 = vadd.f32 %v2669, %v3245
  %v3310 = vadd.f32 %v2670, %v3246
  %v3311 = vadd.f32 %v2671, %v3247
  %v3312 = vadd.f32 %v2672, %v3248
  %v3313 = vadd.f32 %v2673, %v3249
  %v3314 = vadd.f32 %v2674, %v3250
  %v3315 = vadd.f32 %v2675, %v3251
  %v3316 = vadd.f32 %v2676, %v3252
  %v3317 = vadd.f32 %v2677, %v3253
  %v3318 = vadd.f32 %v2678, %v3254
  %v3319 = vadd.f32 %v2679, %v3255
  %v3320 = vadd.f32 %v2680, %v3256
  %v3321 = vadd.f32 %v2681, %v3257
  %v3322 = vadd.f32 %v2682, %v3258
  %v3323 = vadd.f32 %v2683, %v3259
  %v3324 = vadd.f32 %v2684, %v3260
  %v3325 = vadd.f32 %v2685, %v3261
  %v3326 = vadd.f32 %v2686, %v3262
  %v3327 = vadd.f32 %v2687, %v3263
  %v3328 = vadd.f32 %v2688, %v3264
  %v3329 = vadd.f32 %v2689, %v3265
  %v3330 = vadd.f32 %v2690, %v3266
  %v3331 = vadd.f32 %v2691, %v3267
  %v3332 = vadd.f32 %v2692, %v3268
  %v3333 = vadd.f32 %v2693, %v3269
  %v3334 = vadd.f32 %v2694, %v3270
  %v3335 = vadd.f32 %v2695, %v3271
  %v3336 = vadd.f32 %v2696, %v3272
  %v3337 = vadd.f32 %v2697, %v3273
  %v3338 = vadd.f32 %v2698, %v3274
  %v3339 = vadd.f32 %v2699, %v3275
  %v3340 = vadd.f32 %v2700, %v3276
  %v3341 = vadd.f32 %v2701, %v3277
  %v3342 = vadd.f32 %v2702, %v3278
  %v3343 = vadd.f32 %v2703, %v3279
  %v3344 = vadd.f32 %v2704, %v3280
  %v3345 = vadd.f32 %v2705, %v3281
  %v3346 = vadd.f32 %v2706, %v3282
  %v3347 = vadd.f32 %v2707, %v3283
  %v3348 = vadd.f32 %v2708, %v3284
  %v3349 = vadd.f32 %v2709, %v3285
  %v3350 = vadd.f32 %v2710, %v3286
  %v3351 = vadd.f32 %v2711, %v3287
  %v3352 = vadd.f32 %v2712, %v3288
  %v3353 = vadd.f32 %v2713, %v3289
  %v3354 = vadd.f32 %v2714, %v3290
  %v3355 = vadd.f32 %v2715, %v3291
  %v3356 = vadd.f32 %v2716, %v3292
  %v3357 = vadd.f32 %v2717, %v3293
  %v3358 = vadd.f32 %v2718, %v3294
  %v3359 = vadd.f32 %v2719, %v3295
  %3360 = vset.pattern.permute.xlu0 5
  %3361 = vperm.xlu0 %3360, %v14
  %v3362 = vpop.permute.xlu0 %3361
  %3363 = vset.pattern.permute.xlu0 5
  %3364 = vperm.xlu0 %3363, %v15
  %v3365 = vpop.permute.xlu0 %3364
  %3366 = vset.pattern.permute.xlu0 5
  %3367 = vperm.xlu0 %3366, %v16
  %v3368 = vpop.permute.xlu0 %3367
  %3369 = vset.pattern.permute.xlu0 5
  %3370 = vperm.xlu0 %3369, %v17
  %v3371 = vpop.permute.xlu0 %3370
  %3372 = vset.pattern.permute.xlu0 5
  %3373 = vperm.xlu0 %3372, %v18
  %v3374 = vpop.permute.xlu0 %3373
  %3375 = vset.pattern.permute.xlu0 5
  %3376 = vperm.xlu0 %3375, %v19
  %v3377 = vpop.permute.xlu0 %3376
  %3378 = vset.pattern.permute.xlu0 5
  %3379 = vperm.xlu0 %3378, %v20
  %v3380 = vpop.permute.xlu0 %3379
  %3381 = vset.pattern.permute.xlu0 5
  %3382 = vperm.xlu0 %3381, %v21
  %v3383 = vpop.permute.xlu0 %3382
  %3384 = vset.pattern.permute.xlu0 5
  %3385 = vperm.xlu0 %3384, %v22
  %v3386 = vpop.permute.xlu0 %3385
  %3387 = vset.pattern.permute.xlu0 5
  %3388 = vperm.xlu0 %3387, %v23
  %v3389 = vpop.permute.xlu0 %3388
  %3390 = vset.pattern.permute.xlu0 5
  %3391 = vperm.xlu0 %3390, %v24
  %v3392 = vpop.permute.xlu0 %3391
  %3393 = vset.pattern.permute.xlu0 5
  %3394 = vperm.xlu0 %3393, %v25
  %v3395 = vpop.permute.xlu0 %3394
  %3396 = vset.pattern.permute.xlu0 5
  %3397 = vperm.xlu0 %3396, %v26
  %v3398 = vpop.permute.xlu0 %3397
  %3399 = vset.pattern.permute.xlu0 5
  %3400 = vperm.xlu0 %3399, %v27
  %v3401 = vpop.permute.xlu0 %3400
  %3402 = vset.pattern.permute.xlu0 5
  %3403 = vperm.xlu0 %3402, %v28
  %v3404 = vpop.permute.xlu0 %3403
  %3405 = vset.pattern.permute.xlu0 5
  %3406 = vperm.xlu0 %3405, %v29
  %v3407 = vpop.permute.xlu0 %3406
  %3408 = vset.pattern.permute.xlu0 5
  %3409 = vperm.xlu0 %3408, %v30
  %v3410 = vpop.permute.xlu0 %3409
  %3411 = vset.pattern.permute.xlu0 5
  %3412 = vperm.xlu0 %3411, %v31
  %v3413 = vpop.permute.xlu0 %3412
  %3414 = vset.pattern.permute.xlu0 5
  %3415 = vperm.xlu0 %3414, %v32
  %v3416 = vpop.permute.xlu0 %3415
  %3417 = vset.pattern.permute.xlu0 5
  %3418 = vperm.xlu0 %3417, %v33
  %v3419 = vpop.permute.xlu0 %3418
  %3420 = vset.pattern.permute.xlu0 5
  %3421 = vperm.xlu0 %3420, %v34
  %v3422 = vpop.permute.xlu0 %3421
  %3423 = vset.pattern.permute.xlu0 5
  %3424 = vperm.xlu0 %3423, %v35
  %v3425 = vpop.permute.xlu0 %3424
  %3426 = vset.pattern.permute.xlu0 5
  %3427 = vperm.xlu0 %3426, %v36
  %v3428 = vpop.permute.xlu0 %3427
  %3429 = vset.pattern.permute.xlu0 5
  %3430 = vperm.xlu0 %3429, %v37
  %v3431 = vpop.permute.xlu0 %3430
  %3432 = vset.pattern.permute.xlu0 5
  %3433 = vperm.xlu0 %3432, %v38
  %v3434 = vpop.permute.xlu0 %3433
  %3435 = vset.pattern.permute.xlu0 5
  %3436 = vperm.xlu0 %3435, %v39
  %v3437 = vpop.permute.xlu0 %3436
  %3438 = vset.pattern.permute.xlu0 5
  %3439 = vperm.xlu0 %3438, %v40
  %v3440 = vpop.permute.xlu0 %3439
  %3441 = vset.pattern.permute.xlu0 5
  %3442 = vperm.xlu0 %3441, %v41
  %v3443 = vpop.permute.xlu0 %3442
  %3444 = vset.pattern.permute.xlu0 5
  %3445 = vperm.xlu0 %3444, %v42
  %v3446 = vpop.permute.xlu0 %3445
  %3447 = vset.pattern.permute.xlu0 5
  %3448 = vperm.xlu0 %3447, %v43
  %v3449 = vpop.permute.xlu0 %3448
  %3450 = vset.pattern.permute.xlu0 5
  %3451 = vperm.xlu0 %3450, %v44
  %v3452 = vpop.permute.xlu0 %3451
  %3453 = vset.pattern.permute.xlu0 5
  %3454 = vperm.xlu0 %3453, %v45
  %v3455 = vpop.permute.xlu0 %3454
  %3456 = vset.pattern.permute.xlu0 5
  %3457 = vperm.xlu0 %3456, %v46
  %v3458 = vpop.permute.xlu0 %3457
  %3459 = vset.pattern.permute.xlu0 5
  %3460 = vperm.xlu0 %3459, %v47
  %v3461 = vpop.permute.xlu0 %3460
  %3462 = vset.pattern.permute.xlu0 5
  %3463 = vperm.xlu0 %3462, %v48
  %v3464 = vpop.permute.xlu0 %3463
  %3465 = vset.pattern.permute.xlu0 5
  %3466 = vperm.xlu0 %3465, %v49
  %v3467 = vpop.permute.xlu0 %3466
  %3468 = vset.pattern.permute.xlu0 5
  %3469 = vperm.xlu0 %3468, %v50
  %v3470 = vpop.permute.xlu0 %3469
  %3471 = vset.pattern.permute.xlu0 5
  %3472 = vperm.xlu0 %3471, %v51
  %v3473 = vpop.permute.xlu0 %3472
  %3474 = vset.pattern.permute.xlu0 5
  %3475 = vperm.xlu0 %3474, %v52
  %v3476 = vpop.permute.xlu0 %3475
  %3477 = vset.pattern.permute.xlu0 5
  %3478 = vperm.xlu0 %3477, %v53
  %v3479 = vpop.permute.xlu0 %3478
  %3480 = vset.pattern.permute.xlu0 5
  %3481 = vperm.xlu0 %3480, %v54
  %v3482 = vpop.permute.xlu0 %3481
  %3483 = vset.pattern.permute.xlu0 5
  %3484 = vperm.xlu0 %3483, %v55
  %v3485 = vpop.permute.xlu0 %3484
  %3486 = vset.pattern.permute.xlu0 5
  %3487 = vperm.xlu0 %3486, %v56
  %v3488 = vpop.permute.xlu0 %3487
  %3489 = vset.pattern.permute.xlu0 5
  %3490 = vperm.xlu0 %3489, %v57
  %v3491 = vpop.permute.xlu0 %3490
  %3492 = vset.pattern.permute.xlu0 5
  %3493 = vperm.xlu0 %3492, %v58
  %v3494 = vpop.permute.xlu0 %3493
  %3495 = vset.pattern.permute.xlu0 5
  %3496 = vperm.xlu0 %3495, %v59
  %v3497 = vpop.permute.xlu0 %3496
  %3498 = vset.pattern.permute.xlu0 5
  %3499 = vperm.xlu0 %3498, %v60
  %v3500 = vpop.permute.xlu0 %3499
  %3501 = vset.pattern.permute.xlu0 5
  %3502 = vperm.xlu0 %3501, %v61
  %v3503 = vpop.permute.xlu0 %3502
  %3504 = vset.pattern.permute.xlu0 5
  %3505 = vperm.xlu0 %3504, %v62
  %v3506 = vpop.permute.xlu0 %3505
  %3507 = vset.pattern.permute.xlu0 5
  %3508 = vperm.xlu0 %3507, %v63
  %v3509 = vpop.permute.xlu0 %3508
  %3510 = vset.pattern.permute.xlu0 5
  %3511 = vperm.xlu0 %3510, %v64
  %v3512 = vpop.permute.xlu0 %3511
  %3513 = vset.pattern.permute.xlu0 5
  %3514 = vperm.xlu0 %3513, %v65
  %v3515 = vpop.permute.xlu0 %3514
  %3516 = vset.pattern.permute.xlu0 5
  %3517 = vperm.xlu0 %3516, %v66
  %v3518 = vpop.permute.xlu0 %3517
  %3519 = vset.pattern.permute.xlu0 5
  %3520 = vperm.xlu0 %3519, %v67
  %v3521 = vpop.permute.xlu0 %3520
  %3522 = vset.pattern.permute.xlu0 5
  %3523 = vperm.xlu0 %3522, %v68
  %v3524 = vpop.permute.xlu0 %3523
  %3525 = vset.pattern.permute.xlu0 5
  %3526 = vperm.xlu0 %3525, %v69
  %v3527 = vpop.permute.xlu0 %3526
  %3528 = vset.pattern.permute.xlu0 5
  %3529 = vperm.xlu0 %3528, %v70
  %v3530 = vpop.permute.xlu0 %3529
  %3531 = vset.pattern.permute.xlu0 5
  %3532 = vperm.xlu0 %3531, %v71
  %v3533 = vpop.permute.xlu0 %3532
  %3534 = vset.pattern.permute.xlu0 5
  %3535 = vperm.xlu0 %3534, %v72
  %v3536 = vpop.permute.xlu0 %3535
  %3537 = vset.pattern.permute.xlu0 5
  %3538 = vperm.xlu0 %3537, %v73
  %v3539 = vpop.permute.xlu0 %3538
  %3540 = vset.pattern.permute.xlu0 5
  %3541 = vperm.xlu0 %3540, %v74
  %v3542 = vpop.permute.xlu0 %3541
  %3543 = vset.pattern.permute.xlu0 5
  %3544 = vperm.xlu0 %3543, %v75
  %v3545 = vpop.permute.xlu0 %3544
  %3546 = vset.pattern.permute.xlu0 5
  %3547 = vperm.xlu0 %3546, %v76
  %v3548 = vpop.permute.xlu0 %3547
  %3549 = vset.pattern.permute.xlu0 5
  %3550 = vperm.xlu0 %3549, %v77
  %v3551 = vpop.permute.xlu0 %3550
  %vm3552 = vcmp.eq.s32.totalorder %v3362, %v159
  %vm3553 = vcmp.eq.s32.totalorder %v3365, %v159
  %vm3554 = vcmp.eq.s32.totalorder %v3368, %v159
  %vm3555 = vcmp.eq.s32.totalorder %v3371, %v159
  %vm3556 = vcmp.eq.s32.totalorder %v3374, %v159
  %vm3557 = vcmp.eq.s32.totalorder %v3377, %v159
  %vm3558 = vcmp.eq.s32.totalorder %v3380, %v159
  %vm3559 = vcmp.eq.s32.totalorder %v3383, %v159
  %vm3560 = vcmp.eq.s32.totalorder %v3386, %v159
  %vm3561 = vcmp.eq.s32.totalorder %v3389, %v159
  %vm3562 = vcmp.eq.s32.totalorder %v3392, %v159
  %vm3563 = vcmp.eq.s32.totalorder %v3395, %v159
  %vm3564 = vcmp.eq.s32.totalorder %v3398, %v159
  %vm3565 = vcmp.eq.s32.totalorder %v3401, %v159
  %vm3566 = vcmp.eq.s32.totalorder %v3404, %v159
  %vm3567 = vcmp.eq.s32.totalorder %v3407, %v159
  %vm3568 = vcmp.eq.s32.totalorder %v3410, %v159
  %vm3569 = vcmp.eq.s32.totalorder %v3413, %v159
  %vm3570 = vcmp.eq.s32.totalorder %v3416, %v159
  %vm3571 = vcmp.eq.s32.totalorder %v3419, %v159
  %vm3572 = vcmp.eq.s32.totalorder %v3422, %v159
  %vm3573 = vcmp.eq.s32.totalorder %v3425, %v159
  %vm3574 = vcmp.eq.s32.totalorder %v3428, %v159
  %vm3575 = vcmp.eq.s32.totalorder %v3431, %v159
  %vm3576 = vcmp.eq.s32.totalorder %v3434, %v159
  %vm3577 = vcmp.eq.s32.totalorder %v3437, %v159
  %vm3578 = vcmp.eq.s32.totalorder %v3440, %v159
  %vm3579 = vcmp.eq.s32.totalorder %v3443, %v159
  %vm3580 = vcmp.eq.s32.totalorder %v3446, %v159
  %vm3581 = vcmp.eq.s32.totalorder %v3449, %v159
  %vm3582 = vcmp.eq.s32.totalorder %v3452, %v159
  %vm3583 = vcmp.eq.s32.totalorder %v3455, %v159
  %vm3584 = vcmp.eq.s32.totalorder %v3458, %v159
  %vm3585 = vcmp.eq.s32.totalorder %v3461, %v159
  %vm3586 = vcmp.eq.s32.totalorder %v3464, %v159
  %vm3587 = vcmp.eq.s32.totalorder %v3467, %v159
  %vm3588 = vcmp.eq.s32.totalorder %v3470, %v159
  %vm3589 = vcmp.eq.s32.totalorder %v3473, %v159
  %vm3590 = vcmp.eq.s32.totalorder %v3476, %v159
  %vm3591 = vcmp.eq.s32.totalorder %v3479, %v159
  %vm3592 = vcmp.eq.s32.totalorder %v3482, %v159
  %vm3593 = vcmp.eq.s32.totalorder %v3485, %v159
  %vm3594 = vcmp.eq.s32.totalorder %v3488, %v159
  %vm3595 = vcmp.eq.s32.totalorder %v3491, %v159
  %vm3596 = vcmp.eq.s32.totalorder %v3494, %v159
  %vm3597 = vcmp.eq.s32.totalorder %v3497, %v159
  %vm3598 = vcmp.eq.s32.totalorder %v3500, %v159
  %vm3599 = vcmp.eq.s32.totalorder %v3503, %v159
  %vm3600 = vcmp.eq.s32.totalorder %v3506, %v159
  %vm3601 = vcmp.eq.s32.totalorder %v3509, %v159
  %vm3602 = vcmp.eq.s32.totalorder %v3512, %v159
  %vm3603 = vcmp.eq.s32.totalorder %v3515, %v159
  %vm3604 = vcmp.eq.s32.totalorder %v3518, %v159
  %vm3605 = vcmp.eq.s32.totalorder %v3521, %v159
  %vm3606 = vcmp.eq.s32.totalorder %v3524, %v159
  %vm3607 = vcmp.eq.s32.totalorder %v3527, %v159
  %vm3608 = vcmp.eq.s32.totalorder %v3530, %v159
  %vm3609 = vcmp.eq.s32.totalorder %v3533, %v159
  %vm3610 = vcmp.eq.s32.totalorder %v3536, %v159
  %vm3611 = vcmp.eq.s32.totalorder %v3539, %v159
  %vm3612 = vcmp.eq.s32.totalorder %v3542, %v159
  %vm3613 = vcmp.eq.s32.totalorder %v3545, %v159
  %vm3614 = vcmp.eq.s32.totalorder %v3548, %v159
  %vm3615 = vcmp.eq.s32.totalorder %v3551, %v159
  %3616 = vset.pattern.permute.xlu0 5
  %3617 = vperm.xlu0 %3616, %v78
  %v3618 = vpop.permute.xlu0 %3617
  %3620 = vset.pattern.permute.xlu0 5
  %3621 = vperm.xlu0 %3620, %v79
  %v3622 = vpop.permute.xlu0 %3621
  %3624 = vset.pattern.permute.xlu0 5
  %3625 = vperm.xlu0 %3624, %v80
  %v3626 = vpop.permute.xlu0 %3625
  %3628 = vset.pattern.permute.xlu0 5
  %3629 = vperm.xlu0 %3628, %v81
  %v3630 = vpop.permute.xlu0 %3629
  %3632 = vset.pattern.permute.xlu0 5
  %3633 = vperm.xlu0 %3632, %v82
  %v3634 = vpop.permute.xlu0 %3633
  %3636 = vset.pattern.permute.xlu0 5
  %3637 = vperm.xlu0 %3636, %v83
  %v3638 = vpop.permute.xlu0 %3637
  %3640 = vset.pattern.permute.xlu0 5
  %3641 = vperm.xlu0 %3640, %v84
  %v3642 = vpop.permute.xlu0 %3641
  %3644 = vset.pattern.permute.xlu0 5
  %3645 = vperm.xlu0 %3644, %v85
  %v3646 = vpop.permute.xlu0 %3645
  %3648 = vset.pattern.permute.xlu0 5
  %3649 = vperm.xlu0 %3648, %v86
  %v3650 = vpop.permute.xlu0 %3649
  %3652 = vset.pattern.permute.xlu0 5
  %3653 = vperm.xlu0 %3652, %v87
  %v3654 = vpop.permute.xlu0 %3653
  %3656 = vset.pattern.permute.xlu0 5
  %3657 = vperm.xlu0 %3656, %v88
  %v3658 = vpop.permute.xlu0 %3657
  %3660 = vset.pattern.permute.xlu0 5
  %3661 = vperm.xlu0 %3660, %v89
  %v3662 = vpop.permute.xlu0 %3661
  %3664 = vset.pattern.permute.xlu0 5
  %3665 = vperm.xlu0 %3664, %v90
  %v3666 = vpop.permute.xlu0 %3665
  %3668 = vset.pattern.permute.xlu0 5
  %3669 = vperm.xlu0 %3668, %v91
  %v3670 = vpop.permute.xlu0 %3669
  %3672 = vset.pattern.permute.xlu0 5
  %3673 = vperm.xlu0 %3672, %v92
  %v3674 = vpop.permute.xlu0 %3673
  %3676 = vset.pattern.permute.xlu0 5
  %3677 = vperm.xlu0 %3676, %v93
  %v3678 = vpop.permute.xlu0 %3677
  %3680 = vset.pattern.permute.xlu0 5
  %3681 = vperm.xlu0 %3680, %v94
  %v3682 = vpop.permute.xlu0 %3681
  %3684 = vset.pattern.permute.xlu0 5
  %3685 = vperm.xlu0 %3684, %v95
  %v3686 = vpop.permute.xlu0 %3685
  %3688 = vset.pattern.permute.xlu0 5
  %3689 = vperm.xlu0 %3688, %v96
  %v3690 = vpop.permute.xlu0 %3689
  %3692 = vset.pattern.permute.xlu0 5
  %3693 = vperm.xlu0 %3692, %v97
  %v3694 = vpop.permute.xlu0 %3693
  %3696 = vset.pattern.permute.xlu0 5
  %3697 = vperm.xlu0 %3696, %v98
  %v3698 = vpop.permute.xlu0 %3697
  %3700 = vset.pattern.permute.xlu0 5
  %3701 = vperm.xlu0 %3700, %v99
  %v3702 = vpop.permute.xlu0 %3701
  %3704 = vset.pattern.permute.xlu0 5
  %3705 = vperm.xlu0 %3704, %v100
  %v3706 = vpop.permute.xlu0 %3705
  %3708 = vset.pattern.permute.xlu0 5
  %3709 = vperm.xlu0 %3708, %v101
  %v3710 = vpop.permute.xlu0 %3709
  %3712 = vset.pattern.permute.xlu0 5
  %3713 = vperm.xlu0 %3712, %v102
  %v3714 = vpop.permute.xlu0 %3713
  %3716 = vset.pattern.permute.xlu0 5
  %3717 = vperm.xlu0 %3716, %v103
  %v3718 = vpop.permute.xlu0 %3717
  %3720 = vset.pattern.permute.xlu0 5
  %3721 = vperm.xlu0 %3720, %v104
  %v3722 = vpop.permute.xlu0 %3721
  %3724 = vset.pattern.permute.xlu0 5
  %3725 = vperm.xlu0 %3724, %v105
  %v3726 = vpop.permute.xlu0 %3725
  %3728 = vset.pattern.permute.xlu0 5
  %3729 = vperm.xlu0 %3728, %v106
  %v3730 = vpop.permute.xlu0 %3729
  %3732 = vset.pattern.permute.xlu0 5
  %3733 = vperm.xlu0 %3732, %v107
  %v3734 = vpop.permute.xlu0 %3733
  %3736 = vset.pattern.permute.xlu0 5
  %3737 = vperm.xlu0 %3736, %v108
  %v3738 = vpop.permute.xlu0 %3737
  %3740 = vset.pattern.permute.xlu0 5
  %3741 = vperm.xlu0 %3740, %v109
  %v3742 = vpop.permute.xlu0 %3741
  %3744 = vset.pattern.permute.xlu0 5
  %3745 = vperm.xlu0 %3744, %v110
  %v3746 = vpop.permute.xlu0 %3745
  %3748 = vset.pattern.permute.xlu0 5
  %3749 = vperm.xlu0 %3748, %v111
  %v3750 = vpop.permute.xlu0 %3749
  %3752 = vset.pattern.permute.xlu0 5
  %3753 = vperm.xlu0 %3752, %v112
  %v3754 = vpop.permute.xlu0 %3753
  %3756 = vset.pattern.permute.xlu0 5
  %3757 = vperm.xlu0 %3756, %v113
  %v3758 = vpop.permute.xlu0 %3757
  %3760 = vset.pattern.permute.xlu0 5
  %3761 = vperm.xlu0 %3760, %v114
  %v3762 = vpop.permute.xlu0 %3761
  %3764 = vset.pattern.permute.xlu0 5
  %3765 = vperm.xlu0 %3764, %v115
  %v3766 = vpop.permute.xlu0 %3765
  %3768 = vset.pattern.permute.xlu0 5
  %3769 = vperm.xlu0 %3768, %v116
  %v3770 = vpop.permute.xlu0 %3769
  %3772 = vset.pattern.permute.xlu0 5
  %3773 = vperm.xlu0 %3772, %v117
  %v3774 = vpop.permute.xlu0 %3773
  %3776 = vset.pattern.permute.xlu0 5
  %3777 = vperm.xlu0 %3776, %v118
  %v3778 = vpop.permute.xlu0 %3777
  %3780 = vset.pattern.permute.xlu0 5
  %3781 = vperm.xlu0 %3780, %v119
  %v3782 = vpop.permute.xlu0 %3781
  %3784 = vset.pattern.permute.xlu0 5
  %3785 = vperm.xlu0 %3784, %v120
  %v3786 = vpop.permute.xlu0 %3785
  %3788 = vset.pattern.permute.xlu0 5
  %3789 = vperm.xlu0 %3788, %v121
  %v3790 = vpop.permute.xlu0 %3789
  %3792 = vset.pattern.permute.xlu0 5
  %3793 = vperm.xlu0 %3792, %v122
  %v3794 = vpop.permute.xlu0 %3793
  %3796 = vset.pattern.permute.xlu0 5
  %3797 = vperm.xlu0 %3796, %v123
  %v3798 = vpop.permute.xlu0 %3797
  %3800 = vset.pattern.permute.xlu0 5
  %3801 = vperm.xlu0 %3800, %v124
  %v3802 = vpop.permute.xlu0 %3801
  %3804 = vset.pattern.permute.xlu0 5
  %3805 = vperm.xlu0 %3804, %v125
  %v3806 = vpop.permute.xlu0 %3805
  %3808 = vset.pattern.permute.xlu0 5
  %3809 = vperm.xlu0 %3808, %v126
  %v3810 = vpop.permute.xlu0 %3809
  %3812 = vset.pattern.permute.xlu0 5
  %3813 = vperm.xlu0 %3812, %v127
  %v3814 = vpop.permute.xlu0 %3813
  %3816 = vset.pattern.permute.xlu0 5
  %3817 = vperm.xlu0 %3816, %v128
  %v3818 = vpop.permute.xlu0 %3817
  %3820 = vset.pattern.permute.xlu0 5
  %3821 = vperm.xlu0 %3820, %v129
  %v3822 = vpop.permute.xlu0 %3821
  %3824 = vset.pattern.permute.xlu0 5
  %3825 = vperm.xlu0 %3824, %v130
  %v3826 = vpop.permute.xlu0 %3825
  %3828 = vset.pattern.permute.xlu0 5
  %3829 = vperm.xlu0 %3828, %v131
  %v3830 = vpop.permute.xlu0 %3829
  %3832 = vset.pattern.permute.xlu0 5
  %3833 = vperm.xlu0 %3832, %v132
  %v3834 = vpop.permute.xlu0 %3833
  %3836 = vset.pattern.permute.xlu0 5
  %3837 = vperm.xlu0 %3836, %v133
  %v3838 = vpop.permute.xlu0 %3837
  %3840 = vset.pattern.permute.xlu0 5
  %3841 = vperm.xlu0 %3840, %v134
  %v3842 = vpop.permute.xlu0 %3841
  %3844 = vset.pattern.permute.xlu0 5
  %3845 = vperm.xlu0 %3844, %v135
  %v3846 = vpop.permute.xlu0 %3845
  %3848 = vset.pattern.permute.xlu0 5
  %3849 = vperm.xlu0 %3848, %v136
  %v3850 = vpop.permute.xlu0 %3849
  %3852 = vset.pattern.permute.xlu0 5
  %3853 = vperm.xlu0 %3852, %v137
  %v3854 = vpop.permute.xlu0 %3853
  %3856 = vset.pattern.permute.xlu0 5
  %3857 = vperm.xlu0 %3856, %v138
  %v3858 = vpop.permute.xlu0 %3857
  %3860 = vset.pattern.permute.xlu0 5
  %3861 = vperm.xlu0 %3860, %v139
  %v3862 = vpop.permute.xlu0 %3861
  %3864 = vset.pattern.permute.xlu0 5
  %3865 = vperm.xlu0 %3864, %v140
  %v3866 = vpop.permute.xlu0 %3865
  %3868 = vset.pattern.permute.xlu0 5
  %3869 = vperm.xlu0 %3868, %v141
  %v3870 = vpop.permute.xlu0 %3869
  %v3872 = vsel %vm3552, %v3618, 0.0
  %v3873 = vsel %vm3553, %v3622, 0.0
  %v3874 = vsel %vm3554, %v3626, 0.0
  %v3875 = vsel %vm3555, %v3630, 0.0
  %v3876 = vsel %vm3556, %v3634, 0.0
  %v3877 = vsel %vm3557, %v3638, 0.0
  %v3878 = vsel %vm3558, %v3642, 0.0
  %v3879 = vsel %vm3559, %v3646, 0.0
  %v3880 = vsel %vm3560, %v3650, 0.0
  %v3881 = vsel %vm3561, %v3654, 0.0
  %v3882 = vsel %vm3562, %v3658, 0.0
  %v3883 = vsel %vm3563, %v3662, 0.0
  %v3884 = vsel %vm3564, %v3666, 0.0
  %v3885 = vsel %vm3565, %v3670, 0.0
  %v3886 = vsel %vm3566, %v3674, 0.0
  %v3887 = vsel %vm3567, %v3678, 0.0
  %v3888 = vsel %vm3568, %v3682, 0.0
  %v3889 = vsel %vm3569, %v3686, 0.0
  %v3890 = vsel %vm3570, %v3690, 0.0
  %v3891 = vsel %vm3571, %v3694, 0.0
  %v3892 = vsel %vm3572, %v3698, 0.0
  %v3893 = vsel %vm3573, %v3702, 0.0
  %v3894 = vsel %vm3574, %v3706, 0.0
  %v3895 = vsel %vm3575, %v3710, 0.0
  %v3896 = vsel %vm3576, %v3714, 0.0
  %v3897 = vsel %vm3577, %v3718, 0.0
  %v3898 = vsel %vm3578, %v3722, 0.0
  %v3899 = vsel %vm3579, %v3726, 0.0
  %v3900 = vsel %vm3580, %v3730, 0.0
  %v3901 = vsel %vm3581, %v3734, 0.0
  %v3902 = vsel %vm3582, %v3738, 0.0
  %v3903 = vsel %vm3583, %v3742, 0.0
  %v3904 = vsel %vm3584, %v3746, 0.0
  %v3905 = vsel %vm3585, %v3750, 0.0
  %v3906 = vsel %vm3586, %v3754, 0.0
  %v3907 = vsel %vm3587, %v3758, 0.0
  %v3908 = vsel %vm3588, %v3762, 0.0
  %v3909 = vsel %vm3589, %v3766, 0.0
  %v3910 = vsel %vm3590, %v3770, 0.0
  %v3911 = vsel %vm3591, %v3774, 0.0
  %v3912 = vsel %vm3592, %v3778, 0.0
  %v3913 = vsel %vm3593, %v3782, 0.0
  %v3914 = vsel %vm3594, %v3786, 0.0
  %v3915 = vsel %vm3595, %v3790, 0.0
  %v3916 = vsel %vm3596, %v3794, 0.0
  %v3917 = vsel %vm3597, %v3798, 0.0
  %v3918 = vsel %vm3598, %v3802, 0.0
  %v3919 = vsel %vm3599, %v3806, 0.0
  %v3920 = vsel %vm3600, %v3810, 0.0
  %v3921 = vsel %vm3601, %v3814, 0.0
  %v3922 = vsel %vm3602, %v3818, 0.0
  %v3923 = vsel %vm3603, %v3822, 0.0
  %v3924 = vsel %vm3604, %v3826, 0.0
  %v3925 = vsel %vm3605, %v3830, 0.0
  %v3926 = vsel %vm3606, %v3834, 0.0
  %v3927 = vsel %vm3607, %v3838, 0.0
  %v3928 = vsel %vm3608, %v3842, 0.0
  %v3929 = vsel %vm3609, %v3846, 0.0
  %v3930 = vsel %vm3610, %v3850, 0.0
  %v3931 = vsel %vm3611, %v3854, 0.0
  %v3932 = vsel %vm3612, %v3858, 0.0
  %v3933 = vsel %vm3613, %v3862, 0.0
  %v3934 = vsel %vm3614, %v3866, 0.0
  %v3935 = vsel %vm3615, %v3870, 0.0
  %v3936 = vadd.f32 %v3296, %v3872
  %v3937 = vadd.f32 %v3297, %v3873
  %v3938 = vadd.f32 %v3298, %v3874
  %v3939 = vadd.f32 %v3299, %v3875
  %v3940 = vadd.f32 %v3300, %v3876
  %v3941 = vadd.f32 %v3301, %v3877
  %v3942 = vadd.f32 %v3302, %v3878
  %v3943 = vadd.f32 %v3303, %v3879
  %v3944 = vadd.f32 %v3304, %v3880
  %v3945 = vadd.f32 %v3305, %v3881
  %v3946 = vadd.f32 %v3306, %v3882
  %v3947 = vadd.f32 %v3307, %v3883
  %v3948 = vadd.f32 %v3308, %v3884
  %v3949 = vadd.f32 %v3309, %v3885
  %v3950 = vadd.f32 %v3310, %v3886
  %v3951 = vadd.f32 %v3311, %v3887
  %v3952 = vadd.f32 %v3312, %v3888
  %v3953 = vadd.f32 %v3313, %v3889
  %v3954 = vadd.f32 %v3314, %v3890
  %v3955 = vadd.f32 %v3315, %v3891
  %v3956 = vadd.f32 %v3316, %v3892
  %v3957 = vadd.f32 %v3317, %v3893
  %v3958 = vadd.f32 %v3318, %v3894
  %v3959 = vadd.f32 %v3319, %v3895
  %v3960 = vadd.f32 %v3320, %v3896
  %v3961 = vadd.f32 %v3321, %v3897
  %v3962 = vadd.f32 %v3322, %v3898
  %v3963 = vadd.f32 %v3323, %v3899
  %v3964 = vadd.f32 %v3324, %v3900
  %v3965 = vadd.f32 %v3325, %v3901
  %v3966 = vadd.f32 %v3326, %v3902
  %v3967 = vadd.f32 %v3327, %v3903
  %v3968 = vadd.f32 %v3328, %v3904
  %v3969 = vadd.f32 %v3329, %v3905
  %v3970 = vadd.f32 %v3330, %v3906
  %v3971 = vadd.f32 %v3331, %v3907
  %v3972 = vadd.f32 %v3332, %v3908
  %v3973 = vadd.f32 %v3333, %v3909
  %v3974 = vadd.f32 %v3334, %v3910
  %v3975 = vadd.f32 %v3335, %v3911
  %v3976 = vadd.f32 %v3336, %v3912
  %v3977 = vadd.f32 %v3337, %v3913
  %v3978 = vadd.f32 %v3338, %v3914
  %v3979 = vadd.f32 %v3339, %v3915
  %v3980 = vadd.f32 %v3340, %v3916
  %v3981 = vadd.f32 %v3341, %v3917
  %v3982 = vadd.f32 %v3342, %v3918
  %v3983 = vadd.f32 %v3343, %v3919
  %v3984 = vadd.f32 %v3344, %v3920
  %v3985 = vadd.f32 %v3345, %v3921
  %v3986 = vadd.f32 %v3346, %v3922
  %v3987 = vadd.f32 %v3347, %v3923
  %v3988 = vadd.f32 %v3348, %v3924
  %v3989 = vadd.f32 %v3349, %v3925
  %v3990 = vadd.f32 %v3350, %v3926
  %v3991 = vadd.f32 %v3351, %v3927
  %v3992 = vadd.f32 %v3352, %v3928
  %v3993 = vadd.f32 %v3353, %v3929
  %v3994 = vadd.f32 %v3354, %v3930
  %v3995 = vadd.f32 %v3355, %v3931
  %v3996 = vadd.f32 %v3356, %v3932
  %v3997 = vadd.f32 %v3357, %v3933
  %v3998 = vadd.f32 %v3358, %v3934
  %v3999 = vadd.f32 %v3359, %v3935
  %4000 = vset.pattern.permute.xlu0 6
  %4001 = vperm.xlu0 %4000, %v14
  %v4002 = vpop.permute.xlu0 %4001
  %4003 = vset.pattern.permute.xlu0 6
  %4004 = vperm.xlu0 %4003, %v15
  %v4005 = vpop.permute.xlu0 %4004
  %4006 = vset.pattern.permute.xlu0 6
  %4007 = vperm.xlu0 %4006, %v16
  %v4008 = vpop.permute.xlu0 %4007
  %4009 = vset.pattern.permute.xlu0 6
  %4010 = vperm.xlu0 %4009, %v17
  %v4011 = vpop.permute.xlu0 %4010
  %4012 = vset.pattern.permute.xlu0 6
  %4013 = vperm.xlu0 %4012, %v18
  %v4014 = vpop.permute.xlu0 %4013
  %4015 = vset.pattern.permute.xlu0 6
  %4016 = vperm.xlu0 %4015, %v19
  %v4017 = vpop.permute.xlu0 %4016
  %4018 = vset.pattern.permute.xlu0 6
  %4019 = vperm.xlu0 %4018, %v20
  %v4020 = vpop.permute.xlu0 %4019
  %4021 = vset.pattern.permute.xlu0 6
  %4022 = vperm.xlu0 %4021, %v21
  %v4023 = vpop.permute.xlu0 %4022
  %4024 = vset.pattern.permute.xlu0 6
  %4025 = vperm.xlu0 %4024, %v22
  %v4026 = vpop.permute.xlu0 %4025
  %4027 = vset.pattern.permute.xlu0 6
  %4028 = vperm.xlu0 %4027, %v23
  %v4029 = vpop.permute.xlu0 %4028
  %4030 = vset.pattern.permute.xlu0 6
  %4031 = vperm.xlu0 %4030, %v24
  %v4032 = vpop.permute.xlu0 %4031
  %4033 = vset.pattern.permute.xlu0 6
  %4034 = vperm.xlu0 %4033, %v25
  %v4035 = vpop.permute.xlu0 %4034
  %4036 = vset.pattern.permute.xlu0 6
  %4037 = vperm.xlu0 %4036, %v26
  %v4038 = vpop.permute.xlu0 %4037
  %4039 = vset.pattern.permute.xlu0 6
  %4040 = vperm.xlu0 %4039, %v27
  %v4041 = vpop.permute.xlu0 %4040
  %4042 = vset.pattern.permute.xlu0 6
  %4043 = vperm.xlu0 %4042, %v28
  %v4044 = vpop.permute.xlu0 %4043
  %4045 = vset.pattern.permute.xlu0 6
  %4046 = vperm.xlu0 %4045, %v29
  %v4047 = vpop.permute.xlu0 %4046
  %4048 = vset.pattern.permute.xlu0 6
  %4049 = vperm.xlu0 %4048, %v30
  %v4050 = vpop.permute.xlu0 %4049
  %4051 = vset.pattern.permute.xlu0 6
  %4052 = vperm.xlu0 %4051, %v31
  %v4053 = vpop.permute.xlu0 %4052
  %4054 = vset.pattern.permute.xlu0 6
  %4055 = vperm.xlu0 %4054, %v32
  %v4056 = vpop.permute.xlu0 %4055
  %4057 = vset.pattern.permute.xlu0 6
  %4058 = vperm.xlu0 %4057, %v33
  %v4059 = vpop.permute.xlu0 %4058
  %4060 = vset.pattern.permute.xlu0 6
  %4061 = vperm.xlu0 %4060, %v34
  %v4062 = vpop.permute.xlu0 %4061
  %4063 = vset.pattern.permute.xlu0 6
  %4064 = vperm.xlu0 %4063, %v35
  %v4065 = vpop.permute.xlu0 %4064
  %4066 = vset.pattern.permute.xlu0 6
  %4067 = vperm.xlu0 %4066, %v36
  %v4068 = vpop.permute.xlu0 %4067
  %4069 = vset.pattern.permute.xlu0 6
  %4070 = vperm.xlu0 %4069, %v37
  %v4071 = vpop.permute.xlu0 %4070
  %4072 = vset.pattern.permute.xlu0 6
  %4073 = vperm.xlu0 %4072, %v38
  %v4074 = vpop.permute.xlu0 %4073
  %4075 = vset.pattern.permute.xlu0 6
  %4076 = vperm.xlu0 %4075, %v39
  %v4077 = vpop.permute.xlu0 %4076
  %4078 = vset.pattern.permute.xlu0 6
  %4079 = vperm.xlu0 %4078, %v40
  %v4080 = vpop.permute.xlu0 %4079
  %4081 = vset.pattern.permute.xlu0 6
  %4082 = vperm.xlu0 %4081, %v41
  %v4083 = vpop.permute.xlu0 %4082
  %4084 = vset.pattern.permute.xlu0 6
  %4085 = vperm.xlu0 %4084, %v42
  %v4086 = vpop.permute.xlu0 %4085
  %4087 = vset.pattern.permute.xlu0 6
  %4088 = vperm.xlu0 %4087, %v43
  %v4089 = vpop.permute.xlu0 %4088
  %4090 = vset.pattern.permute.xlu0 6
  %4091 = vperm.xlu0 %4090, %v44
  %v4092 = vpop.permute.xlu0 %4091
  %4093 = vset.pattern.permute.xlu0 6
  %4094 = vperm.xlu0 %4093, %v45
  %v4095 = vpop.permute.xlu0 %4094
  %4096 = vset.pattern.permute.xlu0 6
  %4097 = vperm.xlu0 %4096, %v46
  %v4098 = vpop.permute.xlu0 %4097
  %4099 = vset.pattern.permute.xlu0 6
  %4100 = vperm.xlu0 %4099, %v47
  %v4101 = vpop.permute.xlu0 %4100
  %4102 = vset.pattern.permute.xlu0 6
  %4103 = vperm.xlu0 %4102, %v48
  %v4104 = vpop.permute.xlu0 %4103
  %4105 = vset.pattern.permute.xlu0 6
  %4106 = vperm.xlu0 %4105, %v49
  %v4107 = vpop.permute.xlu0 %4106
  %4108 = vset.pattern.permute.xlu0 6
  %4109 = vperm.xlu0 %4108, %v50
  %v4110 = vpop.permute.xlu0 %4109
  %4111 = vset.pattern.permute.xlu0 6
  %4112 = vperm.xlu0 %4111, %v51
  %v4113 = vpop.permute.xlu0 %4112
  %4114 = vset.pattern.permute.xlu0 6
  %4115 = vperm.xlu0 %4114, %v52
  %v4116 = vpop.permute.xlu0 %4115
  %4117 = vset.pattern.permute.xlu0 6
  %4118 = vperm.xlu0 %4117, %v53
  %v4119 = vpop.permute.xlu0 %4118
  %4120 = vset.pattern.permute.xlu0 6
  %4121 = vperm.xlu0 %4120, %v54
  %v4122 = vpop.permute.xlu0 %4121
  %4123 = vset.pattern.permute.xlu0 6
  %4124 = vperm.xlu0 %4123, %v55
  %v4125 = vpop.permute.xlu0 %4124
  %4126 = vset.pattern.permute.xlu0 6
  %4127 = vperm.xlu0 %4126, %v56
  %v4128 = vpop.permute.xlu0 %4127
  %4129 = vset.pattern.permute.xlu0 6
  %4130 = vperm.xlu0 %4129, %v57
  %v4131 = vpop.permute.xlu0 %4130
  %4132 = vset.pattern.permute.xlu0 6
  %4133 = vperm.xlu0 %4132, %v58
  %v4134 = vpop.permute.xlu0 %4133
  %4135 = vset.pattern.permute.xlu0 6
  %4136 = vperm.xlu0 %4135, %v59
  %v4137 = vpop.permute.xlu0 %4136
  %4138 = vset.pattern.permute.xlu0 6
  %4139 = vperm.xlu0 %4138, %v60
  %v4140 = vpop.permute.xlu0 %4139
  %4141 = vset.pattern.permute.xlu0 6
  %4142 = vperm.xlu0 %4141, %v61
  %v4143 = vpop.permute.xlu0 %4142
  %4144 = vset.pattern.permute.xlu0 6
  %4145 = vperm.xlu0 %4144, %v62
  %v4146 = vpop.permute.xlu0 %4145
  %4147 = vset.pattern.permute.xlu0 6
  %4148 = vperm.xlu0 %4147, %v63
  %v4149 = vpop.permute.xlu0 %4148
  %4150 = vset.pattern.permute.xlu0 6
  %4151 = vperm.xlu0 %4150, %v64
  %v4152 = vpop.permute.xlu0 %4151
  %4153 = vset.pattern.permute.xlu0 6
  %4154 = vperm.xlu0 %4153, %v65
  %v4155 = vpop.permute.xlu0 %4154
  %4156 = vset.pattern.permute.xlu0 6
  %4157 = vperm.xlu0 %4156, %v66
  %v4158 = vpop.permute.xlu0 %4157
  %4159 = vset.pattern.permute.xlu0 6
  %4160 = vperm.xlu0 %4159, %v67
  %v4161 = vpop.permute.xlu0 %4160
  %4162 = vset.pattern.permute.xlu0 6
  %4163 = vperm.xlu0 %4162, %v68
  %v4164 = vpop.permute.xlu0 %4163
  %4165 = vset.pattern.permute.xlu0 6
  %4166 = vperm.xlu0 %4165, %v69
  %v4167 = vpop.permute.xlu0 %4166
  %4168 = vset.pattern.permute.xlu0 6
  %4169 = vperm.xlu0 %4168, %v70
  %v4170 = vpop.permute.xlu0 %4169
  %4171 = vset.pattern.permute.xlu0 6
  %4172 = vperm.xlu0 %4171, %v71
  %v4173 = vpop.permute.xlu0 %4172
  %4174 = vset.pattern.permute.xlu0 6
  %4175 = vperm.xlu0 %4174, %v72
  %v4176 = vpop.permute.xlu0 %4175
  %4177 = vset.pattern.permute.xlu0 6
  %4178 = vperm.xlu0 %4177, %v73
  %v4179 = vpop.permute.xlu0 %4178
  %4180 = vset.pattern.permute.xlu0 6
  %4181 = vperm.xlu0 %4180, %v74
  %v4182 = vpop.permute.xlu0 %4181
  %4183 = vset.pattern.permute.xlu0 6
  %4184 = vperm.xlu0 %4183, %v75
  %v4185 = vpop.permute.xlu0 %4184
  %4186 = vset.pattern.permute.xlu0 6
  %4187 = vperm.xlu0 %4186, %v76
  %v4188 = vpop.permute.xlu0 %4187
  %4189 = vset.pattern.permute.xlu0 6
  %4190 = vperm.xlu0 %4189, %v77
  %v4191 = vpop.permute.xlu0 %4190
  %vm4192 = vcmp.eq.s32.totalorder %v4002, %v159
  %vm4193 = vcmp.eq.s32.totalorder %v4005, %v159
  %vm4194 = vcmp.eq.s32.totalorder %v4008, %v159
  %vm4195 = vcmp.eq.s32.totalorder %v4011, %v159
  %vm4196 = vcmp.eq.s32.totalorder %v4014, %v159
  %vm4197 = vcmp.eq.s32.totalorder %v4017, %v159
  %vm4198 = vcmp.eq.s32.totalorder %v4020, %v159
  %vm4199 = vcmp.eq.s32.totalorder %v4023, %v159
  %vm4200 = vcmp.eq.s32.totalorder %v4026, %v159
  %vm4201 = vcmp.eq.s32.totalorder %v4029, %v159
  %vm4202 = vcmp.eq.s32.totalorder %v4032, %v159
  %vm4203 = vcmp.eq.s32.totalorder %v4035, %v159
  %vm4204 = vcmp.eq.s32.totalorder %v4038, %v159
  %vm4205 = vcmp.eq.s32.totalorder %v4041, %v159
  %vm4206 = vcmp.eq.s32.totalorder %v4044, %v159
  %vm4207 = vcmp.eq.s32.totalorder %v4047, %v159
  %vm4208 = vcmp.eq.s32.totalorder %v4050, %v159
  %vm4209 = vcmp.eq.s32.totalorder %v4053, %v159
  %vm4210 = vcmp.eq.s32.totalorder %v4056, %v159
  %vm4211 = vcmp.eq.s32.totalorder %v4059, %v159
  %vm4212 = vcmp.eq.s32.totalorder %v4062, %v159
  %vm4213 = vcmp.eq.s32.totalorder %v4065, %v159
  %vm4214 = vcmp.eq.s32.totalorder %v4068, %v159
  %vm4215 = vcmp.eq.s32.totalorder %v4071, %v159
  %vm4216 = vcmp.eq.s32.totalorder %v4074, %v159
  %vm4217 = vcmp.eq.s32.totalorder %v4077, %v159
  %vm4218 = vcmp.eq.s32.totalorder %v4080, %v159
  %vm4219 = vcmp.eq.s32.totalorder %v4083, %v159
  %vm4220 = vcmp.eq.s32.totalorder %v4086, %v159
  %vm4221 = vcmp.eq.s32.totalorder %v4089, %v159
  %vm4222 = vcmp.eq.s32.totalorder %v4092, %v159
  %vm4223 = vcmp.eq.s32.totalorder %v4095, %v159
  %vm4224 = vcmp.eq.s32.totalorder %v4098, %v159
  %vm4225 = vcmp.eq.s32.totalorder %v4101, %v159
  %vm4226 = vcmp.eq.s32.totalorder %v4104, %v159
  %vm4227 = vcmp.eq.s32.totalorder %v4107, %v159
  %vm4228 = vcmp.eq.s32.totalorder %v4110, %v159
  %vm4229 = vcmp.eq.s32.totalorder %v4113, %v159
  %vm4230 = vcmp.eq.s32.totalorder %v4116, %v159
  %vm4231 = vcmp.eq.s32.totalorder %v4119, %v159
  %vm4232 = vcmp.eq.s32.totalorder %v4122, %v159
  %vm4233 = vcmp.eq.s32.totalorder %v4125, %v159
  %vm4234 = vcmp.eq.s32.totalorder %v4128, %v159
  %vm4235 = vcmp.eq.s32.totalorder %v4131, %v159
  %vm4236 = vcmp.eq.s32.totalorder %v4134, %v159
  %vm4237 = vcmp.eq.s32.totalorder %v4137, %v159
  %vm4238 = vcmp.eq.s32.totalorder %v4140, %v159
  %vm4239 = vcmp.eq.s32.totalorder %v4143, %v159
  %vm4240 = vcmp.eq.s32.totalorder %v4146, %v159
  %vm4241 = vcmp.eq.s32.totalorder %v4149, %v159
  %vm4242 = vcmp.eq.s32.totalorder %v4152, %v159
  %vm4243 = vcmp.eq.s32.totalorder %v4155, %v159
  %vm4244 = vcmp.eq.s32.totalorder %v4158, %v159
  %vm4245 = vcmp.eq.s32.totalorder %v4161, %v159
  %vm4246 = vcmp.eq.s32.totalorder %v4164, %v159
  %vm4247 = vcmp.eq.s32.totalorder %v4167, %v159
  %vm4248 = vcmp.eq.s32.totalorder %v4170, %v159
  %vm4249 = vcmp.eq.s32.totalorder %v4173, %v159
  %vm4250 = vcmp.eq.s32.totalorder %v4176, %v159
  %vm4251 = vcmp.eq.s32.totalorder %v4179, %v159
  %vm4252 = vcmp.eq.s32.totalorder %v4182, %v159
  %vm4253 = vcmp.eq.s32.totalorder %v4185, %v159
  %vm4254 = vcmp.eq.s32.totalorder %v4188, %v159
  %vm4255 = vcmp.eq.s32.totalorder %v4191, %v159
  %4256 = vset.pattern.permute.xlu0 6
  %4257 = vperm.xlu0 %4256, %v78
  %v4258 = vpop.permute.xlu0 %4257
  %4260 = vset.pattern.permute.xlu0 6
  %4261 = vperm.xlu0 %4260, %v79
  %v4262 = vpop.permute.xlu0 %4261
  %4264 = vset.pattern.permute.xlu0 6
  %4265 = vperm.xlu0 %4264, %v80
  %v4266 = vpop.permute.xlu0 %4265
  %4268 = vset.pattern.permute.xlu0 6
  %4269 = vperm.xlu0 %4268, %v81
  %v4270 = vpop.permute.xlu0 %4269
  %4272 = vset.pattern.permute.xlu0 6
  %4273 = vperm.xlu0 %4272, %v82
  %v4274 = vpop.permute.xlu0 %4273
  %4276 = vset.pattern.permute.xlu0 6
  %4277 = vperm.xlu0 %4276, %v83
  %v4278 = vpop.permute.xlu0 %4277
  %4280 = vset.pattern.permute.xlu0 6
  %4281 = vperm.xlu0 %4280, %v84
  %v4282 = vpop.permute.xlu0 %4281
  %4284 = vset.pattern.permute.xlu0 6
  %4285 = vperm.xlu0 %4284, %v85
  %v4286 = vpop.permute.xlu0 %4285
  %4288 = vset.pattern.permute.xlu0 6
  %4289 = vperm.xlu0 %4288, %v86
  %v4290 = vpop.permute.xlu0 %4289
  %4292 = vset.pattern.permute.xlu0 6
  %4293 = vperm.xlu0 %4292, %v87
  %v4294 = vpop.permute.xlu0 %4293
  %4296 = vset.pattern.permute.xlu0 6
  %4297 = vperm.xlu0 %4296, %v88
  %v4298 = vpop.permute.xlu0 %4297
  %4300 = vset.pattern.permute.xlu0 6
  %4301 = vperm.xlu0 %4300, %v89
  %v4302 = vpop.permute.xlu0 %4301
  %4304 = vset.pattern.permute.xlu0 6
  %4305 = vperm.xlu0 %4304, %v90
  %v4306 = vpop.permute.xlu0 %4305
  %4308 = vset.pattern.permute.xlu0 6
  %4309 = vperm.xlu0 %4308, %v91
  %v4310 = vpop.permute.xlu0 %4309
  %4312 = vset.pattern.permute.xlu0 6
  %4313 = vperm.xlu0 %4312, %v92
  %v4314 = vpop.permute.xlu0 %4313
  %4316 = vset.pattern.permute.xlu0 6
  %4317 = vperm.xlu0 %4316, %v93
  %v4318 = vpop.permute.xlu0 %4317
  %4320 = vset.pattern.permute.xlu0 6
  %4321 = vperm.xlu0 %4320, %v94
  %v4322 = vpop.permute.xlu0 %4321
  %4324 = vset.pattern.permute.xlu0 6
  %4325 = vperm.xlu0 %4324, %v95
  %v4326 = vpop.permute.xlu0 %4325
  %4328 = vset.pattern.permute.xlu0 6
  %4329 = vperm.xlu0 %4328, %v96
  %v4330 = vpop.permute.xlu0 %4329
  %4332 = vset.pattern.permute.xlu0 6
  %4333 = vperm.xlu0 %4332, %v97
  %v4334 = vpop.permute.xlu0 %4333
  %4336 = vset.pattern.permute.xlu0 6
  %4337 = vperm.xlu0 %4336, %v98
  %v4338 = vpop.permute.xlu0 %4337
  %4340 = vset.pattern.permute.xlu0 6
  %4341 = vperm.xlu0 %4340, %v99
  %v4342 = vpop.permute.xlu0 %4341
  %4344 = vset.pattern.permute.xlu0 6
  %4345 = vperm.xlu0 %4344, %v100
  %v4346 = vpop.permute.xlu0 %4345
  %4348 = vset.pattern.permute.xlu0 6
  %4349 = vperm.xlu0 %4348, %v101
  %v4350 = vpop.permute.xlu0 %4349
  %4352 = vset.pattern.permute.xlu0 6
  %4353 = vperm.xlu0 %4352, %v102
  %v4354 = vpop.permute.xlu0 %4353
  %4356 = vset.pattern.permute.xlu0 6
  %4357 = vperm.xlu0 %4356, %v103
  %v4358 = vpop.permute.xlu0 %4357
  %4360 = vset.pattern.permute.xlu0 6
  %4361 = vperm.xlu0 %4360, %v104
  %v4362 = vpop.permute.xlu0 %4361
  %4364 = vset.pattern.permute.xlu0 6
  %4365 = vperm.xlu0 %4364, %v105
  %v4366 = vpop.permute.xlu0 %4365
  %4368 = vset.pattern.permute.xlu0 6
  %4369 = vperm.xlu0 %4368, %v106
  %v4370 = vpop.permute.xlu0 %4369
  %4372 = vset.pattern.permute.xlu0 6
  %4373 = vperm.xlu0 %4372, %v107
  %v4374 = vpop.permute.xlu0 %4373
  %4376 = vset.pattern.permute.xlu0 6
  %4377 = vperm.xlu0 %4376, %v108
  %v4378 = vpop.permute.xlu0 %4377
  %4380 = vset.pattern.permute.xlu0 6
  %4381 = vperm.xlu0 %4380, %v109
  %v4382 = vpop.permute.xlu0 %4381
  %4384 = vset.pattern.permute.xlu0 6
  %4385 = vperm.xlu0 %4384, %v110
  %v4386 = vpop.permute.xlu0 %4385
  %4388 = vset.pattern.permute.xlu0 6
  %4389 = vperm.xlu0 %4388, %v111
  %v4390 = vpop.permute.xlu0 %4389
  %4392 = vset.pattern.permute.xlu0 6
  %4393 = vperm.xlu0 %4392, %v112
  %v4394 = vpop.permute.xlu0 %4393
  %4396 = vset.pattern.permute.xlu0 6
  %4397 = vperm.xlu0 %4396, %v113
  %v4398 = vpop.permute.xlu0 %4397
  %4400 = vset.pattern.permute.xlu0 6
  %4401 = vperm.xlu0 %4400, %v114
  %v4402 = vpop.permute.xlu0 %4401
  %4404 = vset.pattern.permute.xlu0 6
  %4405 = vperm.xlu0 %4404, %v115
  %v4406 = vpop.permute.xlu0 %4405
  %4408 = vset.pattern.permute.xlu0 6
  %4409 = vperm.xlu0 %4408, %v116
  %v4410 = vpop.permute.xlu0 %4409
  %4412 = vset.pattern.permute.xlu0 6
  %4413 = vperm.xlu0 %4412, %v117
  %v4414 = vpop.permute.xlu0 %4413
  %4416 = vset.pattern.permute.xlu0 6
  %4417 = vperm.xlu0 %4416, %v118
  %v4418 = vpop.permute.xlu0 %4417
  %4420 = vset.pattern.permute.xlu0 6
  %4421 = vperm.xlu0 %4420, %v119
  %v4422 = vpop.permute.xlu0 %4421
  %4424 = vset.pattern.permute.xlu0 6
  %4425 = vperm.xlu0 %4424, %v120
  %v4426 = vpop.permute.xlu0 %4425
  %4428 = vset.pattern.permute.xlu0 6
  %4429 = vperm.xlu0 %4428, %v121
  %v4430 = vpop.permute.xlu0 %4429
  %4432 = vset.pattern.permute.xlu0 6
  %4433 = vperm.xlu0 %4432, %v122
  %v4434 = vpop.permute.xlu0 %4433
  %4436 = vset.pattern.permute.xlu0 6
  %4437 = vperm.xlu0 %4436, %v123
  %v4438 = vpop.permute.xlu0 %4437
  %4440 = vset.pattern.permute.xlu0 6
  %4441 = vperm.xlu0 %4440, %v124
  %v4442 = vpop.permute.xlu0 %4441
  %4444 = vset.pattern.permute.xlu0 6
  %4445 = vperm.xlu0 %4444, %v125
  %v4446 = vpop.permute.xlu0 %4445
  %4448 = vset.pattern.permute.xlu0 6
  %4449 = vperm.xlu0 %4448, %v126
  %v4450 = vpop.permute.xlu0 %4449
  %4452 = vset.pattern.permute.xlu0 6
  %4453 = vperm.xlu0 %4452, %v127
  %v4454 = vpop.permute.xlu0 %4453
  %4456 = vset.pattern.permute.xlu0 6
  %4457 = vperm.xlu0 %4456, %v128
  %v4458 = vpop.permute.xlu0 %4457
  %4460 = vset.pattern.permute.xlu0 6
  %4461 = vperm.xlu0 %4460, %v129
  %v4462 = vpop.permute.xlu0 %4461
  %4464 = vset.pattern.permute.xlu0 6
  %4465 = vperm.xlu0 %4464, %v130
  %v4466 = vpop.permute.xlu0 %4465
  %4468 = vset.pattern.permute.xlu0 6
  %4469 = vperm.xlu0 %4468, %v131
  %v4470 = vpop.permute.xlu0 %4469
  %4472 = vset.pattern.permute.xlu0 6
  %4473 = vperm.xlu0 %4472, %v132
  %v4474 = vpop.permute.xlu0 %4473
  %4476 = vset.pattern.permute.xlu0 6
  %4477 = vperm.xlu0 %4476, %v133
  %v4478 = vpop.permute.xlu0 %4477
  %4480 = vset.pattern.permute.xlu0 6
  %4481 = vperm.xlu0 %4480, %v134
  %v4482 = vpop.permute.xlu0 %4481
  %4484 = vset.pattern.permute.xlu0 6
  %4485 = vperm.xlu0 %4484, %v135
  %v4486 = vpop.permute.xlu0 %4485
  %4488 = vset.pattern.permute.xlu0 6
  %4489 = vperm.xlu0 %4488, %v136
  %v4490 = vpop.permute.xlu0 %4489
  %4492 = vset.pattern.permute.xlu0 6
  %4493 = vperm.xlu0 %4492, %v137
  %v4494 = vpop.permute.xlu0 %4493
  %4496 = vset.pattern.permute.xlu0 6
  %4497 = vperm.xlu0 %4496, %v138
  %v4498 = vpop.permute.xlu0 %4497
  %4500 = vset.pattern.permute.xlu0 6
  %4501 = vperm.xlu0 %4500, %v139
  %v4502 = vpop.permute.xlu0 %4501
  %4504 = vset.pattern.permute.xlu0 6
  %4505 = vperm.xlu0 %4504, %v140
  %v4506 = vpop.permute.xlu0 %4505
  %4508 = vset.pattern.permute.xlu0 6
  %4509 = vperm.xlu0 %4508, %v141
  %v4510 = vpop.permute.xlu0 %4509
  %v4512 = vsel %vm4192, %v4258, 0.0
  %v4513 = vsel %vm4193, %v4262, 0.0
  %v4514 = vsel %vm4194, %v4266, 0.0
  %v4515 = vsel %vm4195, %v4270, 0.0
  %v4516 = vsel %vm4196, %v4274, 0.0
  %v4517 = vsel %vm4197, %v4278, 0.0
  %v4518 = vsel %vm4198, %v4282, 0.0
  %v4519 = vsel %vm4199, %v4286, 0.0
  %v4520 = vsel %vm4200, %v4290, 0.0
  %v4521 = vsel %vm4201, %v4294, 0.0
  %v4522 = vsel %vm4202, %v4298, 0.0
  %v4523 = vsel %vm4203, %v4302, 0.0
  %v4524 = vsel %vm4204, %v4306, 0.0
  %v4525 = vsel %vm4205, %v4310, 0.0
  %v4526 = vsel %vm4206, %v4314, 0.0
  %v4527 = vsel %vm4207, %v4318, 0.0
  %v4528 = vsel %vm4208, %v4322, 0.0
  %v4529 = vsel %vm4209, %v4326, 0.0
  %v4530 = vsel %vm4210, %v4330, 0.0
  %v4531 = vsel %vm4211, %v4334, 0.0
  %v4532 = vsel %vm4212, %v4338, 0.0
  %v4533 = vsel %vm4213, %v4342, 0.0
  %v4534 = vsel %vm4214, %v4346, 0.0
  %v4535 = vsel %vm4215, %v4350, 0.0
  %v4536 = vsel %vm4216, %v4354, 0.0
  %v4537 = vsel %vm4217, %v4358, 0.0
  %v4538 = vsel %vm4218, %v4362, 0.0
  %v4539 = vsel %vm4219, %v4366, 0.0
  %v4540 = vsel %vm4220, %v4370, 0.0
  %v4541 = vsel %vm4221, %v4374, 0.0
  %v4542 = vsel %vm4222, %v4378, 0.0
  %v4543 = vsel %vm4223, %v4382, 0.0
  %v4544 = vsel %vm4224, %v4386, 0.0
  %v4545 = vsel %vm4225, %v4390, 0.0
  %v4546 = vsel %vm4226, %v4394, 0.0
  %v4547 = vsel %vm4227, %v4398, 0.0
  %v4548 = vsel %vm4228, %v4402, 0.0
  %v4549 = vsel %vm4229, %v4406, 0.0
  %v4550 = vsel %vm4230, %v4410, 0.0
  %v4551 = vsel %vm4231, %v4414, 0.0
  %v4552 = vsel %vm4232, %v4418, 0.0
  %v4553 = vsel %vm4233, %v4422, 0.0
  %v4554 = vsel %vm4234, %v4426, 0.0
  %v4555 = vsel %vm4235, %v4430, 0.0
  %v4556 = vsel %vm4236, %v4434, 0.0
  %v4557 = vsel %vm4237, %v4438, 0.0
  %v4558 = vsel %vm4238, %v4442, 0.0
  %v4559 = vsel %vm4239, %v4446, 0.0
  %v4560 = vsel %vm4240, %v4450, 0.0
  %v4561 = vsel %vm4241, %v4454, 0.0
  %v4562 = vsel %vm4242, %v4458, 0.0
  %v4563 = vsel %vm4243, %v4462, 0.0
  %v4564 = vsel %vm4244, %v4466, 0.0
  %v4565 = vsel %vm4245, %v4470, 0.0
  %v4566 = vsel %vm4246, %v4474, 0.0
  %v4567 = vsel %vm4247, %v4478, 0.0
  %v4568 = vsel %vm4248, %v4482, 0.0
  %v4569 = vsel %vm4249, %v4486, 0.0
  %v4570 = vsel %vm4250, %v4490, 0.0
  %v4571 = vsel %vm4251, %v4494, 0.0
  %v4572 = vsel %vm4252, %v4498, 0.0
  %v4573 = vsel %vm4253, %v4502, 0.0
  %v4574 = vsel %vm4254, %v4506, 0.0
  %v4575 = vsel %vm4255, %v4510, 0.0
  %v4576 = vadd.f32 %v3936, %v4512
  %v4577 = vadd.f32 %v3937, %v4513
  %v4578 = vadd.f32 %v3938, %v4514
  %v4579 = vadd.f32 %v3939, %v4515
  %v4580 = vadd.f32 %v3940, %v4516
  %v4581 = vadd.f32 %v3941, %v4517
  %v4582 = vadd.f32 %v3942, %v4518
  %v4583 = vadd.f32 %v3943, %v4519
  %v4584 = vadd.f32 %v3944, %v4520
  %v4585 = vadd.f32 %v3945, %v4521
  %v4586 = vadd.f32 %v3946, %v4522
  %v4587 = vadd.f32 %v3947, %v4523
  %v4588 = vadd.f32 %v3948, %v4524
  %v4589 = vadd.f32 %v3949, %v4525
  %v4590 = vadd.f32 %v3950, %v4526
  %v4591 = vadd.f32 %v3951, %v4527
  %v4592 = vadd.f32 %v3952, %v4528
  %v4593 = vadd.f32 %v3953, %v4529
  %v4594 = vadd.f32 %v3954, %v4530
  %v4595 = vadd.f32 %v3955, %v4531
  %v4596 = vadd.f32 %v3956, %v4532
  %v4597 = vadd.f32 %v3957, %v4533
  %v4598 = vadd.f32 %v3958, %v4534
  %v4599 = vadd.f32 %v3959, %v4535
  %v4600 = vadd.f32 %v3960, %v4536
  %v4601 = vadd.f32 %v3961, %v4537
  %v4602 = vadd.f32 %v3962, %v4538
  %v4603 = vadd.f32 %v3963, %v4539
  %v4604 = vadd.f32 %v3964, %v4540
  %v4605 = vadd.f32 %v3965, %v4541
  %v4606 = vadd.f32 %v3966, %v4542
  %v4607 = vadd.f32 %v3967, %v4543
  %v4608 = vadd.f32 %v3968, %v4544
  %v4609 = vadd.f32 %v3969, %v4545
  %v4610 = vadd.f32 %v3970, %v4546
  %v4611 = vadd.f32 %v3971, %v4547
  %v4612 = vadd.f32 %v3972, %v4548
  %v4613 = vadd.f32 %v3973, %v4549
  %v4614 = vadd.f32 %v3974, %v4550
  %v4615 = vadd.f32 %v3975, %v4551
  %v4616 = vadd.f32 %v3976, %v4552
  %v4617 = vadd.f32 %v3977, %v4553
  %v4618 = vadd.f32 %v3978, %v4554
  %v4619 = vadd.f32 %v3979, %v4555
  %v4620 = vadd.f32 %v3980, %v4556
  %v4621 = vadd.f32 %v3981, %v4557
  %v4622 = vadd.f32 %v3982, %v4558
  %v4623 = vadd.f32 %v3983, %v4559
  %v4624 = vadd.f32 %v3984, %v4560
  %v4625 = vadd.f32 %v3985, %v4561
  %v4626 = vadd.f32 %v3986, %v4562
  %v4627 = vadd.f32 %v3987, %v4563
  %v4628 = vadd.f32 %v3988, %v4564
  %v4629 = vadd.f32 %v3989, %v4565
  %v4630 = vadd.f32 %v3990, %v4566
  %v4631 = vadd.f32 %v3991, %v4567
  %v4632 = vadd.f32 %v3992, %v4568
  %v4633 = vadd.f32 %v3993, %v4569
  %v4634 = vadd.f32 %v3994, %v4570
  %v4635 = vadd.f32 %v3995, %v4571
  %v4636 = vadd.f32 %v3996, %v4572
  %v4637 = vadd.f32 %v3997, %v4573
  %v4638 = vadd.f32 %v3998, %v4574
  %v4639 = vadd.f32 %v3999, %v4575
  %4640 = vset.pattern.permute.xlu0 7
  %4641 = vperm.xlu0 %4640, %v14
  %v4642 = vpop.permute.xlu0 %4641
  %4643 = vset.pattern.permute.xlu0 7
  %4644 = vperm.xlu0 %4643, %v15
  %v4645 = vpop.permute.xlu0 %4644
  %4646 = vset.pattern.permute.xlu0 7
  %4647 = vperm.xlu0 %4646, %v16
  %v4648 = vpop.permute.xlu0 %4647
  %4649 = vset.pattern.permute.xlu0 7
  %4650 = vperm.xlu0 %4649, %v17
  %v4651 = vpop.permute.xlu0 %4650
  %4652 = vset.pattern.permute.xlu0 7
  %4653 = vperm.xlu0 %4652, %v18
  %v4654 = vpop.permute.xlu0 %4653
  %4655 = vset.pattern.permute.xlu0 7
  %4656 = vperm.xlu0 %4655, %v19
  %v4657 = vpop.permute.xlu0 %4656
  %4658 = vset.pattern.permute.xlu0 7
  %4659 = vperm.xlu0 %4658, %v20
  %v4660 = vpop.permute.xlu0 %4659
  %4661 = vset.pattern.permute.xlu0 7
  %4662 = vperm.xlu0 %4661, %v21
  %v4663 = vpop.permute.xlu0 %4662
  %4664 = vset.pattern.permute.xlu0 7
  %4665 = vperm.xlu0 %4664, %v22
  %v4666 = vpop.permute.xlu0 %4665
  %4667 = vset.pattern.permute.xlu0 7
  %4668 = vperm.xlu0 %4667, %v23
  %v4669 = vpop.permute.xlu0 %4668
  %4670 = vset.pattern.permute.xlu0 7
  %4671 = vperm.xlu0 %4670, %v24
  %v4672 = vpop.permute.xlu0 %4671
  %4673 = vset.pattern.permute.xlu0 7
  %4674 = vperm.xlu0 %4673, %v25
  %v4675 = vpop.permute.xlu0 %4674
  %4676 = vset.pattern.permute.xlu0 7
  %4677 = vperm.xlu0 %4676, %v26
  %v4678 = vpop.permute.xlu0 %4677
  %4679 = vset.pattern.permute.xlu0 7
  %4680 = vperm.xlu0 %4679, %v27
  %v4681 = vpop.permute.xlu0 %4680
  %4682 = vset.pattern.permute.xlu0 7
  %4683 = vperm.xlu0 %4682, %v28
  %v4684 = vpop.permute.xlu0 %4683
  %4685 = vset.pattern.permute.xlu0 7
  %4686 = vperm.xlu0 %4685, %v29
  %v4687 = vpop.permute.xlu0 %4686
  %4688 = vset.pattern.permute.xlu0 7
  %4689 = vperm.xlu0 %4688, %v30
  %v4690 = vpop.permute.xlu0 %4689
  %4691 = vset.pattern.permute.xlu0 7
  %4692 = vperm.xlu0 %4691, %v31
  %v4693 = vpop.permute.xlu0 %4692
  %4694 = vset.pattern.permute.xlu0 7
  %4695 = vperm.xlu0 %4694, %v32
  %v4696 = vpop.permute.xlu0 %4695
  %4697 = vset.pattern.permute.xlu0 7
  %4698 = vperm.xlu0 %4697, %v33
  %v4699 = vpop.permute.xlu0 %4698
  %4700 = vset.pattern.permute.xlu0 7
  %4701 = vperm.xlu0 %4700, %v34
  %v4702 = vpop.permute.xlu0 %4701
  %4703 = vset.pattern.permute.xlu0 7
  %4704 = vperm.xlu0 %4703, %v35
  %v4705 = vpop.permute.xlu0 %4704
  %4706 = vset.pattern.permute.xlu0 7
  %4707 = vperm.xlu0 %4706, %v36
  %v4708 = vpop.permute.xlu0 %4707
  %4709 = vset.pattern.permute.xlu0 7
  %4710 = vperm.xlu0 %4709, %v37
  %v4711 = vpop.permute.xlu0 %4710
  %4712 = vset.pattern.permute.xlu0 7
  %4713 = vperm.xlu0 %4712, %v38
  %v4714 = vpop.permute.xlu0 %4713
  %4715 = vset.pattern.permute.xlu0 7
  %4716 = vperm.xlu0 %4715, %v39
  %v4717 = vpop.permute.xlu0 %4716
  %4718 = vset.pattern.permute.xlu0 7
  %4719 = vperm.xlu0 %4718, %v40
  %v4720 = vpop.permute.xlu0 %4719
  %4721 = vset.pattern.permute.xlu0 7
  %4722 = vperm.xlu0 %4721, %v41
  %v4723 = vpop.permute.xlu0 %4722
  %4724 = vset.pattern.permute.xlu0 7
  %4725 = vperm.xlu0 %4724, %v42
  %v4726 = vpop.permute.xlu0 %4725
  %4727 = vset.pattern.permute.xlu0 7
  %4728 = vperm.xlu0 %4727, %v43
  %v4729 = vpop.permute.xlu0 %4728
  %4730 = vset.pattern.permute.xlu0 7
  %4731 = vperm.xlu0 %4730, %v44
  %v4732 = vpop.permute.xlu0 %4731
  %4733 = vset.pattern.permute.xlu0 7
  %4734 = vperm.xlu0 %4733, %v45
  %v4735 = vpop.permute.xlu0 %4734
  %4736 = vset.pattern.permute.xlu0 7
  %4737 = vperm.xlu0 %4736, %v46
  %v4738 = vpop.permute.xlu0 %4737
  %4739 = vset.pattern.permute.xlu0 7
  %4740 = vperm.xlu0 %4739, %v47
  %v4741 = vpop.permute.xlu0 %4740
  %4742 = vset.pattern.permute.xlu0 7
  %4743 = vperm.xlu0 %4742, %v48
  %v4744 = vpop.permute.xlu0 %4743
  %4745 = vset.pattern.permute.xlu0 7
  %4746 = vperm.xlu0 %4745, %v49
  %v4747 = vpop.permute.xlu0 %4746
  %4748 = vset.pattern.permute.xlu0 7
  %4749 = vperm.xlu0 %4748, %v50
  %v4750 = vpop.permute.xlu0 %4749
  %4751 = vset.pattern.permute.xlu0 7
  %4752 = vperm.xlu0 %4751, %v51
  %v4753 = vpop.permute.xlu0 %4752
  %4754 = vset.pattern.permute.xlu0 7
  %4755 = vperm.xlu0 %4754, %v52
  %v4756 = vpop.permute.xlu0 %4755
  %4757 = vset.pattern.permute.xlu0 7
  %4758 = vperm.xlu0 %4757, %v53
  %v4759 = vpop.permute.xlu0 %4758
  %4760 = vset.pattern.permute.xlu0 7
  %4761 = vperm.xlu0 %4760, %v54
  %v4762 = vpop.permute.xlu0 %4761
  %4763 = vset.pattern.permute.xlu0 7
  %4764 = vperm.xlu0 %4763, %v55
  %v4765 = vpop.permute.xlu0 %4764
  %4766 = vset.pattern.permute.xlu0 7
  %4767 = vperm.xlu0 %4766, %v56
  %v4768 = vpop.permute.xlu0 %4767
  %4769 = vset.pattern.permute.xlu0 7
  %4770 = vperm.xlu0 %4769, %v57
  %v4771 = vpop.permute.xlu0 %4770
  %4772 = vset.pattern.permute.xlu0 7
  %4773 = vperm.xlu0 %4772, %v58
  %v4774 = vpop.permute.xlu0 %4773
  %4775 = vset.pattern.permute.xlu0 7
  %4776 = vperm.xlu0 %4775, %v59
  %v4777 = vpop.permute.xlu0 %4776
  %4778 = vset.pattern.permute.xlu0 7
  %4779 = vperm.xlu0 %4778, %v60
  %v4780 = vpop.permute.xlu0 %4779
  %4781 = vset.pattern.permute.xlu0 7
  %4782 = vperm.xlu0 %4781, %v61
  %v4783 = vpop.permute.xlu0 %4782
  %4784 = vset.pattern.permute.xlu0 7
  %4785 = vperm.xlu0 %4784, %v62
  %v4786 = vpop.permute.xlu0 %4785
  %4787 = vset.pattern.permute.xlu0 7
  %4788 = vperm.xlu0 %4787, %v63
  %v4789 = vpop.permute.xlu0 %4788
  %4790 = vset.pattern.permute.xlu0 7
  %4791 = vperm.xlu0 %4790, %v64
  %v4792 = vpop.permute.xlu0 %4791
  %4793 = vset.pattern.permute.xlu0 7
  %4794 = vperm.xlu0 %4793, %v65
  %v4795 = vpop.permute.xlu0 %4794
  %4796 = vset.pattern.permute.xlu0 7
  %4797 = vperm.xlu0 %4796, %v66
  %v4798 = vpop.permute.xlu0 %4797
  %4799 = vset.pattern.permute.xlu0 7
  %4800 = vperm.xlu0 %4799, %v67
  %v4801 = vpop.permute.xlu0 %4800
  %4802 = vset.pattern.permute.xlu0 7
  %4803 = vperm.xlu0 %4802, %v68
  %v4804 = vpop.permute.xlu0 %4803
  %4805 = vset.pattern.permute.xlu0 7
  %4806 = vperm.xlu0 %4805, %v69
  %v4807 = vpop.permute.xlu0 %4806
  %4808 = vset.pattern.permute.xlu0 7
  %4809 = vperm.xlu0 %4808, %v70
  %v4810 = vpop.permute.xlu0 %4809
  %4811 = vset.pattern.permute.xlu0 7
  %4812 = vperm.xlu0 %4811, %v71
  %v4813 = vpop.permute.xlu0 %4812
  %4814 = vset.pattern.permute.xlu0 7
  %4815 = vperm.xlu0 %4814, %v72
  %v4816 = vpop.permute.xlu0 %4815
  %4817 = vset.pattern.permute.xlu0 7
  %4818 = vperm.xlu0 %4817, %v73
  %v4819 = vpop.permute.xlu0 %4818
  %4820 = vset.pattern.permute.xlu0 7
  %4821 = vperm.xlu0 %4820, %v74
  %v4822 = vpop.permute.xlu0 %4821
  %4823 = vset.pattern.permute.xlu0 7
  %4824 = vperm.xlu0 %4823, %v75
  %v4825 = vpop.permute.xlu0 %4824
  %4826 = vset.pattern.permute.xlu0 7
  %4827 = vperm.xlu0 %4826, %v76
  %v4828 = vpop.permute.xlu0 %4827
  %4829 = vset.pattern.permute.xlu0 7
  %4830 = vperm.xlu0 %4829, %v77
  %v4831 = vpop.permute.xlu0 %4830
  %vm4832 = vcmp.eq.s32.totalorder %v4642, %v159
  %vm4833 = vcmp.eq.s32.totalorder %v4645, %v159
  %vm4834 = vcmp.eq.s32.totalorder %v4648, %v159
  %vm4835 = vcmp.eq.s32.totalorder %v4651, %v159
  %vm4836 = vcmp.eq.s32.totalorder %v4654, %v159
  %vm4837 = vcmp.eq.s32.totalorder %v4657, %v159
  %vm4838 = vcmp.eq.s32.totalorder %v4660, %v159
  %vm4839 = vcmp.eq.s32.totalorder %v4663, %v159
  %vm4840 = vcmp.eq.s32.totalorder %v4666, %v159
  %vm4841 = vcmp.eq.s32.totalorder %v4669, %v159
  %vm4842 = vcmp.eq.s32.totalorder %v4672, %v159
  %vm4843 = vcmp.eq.s32.totalorder %v4675, %v159
  %vm4844 = vcmp.eq.s32.totalorder %v4678, %v159
  %vm4845 = vcmp.eq.s32.totalorder %v4681, %v159
  %vm4846 = vcmp.eq.s32.totalorder %v4684, %v159
  %vm4847 = vcmp.eq.s32.totalorder %v4687, %v159
  %vm4848 = vcmp.eq.s32.totalorder %v4690, %v159
  %vm4849 = vcmp.eq.s32.totalorder %v4693, %v159
  %vm4850 = vcmp.eq.s32.totalorder %v4696, %v159
  %vm4851 = vcmp.eq.s32.totalorder %v4699, %v159
  %vm4852 = vcmp.eq.s32.totalorder %v4702, %v159
  %vm4853 = vcmp.eq.s32.totalorder %v4705, %v159
  %vm4854 = vcmp.eq.s32.totalorder %v4708, %v159
  %vm4855 = vcmp.eq.s32.totalorder %v4711, %v159
  %vm4856 = vcmp.eq.s32.totalorder %v4714, %v159
  %vm4857 = vcmp.eq.s32.totalorder %v4717, %v159
  %vm4858 = vcmp.eq.s32.totalorder %v4720, %v159
  %vm4859 = vcmp.eq.s32.totalorder %v4723, %v159
  %vm4860 = vcmp.eq.s32.totalorder %v4726, %v159
  %vm4861 = vcmp.eq.s32.totalorder %v4729, %v159
  %vm4862 = vcmp.eq.s32.totalorder %v4732, %v159
  %vm4863 = vcmp.eq.s32.totalorder %v4735, %v159
  %vm4864 = vcmp.eq.s32.totalorder %v4738, %v159
  %vm4865 = vcmp.eq.s32.totalorder %v4741, %v159
  %vm4866 = vcmp.eq.s32.totalorder %v4744, %v159
  %vm4867 = vcmp.eq.s32.totalorder %v4747, %v159
  %vm4868 = vcmp.eq.s32.totalorder %v4750, %v159
  %vm4869 = vcmp.eq.s32.totalorder %v4753, %v159
  %vm4870 = vcmp.eq.s32.totalorder %v4756, %v159
  %vm4871 = vcmp.eq.s32.totalorder %v4759, %v159
  %vm4872 = vcmp.eq.s32.totalorder %v4762, %v159
  %vm4873 = vcmp.eq.s32.totalorder %v4765, %v159
  %vm4874 = vcmp.eq.s32.totalorder %v4768, %v159
  %vm4875 = vcmp.eq.s32.totalorder %v4771, %v159
  %vm4876 = vcmp.eq.s32.totalorder %v4774, %v159
  %vm4877 = vcmp.eq.s32.totalorder %v4777, %v159
  %vm4878 = vcmp.eq.s32.totalorder %v4780, %v159
  %vm4879 = vcmp.eq.s32.totalorder %v4783, %v159
  %vm4880 = vcmp.eq.s32.totalorder %v4786, %v159
  %vm4881 = vcmp.eq.s32.totalorder %v4789, %v159
  %vm4882 = vcmp.eq.s32.totalorder %v4792, %v159
  %vm4883 = vcmp.eq.s32.totalorder %v4795, %v159
  %vm4884 = vcmp.eq.s32.totalorder %v4798, %v159
  %vm4885 = vcmp.eq.s32.totalorder %v4801, %v159
  %vm4886 = vcmp.eq.s32.totalorder %v4804, %v159
  %vm4887 = vcmp.eq.s32.totalorder %v4807, %v159
  %vm4888 = vcmp.eq.s32.totalorder %v4810, %v159
  %vm4889 = vcmp.eq.s32.totalorder %v4813, %v159
  %vm4890 = vcmp.eq.s32.totalorder %v4816, %v159
  %vm4891 = vcmp.eq.s32.totalorder %v4819, %v159
  %vm4892 = vcmp.eq.s32.totalorder %v4822, %v159
  %vm4893 = vcmp.eq.s32.totalorder %v4825, %v159
  %vm4894 = vcmp.eq.s32.totalorder %v4828, %v159
  %vm4895 = vcmp.eq.s32.totalorder %v4831, %v159
  %4896 = vset.pattern.permute.xlu0 7
  %4897 = vperm.xlu0 %4896, %v78
  %v4898 = vpop.permute.xlu0 %4897
  %4900 = vset.pattern.permute.xlu0 7
  %4901 = vperm.xlu0 %4900, %v79
  %v4902 = vpop.permute.xlu0 %4901
  %4904 = vset.pattern.permute.xlu0 7
  %4905 = vperm.xlu0 %4904, %v80
  %v4906 = vpop.permute.xlu0 %4905
  %4908 = vset.pattern.permute.xlu0 7
  %4909 = vperm.xlu0 %4908, %v81
  %v4910 = vpop.permute.xlu0 %4909
  %4912 = vset.pattern.permute.xlu0 7
  %4913 = vperm.xlu0 %4912, %v82
  %v4914 = vpop.permute.xlu0 %4913
  %4916 = vset.pattern.permute.xlu0 7
  %4917 = vperm.xlu0 %4916, %v83
  %v4918 = vpop.permute.xlu0 %4917
  %4920 = vset.pattern.permute.xlu0 7
  %4921 = vperm.xlu0 %4920, %v84
  %v4922 = vpop.permute.xlu0 %4921
  %4924 = vset.pattern.permute.xlu0 7
  %4925 = vperm.xlu0 %4924, %v85
  %v4926 = vpop.permute.xlu0 %4925
  %4928 = vset.pattern.permute.xlu0 7
  %4929 = vperm.xlu0 %4928, %v86
  %v4930 = vpop.permute.xlu0 %4929
  %4932 = vset.pattern.permute.xlu0 7
  %4933 = vperm.xlu0 %4932, %v87
  %v4934 = vpop.permute.xlu0 %4933
  %4936 = vset.pattern.permute.xlu0 7
  %4937 = vperm.xlu0 %4936, %v88
  %v4938 = vpop.permute.xlu0 %4937
  %4940 = vset.pattern.permute.xlu0 7
  %4941 = vperm.xlu0 %4940, %v89
  %v4942 = vpop.permute.xlu0 %4941
  %4944 = vset.pattern.permute.xlu0 7
  %4945 = vperm.xlu0 %4944, %v90
  %v4946 = vpop.permute.xlu0 %4945
  %4948 = vset.pattern.permute.xlu0 7
  %4949 = vperm.xlu0 %4948, %v91
  %v4950 = vpop.permute.xlu0 %4949
  %4952 = vset.pattern.permute.xlu0 7
  %4953 = vperm.xlu0 %4952, %v92
  %v4954 = vpop.permute.xlu0 %4953
  %4956 = vset.pattern.permute.xlu0 7
  %4957 = vperm.xlu0 %4956, %v93
  %v4958 = vpop.permute.xlu0 %4957
  %4960 = vset.pattern.permute.xlu0 7
  %4961 = vperm.xlu0 %4960, %v94
  %v4962 = vpop.permute.xlu0 %4961
  %4964 = vset.pattern.permute.xlu0 7
  %4965 = vperm.xlu0 %4964, %v95
  %v4966 = vpop.permute.xlu0 %4965
  %4968 = vset.pattern.permute.xlu0 7
  %4969 = vperm.xlu0 %4968, %v96
  %v4970 = vpop.permute.xlu0 %4969
  %4972 = vset.pattern.permute.xlu0 7
  %4973 = vperm.xlu0 %4972, %v97
  %v4974 = vpop.permute.xlu0 %4973
  %4976 = vset.pattern.permute.xlu0 7
  %4977 = vperm.xlu0 %4976, %v98
  %v4978 = vpop.permute.xlu0 %4977
  %4980 = vset.pattern.permute.xlu0 7
  %4981 = vperm.xlu0 %4980, %v99
  %v4982 = vpop.permute.xlu0 %4981
  %4984 = vset.pattern.permute.xlu0 7
  %4985 = vperm.xlu0 %4984, %v100
  %v4986 = vpop.permute.xlu0 %4985
  %4988 = vset.pattern.permute.xlu0 7
  %4989 = vperm.xlu0 %4988, %v101
  %v4990 = vpop.permute.xlu0 %4989
  %4992 = vset.pattern.permute.xlu0 7
  %4993 = vperm.xlu0 %4992, %v102
  %v4994 = vpop.permute.xlu0 %4993
  %4996 = vset.pattern.permute.xlu0 7
  %4997 = vperm.xlu0 %4996, %v103
  %v4998 = vpop.permute.xlu0 %4997
  %5000 = vset.pattern.permute.xlu0 7
  %5001 = vperm.xlu0 %5000, %v104
  %v5002 = vpop.permute.xlu0 %5001
  %5004 = vset.pattern.permute.xlu0 7
  %5005 = vperm.xlu0 %5004, %v105
  %v5006 = vpop.permute.xlu0 %5005
  %5008 = vset.pattern.permute.xlu0 7
  %5009 = vperm.xlu0 %5008, %v106
  %v5010 = vpop.permute.xlu0 %5009
  %5012 = vset.pattern.permute.xlu0 7
  %5013 = vperm.xlu0 %5012, %v107
  %v5014 = vpop.permute.xlu0 %5013
  %5016 = vset.pattern.permute.xlu0 7
  %5017 = vperm.xlu0 %5016, %v108
  %v5018 = vpop.permute.xlu0 %5017
  %5020 = vset.pattern.permute.xlu0 7
  %5021 = vperm.xlu0 %5020, %v109
  %v5022 = vpop.permute.xlu0 %5021
  %5024 = vset.pattern.permute.xlu0 7
  %5025 = vperm.xlu0 %5024, %v110
  %v5026 = vpop.permute.xlu0 %5025
  %5028 = vset.pattern.permute.xlu0 7
  %5029 = vperm.xlu0 %5028, %v111
  %v5030 = vpop.permute.xlu0 %5029
  %5032 = vset.pattern.permute.xlu0 7
  %5033 = vperm.xlu0 %5032, %v112
  %v5034 = vpop.permute.xlu0 %5033
  %5036 = vset.pattern.permute.xlu0 7
  %5037 = vperm.xlu0 %5036, %v113
  %v5038 = vpop.permute.xlu0 %5037
  %5040 = vset.pattern.permute.xlu0 7
  %5041 = vperm.xlu0 %5040, %v114
  %v5042 = vpop.permute.xlu0 %5041
  %5044 = vset.pattern.permute.xlu0 7
  %5045 = vperm.xlu0 %5044, %v115
  %v5046 = vpop.permute.xlu0 %5045
  %5048 = vset.pattern.permute.xlu0 7
  %5049 = vperm.xlu0 %5048, %v116
  %v5050 = vpop.permute.xlu0 %5049
  %5052 = vset.pattern.permute.xlu0 7
  %5053 = vperm.xlu0 %5052, %v117
  %v5054 = vpop.permute.xlu0 %5053
  %5056 = vset.pattern.permute.xlu0 7
  %5057 = vperm.xlu0 %5056, %v118
  %v5058 = vpop.permute.xlu0 %5057
  %5060 = vset.pattern.permute.xlu0 7
  %5061 = vperm.xlu0 %5060, %v119
  %v5062 = vpop.permute.xlu0 %5061
  %5064 = vset.pattern.permute.xlu0 7
  %5065 = vperm.xlu0 %5064, %v120
  %v5066 = vpop.permute.xlu0 %5065
  %5068 = vset.pattern.permute.xlu0 7
  %5069 = vperm.xlu0 %5068, %v121
  %v5070 = vpop.permute.xlu0 %5069
  %5072 = vset.pattern.permute.xlu0 7
  %5073 = vperm.xlu0 %5072, %v122
  %v5074 = vpop.permute.xlu0 %5073
  %5076 = vset.pattern.permute.xlu0 7
  %5077 = vperm.xlu0 %5076, %v123
  %v5078 = vpop.permute.xlu0 %5077
  %5080 = vset.pattern.permute.xlu0 7
  %5081 = vperm.xlu0 %5080, %v124
  %v5082 = vpop.permute.xlu0 %5081
  %5084 = vset.pattern.permute.xlu0 7
  %5085 = vperm.xlu0 %5084, %v125
  %v5086 = vpop.permute.xlu0 %5085
  %5088 = vset.pattern.permute.xlu0 7
  %5089 = vperm.xlu0 %5088, %v126
  %v5090 = vpop.permute.xlu0 %5089
  %5092 = vset.pattern.permute.xlu0 7
  %5093 = vperm.xlu0 %5092, %v127
  %v5094 = vpop.permute.xlu0 %5093
  %5096 = vset.pattern.permute.xlu0 7
  %5097 = vperm.xlu0 %5096, %v128
  %v5098 = vpop.permute.xlu0 %5097
  %5100 = vset.pattern.permute.xlu0 7
  %5101 = vperm.xlu0 %5100, %v129
  %v5102 = vpop.permute.xlu0 %5101
  %5104 = vset.pattern.permute.xlu0 7
  %5105 = vperm.xlu0 %5104, %v130
  %v5106 = vpop.permute.xlu0 %5105
  %5108 = vset.pattern.permute.xlu0 7
  %5109 = vperm.xlu0 %5108, %v131
  %v5110 = vpop.permute.xlu0 %5109
  %5112 = vset.pattern.permute.xlu0 7
  %5113 = vperm.xlu0 %5112, %v132
  %v5114 = vpop.permute.xlu0 %5113
  %5116 = vset.pattern.permute.xlu0 7
  %5117 = vperm.xlu0 %5116, %v133
  %v5118 = vpop.permute.xlu0 %5117
  %5120 = vset.pattern.permute.xlu0 7
  %5121 = vperm.xlu0 %5120, %v134
  %v5122 = vpop.permute.xlu0 %5121
  %5124 = vset.pattern.permute.xlu0 7
  %5125 = vperm.xlu0 %5124, %v135
  %v5126 = vpop.permute.xlu0 %5125
  %5128 = vset.pattern.permute.xlu0 7
  %5129 = vperm.xlu0 %5128, %v136
  %v5130 = vpop.permute.xlu0 %5129
  %5132 = vset.pattern.permute.xlu0 7
  %5133 = vperm.xlu0 %5132, %v137
  %v5134 = vpop.permute.xlu0 %5133
  %5136 = vset.pattern.permute.xlu0 7
  %5137 = vperm.xlu0 %5136, %v138
  %v5138 = vpop.permute.xlu0 %5137
  %5140 = vset.pattern.permute.xlu0 7
  %5141 = vperm.xlu0 %5140, %v139
  %v5142 = vpop.permute.xlu0 %5141
  %5144 = vset.pattern.permute.xlu0 7
  %5145 = vperm.xlu0 %5144, %v140
  %v5146 = vpop.permute.xlu0 %5145
  %5148 = vset.pattern.permute.xlu0 7
  %5149 = vperm.xlu0 %5148, %v141
  %v5150 = vpop.permute.xlu0 %5149
  %v5152 = vsel %vm4832, %v4898, 0.0
  %v5153 = vsel %vm4833, %v4902, 0.0
  %v5154 = vsel %vm4834, %v4906, 0.0
  %v5155 = vsel %vm4835, %v4910, 0.0
  %v5156 = vsel %vm4836, %v4914, 0.0
  %v5157 = vsel %vm4837, %v4918, 0.0
  %v5158 = vsel %vm4838, %v4922, 0.0
  %v5159 = vsel %vm4839, %v4926, 0.0
  %v5160 = vsel %vm4840, %v4930, 0.0
  %v5161 = vsel %vm4841, %v4934, 0.0
  %v5162 = vsel %vm4842, %v4938, 0.0
  %v5163 = vsel %vm4843, %v4942, 0.0
  %v5164 = vsel %vm4844, %v4946, 0.0
  %v5165 = vsel %vm4845, %v4950, 0.0
  %v5166 = vsel %vm4846, %v4954, 0.0
  %v5167 = vsel %vm4847, %v4958, 0.0
  %v5168 = vsel %vm4848, %v4962, 0.0
  %v5169 = vsel %vm4849, %v4966, 0.0
  %v5170 = vsel %vm4850, %v4970, 0.0
  %v5171 = vsel %vm4851, %v4974, 0.0
  %v5172 = vsel %vm4852, %v4978, 0.0
  %v5173 = vsel %vm4853, %v4982, 0.0
  %v5174 = vsel %vm4854, %v4986, 0.0
  %v5175 = vsel %vm4855, %v4990, 0.0
  %v5176 = vsel %vm4856, %v4994, 0.0
  %v5177 = vsel %vm4857, %v4998, 0.0
  %v5178 = vsel %vm4858, %v5002, 0.0
  %v5179 = vsel %vm4859, %v5006, 0.0
  %v5180 = vsel %vm4860, %v5010, 0.0
  %v5181 = vsel %vm4861, %v5014, 0.0
  %v5182 = vsel %vm4862, %v5018, 0.0
  %v5183 = vsel %vm4863, %v5022, 0.0
  %v5184 = vsel %vm4864, %v5026, 0.0
  %v5185 = vsel %vm4865, %v5030, 0.0
  %v5186 = vsel %vm4866, %v5034, 0.0
  %v5187 = vsel %vm4867, %v5038, 0.0
  %v5188 = vsel %vm4868, %v5042, 0.0
  %v5189 = vsel %vm4869, %v5046, 0.0
  %v5190 = vsel %vm4870, %v5050, 0.0
  %v5191 = vsel %vm4871, %v5054, 0.0
  %v5192 = vsel %vm4872, %v5058, 0.0
  %v5193 = vsel %vm4873, %v5062, 0.0
  %v5194 = vsel %vm4874, %v5066, 0.0
  %v5195 = vsel %vm4875, %v5070, 0.0
  %v5196 = vsel %vm4876, %v5074, 0.0
  %v5197 = vsel %vm4877, %v5078, 0.0
  %v5198 = vsel %vm4878, %v5082, 0.0
  %v5199 = vsel %vm4879, %v5086, 0.0
  %v5200 = vsel %vm4880, %v5090, 0.0
  %v5201 = vsel %vm4881, %v5094, 0.0
  %v5202 = vsel %vm4882, %v5098, 0.0
  %v5203 = vsel %vm4883, %v5102, 0.0
  %v5204 = vsel %vm4884, %v5106, 0.0
  %v5205 = vsel %vm4885, %v5110, 0.0
  %v5206 = vsel %vm4886, %v5114, 0.0
  %v5207 = vsel %vm4887, %v5118, 0.0
  %v5208 = vsel %vm4888, %v5122, 0.0
  %v5209 = vsel %vm4889, %v5126, 0.0
  %v5210 = vsel %vm4890, %v5130, 0.0
  %v5211 = vsel %vm4891, %v5134, 0.0
  %v5212 = vsel %vm4892, %v5138, 0.0
  %v5213 = vsel %vm4893, %v5142, 0.0
  %v5214 = vsel %vm4894, %v5146, 0.0
  %v5215 = vsel %vm4895, %v5150, 0.0
  %v5216 = vadd.f32 %v4576, %v5152
  %v5217 = vadd.f32 %v4577, %v5153
  %v5218 = vadd.f32 %v4578, %v5154
  %v5219 = vadd.f32 %v4579, %v5155
  %v5220 = vadd.f32 %v4580, %v5156
  %v5221 = vadd.f32 %v4581, %v5157
  %v5222 = vadd.f32 %v4582, %v5158
  %v5223 = vadd.f32 %v4583, %v5159
  %v5224 = vadd.f32 %v4584, %v5160
  %v5225 = vadd.f32 %v4585, %v5161
  %v5226 = vadd.f32 %v4586, %v5162
  %v5227 = vadd.f32 %v4587, %v5163
  %v5228 = vadd.f32 %v4588, %v5164
  %v5229 = vadd.f32 %v4589, %v5165
  %v5230 = vadd.f32 %v4590, %v5166
  %v5231 = vadd.f32 %v4591, %v5167
  %v5232 = vadd.f32 %v4592, %v5168
  %v5233 = vadd.f32 %v4593, %v5169
  %v5234 = vadd.f32 %v4594, %v5170
  %v5235 = vadd.f32 %v4595, %v5171
  %v5236 = vadd.f32 %v4596, %v5172
  %v5237 = vadd.f32 %v4597, %v5173
  %v5238 = vadd.f32 %v4598, %v5174
  %v5239 = vadd.f32 %v4599, %v5175
  %v5240 = vadd.f32 %v4600, %v5176
  %v5241 = vadd.f32 %v4601, %v5177
  %v5242 = vadd.f32 %v4602, %v5178
  %v5243 = vadd.f32 %v4603, %v5179
  %v5244 = vadd.f32 %v4604, %v5180
  %v5245 = vadd.f32 %v4605, %v5181
  %v5246 = vadd.f32 %v4606, %v5182
  %v5247 = vadd.f32 %v4607, %v5183
  %v5248 = vadd.f32 %v4608, %v5184
  %v5249 = vadd.f32 %v4609, %v5185
  %v5250 = vadd.f32 %v4610, %v5186
  %v5251 = vadd.f32 %v4611, %v5187
  %v5252 = vadd.f32 %v4612, %v5188
  %v5253 = vadd.f32 %v4613, %v5189
  %v5254 = vadd.f32 %v4614, %v5190
  %v5255 = vadd.f32 %v4615, %v5191
  %v5256 = vadd.f32 %v4616, %v5192
  %v5257 = vadd.f32 %v4617, %v5193
  %v5258 = vadd.f32 %v4618, %v5194
  %v5259 = vadd.f32 %v4619, %v5195
  %v5260 = vadd.f32 %v4620, %v5196
  %v5261 = vadd.f32 %v4621, %v5197
  %v5262 = vadd.f32 %v4622, %v5198
  %v5263 = vadd.f32 %v4623, %v5199
  %v5264 = vadd.f32 %v4624, %v5200
  %v5265 = vadd.f32 %v4625, %v5201
  %v5266 = vadd.f32 %v4626, %v5202
  %v5267 = vadd.f32 %v4627, %v5203
  %v5268 = vadd.f32 %v4628, %v5204
  %v5269 = vadd.f32 %v4629, %v5205
  %v5270 = vadd.f32 %v4630, %v5206
  %v5271 = vadd.f32 %v4631, %v5207
  %v5272 = vadd.f32 %v4632, %v5208
  %v5273 = vadd.f32 %v4633, %v5209
  %v5274 = vadd.f32 %v4634, %v5210
  %v5275 = vadd.f32 %v4635, %v5211
  %v5276 = vadd.f32 %v4636, %v5212
  %v5277 = vadd.f32 %v4637, %v5213
  %v5278 = vadd.f32 %v4638, %v5214
  %v5279 = vadd.f32 %v4639, %v5215
  %5280 = vmatprep.subr.mxu0 0.0
  %5281 = vmatpush1.msra.mxu0 %v157
  %5282 = vmatprep.subr.mxu0 0.0
  %5283 = vmatpush1.msra.mxu0 %v156
  %5284 = vmatprep.subr.mxu0 0.0
  %5285 = vmatpush1.msra.mxu0 %v155
  %5286 = vmatprep.subr.mxu0 0.0
  %5287 = vmatpush1.msra.mxu0 %v154
  %5288 = vmatprep.subr.mxu0 0.0
  %5289 = vmatpush1.msra.mxu0 %v153
  %5290 = vmatprep.subr.mxu0 0.0
  %5291 = vmatpush1.msra.mxu0 %v152
  %5292 = vmatprep.subr.mxu0 0.0
  %5293 = vmatpush1.msra.mxu0 %v151
  %5294 = vmatprep.subr.mxu0 0.0
  %5295 = vmatpush1.msra.mxu0 %v150
  %5296 = vmatprep.subr.mxu0 0.0
  %5297 = vmatpush1.msra.mxu0 %v149
  %5298 = vmatprep.subr.mxu0 0.0
  %5299 = vmatpush1.msra.mxu0 %v148
  %5300 = vmatprep.subr.mxu0 0.0
  %5301 = vmatpush1.msra.mxu0 %v147
  %5302 = vmatprep.subr.mxu0 0.0
  %5303 = vmatpush1.msra.mxu0 %v146
  %5304 = vmatprep.subr.mxu0 0.0
  %5305 = vmatpush1.msra.mxu0 %v145
  %5306 = vmatprep.subr.mxu0 0.0
  %5307 = vmatpush1.msra.mxu0 %v144
  %5308 = vmatprep.subr.mxu0 0.0
  %5309 = vmatpush1.msra.mxu0 %v143
  %5310 = vmatprep.subr.mxu0 0.0
  %5311 = vmatpush1.msra.mxu0 %v142
  %5312 = vmatprep.subr.mxu0 0.0
  %5313 = vmatpush2.msra.mxu0 0.0
  %5314 = vmatprep.subr.mxu0 0.0
  %5315 = vmatpush2.msra.mxu0 0.0
  %5316 = vmatprep.subr.mxu0 0.0
  %5317 = vmatpush2.msra.mxu0 0.0
  %5318 = vmatprep.subr.mxu0 0.0
  %5319 = vmatpush2.msra.mxu0 0.0
  %5320 = vmatprep.subr.mxu0 0.0
  %5321 = vmatpush2.msra.mxu0 0.0
  %5322 = vmatprep.subr.mxu0 0.0
  %5323 = vmatpush2.msra.mxu0 0.0
  %5324 = vmatprep.subr.mxu0 0.0
  %5325 = vmatpush2.msra.mxu0 0.0
  %5326 = vmatprep.subr.mxu0 0.0
  %5327 = vmatpush2.msra.mxu0 0.0
  %5328 = vmatprep.subr.mxu0 0.0
  %5329 = vmatpush2.msra.mxu0 0.0
  %5330 = vmatprep.subr.mxu0 0.0
  %5331 = vmatpush2.msra.mxu0 0.0
  %5332 = vmatprep.subr.mxu0 0.0
  %5333 = vmatpush2.msra.mxu0 0.0
  %5334 = vmatprep.subr.mxu0 0.0
  %5335 = vmatpush2.msra.mxu0 0.0
  %5336 = vmatprep.subr.mxu0 0.0
  %5337 = vmatpush2.msra.mxu0 0.0
  %5338 = vmatprep.subr.mxu0 0.0
  %5339 = vmatpush2.msra.mxu0 0.0
  %5340 = vmatprep.subr.mxu0 0.0
  %5341 = vmatpush2.msra.mxu0 0.0
  %5342 = vmatprep.subr.mxu0 0.0
  %5343 = vmatpush2.msra.mxu0 0.0
  %5344 = vmatprep.mubr.f32.mxu0 0.0
  %5345 = vmatmul.mubr.f32.gmra.mxu0 %v5216
  %v5346 = vpop.f32.mrf.mxu0
  %v5347 = vadd.f32 0.0, %v5346
  %v5348 = vpop.f32.mrf.mxu0
  %5349 = vmatprep.mubr.f32.mxu0 0.0
  %5350 = vmatmul.mubr.f32.gmra.mxu0 %v5217
  %v5351 = vpop.f32.mrf.mxu0
  %v5352 = vadd.f32 0.0, %v5351
  %v5353 = vpop.f32.mrf.mxu0
  %5354 = vmatprep.mubr.f32.mxu0 0.0
  %5355 = vmatmul.mubr.f32.gmra.mxu0 %v5218
  %v5356 = vpop.f32.mrf.mxu0
  %v5357 = vadd.f32 0.0, %v5356
  %v5358 = vpop.f32.mrf.mxu0
  %5359 = vmatprep.mubr.f32.mxu0 0.0
  %5360 = vmatmul.mubr.f32.gmra.mxu0 %v5219
  %v5361 = vpop.f32.mrf.mxu0
  %v5362 = vadd.f32 0.0, %v5361
  %v5363 = vpop.f32.mrf.mxu0
  %5364 = vmatprep.mubr.f32.mxu0 0.0
  %5365 = vmatmul.mubr.f32.gmra.mxu0 %v5220
  %v5366 = vpop.f32.mrf.mxu0
  %v5367 = vadd.f32 0.0, %v5366
  %v5368 = vpop.f32.mrf.mxu0
  %5369 = vmatprep.mubr.f32.mxu0 0.0
  %5370 = vmatmul.mubr.f32.gmra.mxu0 %v5221
  %v5371 = vpop.f32.mrf.mxu0
  %v5372 = vadd.f32 0.0, %v5371
  %v5373 = vpop.f32.mrf.mxu0
  %5374 = vmatprep.mubr.f32.mxu0 0.0
  %5375 = vmatmul.mubr.f32.gmra.mxu0 %v5222
  %v5376 = vpop.f32.mrf.mxu0
  %v5377 = vadd.f32 0.0, %v5376
  %v5378 = vpop.f32.mrf.mxu0
  %5379 = vmatprep.mubr.f32.mxu0 0.0
  %5380 = vmatmul.mubr.f32.gmra.mxu0 %v5223
  %v5381 = vpop.f32.mrf.mxu0
  %v5382 = vadd.f32 0.0, %v5381
  %v5383 = vpop.f32.mrf.mxu0
  %5384 = vmatprep.mubr.f32.mxu0 0.0
  %5385 = vmatmul.mubr.f32.gmra.mxu0 %v5224
  %v5386 = vpop.f32.mrf.mxu0
  %v5387 = vadd.f32 0.0, %v5386
  %v5388 = vpop.f32.mrf.mxu0
  %5389 = vmatprep.mubr.f32.mxu0 0.0
  %5390 = vmatmul.mubr.f32.gmra.mxu0 %v5225
  %v5391 = vpop.f32.mrf.mxu0
  %v5392 = vadd.f32 0.0, %v5391
  %v5393 = vpop.f32.mrf.mxu0
  %5394 = vmatprep.mubr.f32.mxu0 0.0
  %5395 = vmatmul.mubr.f32.gmra.mxu0 %v5226
  %v5396 = vpop.f32.mrf.mxu0
  %v5397 = vadd.f32 0.0, %v5396
  %v5398 = vpop.f32.mrf.mxu0
  %5399 = vmatprep.mubr.f32.mxu0 0.0
  %5400 = vmatmul.mubr.f32.gmra.mxu0 %v5227
  %v5401 = vpop.f32.mrf.mxu0
  %v5402 = vadd.f32 0.0, %v5401
  %v5403 = vpop.f32.mrf.mxu0
  %5404 = vmatprep.mubr.f32.mxu0 0.0
  %5405 = vmatmul.mubr.f32.gmra.mxu0 %v5228
  %v5406 = vpop.f32.mrf.mxu0
  %v5407 = vadd.f32 0.0, %v5406
  %v5408 = vpop.f32.mrf.mxu0
  %5409 = vmatprep.mubr.f32.mxu0 0.0
  %5410 = vmatmul.mubr.f32.gmra.mxu0 %v5229
  %v5411 = vpop.f32.mrf.mxu0
  %v5412 = vadd.f32 0.0, %v5411
  %v5413 = vpop.f32.mrf.mxu0
  %5414 = vmatprep.mubr.f32.mxu0 0.0
  %5415 = vmatmul.mubr.f32.gmra.mxu0 %v5230
  %v5416 = vpop.f32.mrf.mxu0
  %v5417 = vadd.f32 0.0, %v5416
  %v5418 = vpop.f32.mrf.mxu0
  %5419 = vmatprep.mubr.f32.mxu0 0.0
  %5420 = vmatmul.mubr.f32.gmra.mxu0 %v5231
  %v5421 = vpop.f32.mrf.mxu0
  %v5422 = vadd.f32 0.0, %v5421
  %v5423 = vpop.f32.mrf.mxu0
  %5424 = vmatprep.mubr.f32.mxu0 0.0
  %5425 = vmatmul.mubr.f32.gmra.mxu0 %v5232
  %v5426 = vpop.f32.mrf.mxu0
  %v5427 = vadd.f32 0.0, %v5426
  %v5428 = vpop.f32.mrf.mxu0
  %5429 = vmatprep.mubr.f32.mxu0 0.0
  %5430 = vmatmul.mubr.f32.gmra.mxu0 %v5233
  %v5431 = vpop.f32.mrf.mxu0
  %v5432 = vadd.f32 0.0, %v5431
  %v5433 = vpop.f32.mrf.mxu0
  %5434 = vmatprep.mubr.f32.mxu0 0.0
  %5435 = vmatmul.mubr.f32.gmra.mxu0 %v5234
  %v5436 = vpop.f32.mrf.mxu0
  %v5437 = vadd.f32 0.0, %v5436
  %v5438 = vpop.f32.mrf.mxu0
  %5439 = vmatprep.mubr.f32.mxu0 0.0
  %5440 = vmatmul.mubr.f32.gmra.mxu0 %v5235
  %v5441 = vpop.f32.mrf.mxu0
  %v5442 = vadd.f32 0.0, %v5441
  %v5443 = vpop.f32.mrf.mxu0
  %5444 = vmatprep.mubr.f32.mxu0 0.0
  %5445 = vmatmul.mubr.f32.gmra.mxu0 %v5236
  %v5446 = vpop.f32.mrf.mxu0
  %v5447 = vadd.f32 0.0, %v5446
  %v5448 = vpop.f32.mrf.mxu0
  %5449 = vmatprep.mubr.f32.mxu0 0.0
  %5450 = vmatmul.mubr.f32.gmra.mxu0 %v5237
  %v5451 = vpop.f32.mrf.mxu0
  %v5452 = vadd.f32 0.0, %v5451
  %v5453 = vpop.f32.mrf.mxu0
  %5454 = vmatprep.mubr.f32.mxu0 0.0
  %5455 = vmatmul.mubr.f32.gmra.mxu0 %v5238
  %v5456 = vpop.f32.mrf.mxu0
  %v5457 = vadd.f32 0.0, %v5456
  %v5458 = vpop.f32.mrf.mxu0
  %5459 = vmatprep.mubr.f32.mxu0 0.0
  %5460 = vmatmul.mubr.f32.gmra.mxu0 %v5239
  %v5461 = vpop.f32.mrf.mxu0
  %v5462 = vadd.f32 0.0, %v5461
  %v5463 = vpop.f32.mrf.mxu0
  %5464 = vmatprep.mubr.f32.mxu0 0.0
  %5465 = vmatmul.mubr.f32.gmra.mxu0 %v5240
  %v5466 = vpop.f32.mrf.mxu0
  %v5467 = vadd.f32 0.0, %v5466
  %v5468 = vpop.f32.mrf.mxu0
  %5469 = vmatprep.mubr.f32.mxu0 0.0
  %5470 = vmatmul.mubr.f32.gmra.mxu0 %v5241
  %v5471 = vpop.f32.mrf.mxu0
  %v5472 = vadd.f32 0.0, %v5471
  %v5473 = vpop.f32.mrf.mxu0
  %5474 = vmatprep.mubr.f32.mxu0 0.0
  %5475 = vmatmul.mubr.f32.gmra.mxu0 %v5242
  %v5476 = vpop.f32.mrf.mxu0
  %v5477 = vadd.f32 0.0, %v5476
  %v5478 = vpop.f32.mrf.mxu0
  %5479 = vmatprep.mubr.f32.mxu0 0.0
  %5480 = vmatmul.mubr.f32.gmra.mxu0 %v5243
  %v5481 = vpop.f32.mrf.mxu0
  %v5482 = vadd.f32 0.0, %v5481
  %v5483 = vpop.f32.mrf.mxu0
  %5484 = vmatprep.mubr.f32.mxu0 0.0
  %5485 = vmatmul.mubr.f32.gmra.mxu0 %v5244
  %v5486 = vpop.f32.mrf.mxu0
  %v5487 = vadd.f32 0.0, %v5486
  %v5488 = vpop.f32.mrf.mxu0
  %5489 = vmatprep.mubr.f32.mxu0 0.0
  %5490 = vmatmul.mubr.f32.gmra.mxu0 %v5245
  %v5491 = vpop.f32.mrf.mxu0
  %v5492 = vadd.f32 0.0, %v5491
  %v5493 = vpop.f32.mrf.mxu0
  %5494 = vmatprep.mubr.f32.mxu0 0.0
  %5495 = vmatmul.mubr.f32.gmra.mxu0 %v5246
  %v5496 = vpop.f32.mrf.mxu0
  %v5497 = vadd.f32 0.0, %v5496
  %v5498 = vpop.f32.mrf.mxu0
  %5499 = vmatprep.mubr.f32.mxu0 0.0
  %5500 = vmatmul.mubr.f32.gmra.mxu0 %v5247
  %v5501 = vpop.f32.mrf.mxu0
  %v5502 = vadd.f32 0.0, %v5501
  %v5503 = vpop.f32.mrf.mxu0
  %5504 = vmatprep.mubr.f32.mxu0 0.0
  %5505 = vmatmul.mubr.f32.gmra.mxu0 %v5248
  %v5506 = vpop.f32.mrf.mxu0
  %v5507 = vadd.f32 0.0, %v5506
  %v5508 = vpop.f32.mrf.mxu0
  %5509 = vmatprep.mubr.f32.mxu0 0.0
  %5510 = vmatmul.mubr.f32.gmra.mxu0 %v5249
  %v5511 = vpop.f32.mrf.mxu0
  %v5512 = vadd.f32 0.0, %v5511
  %v5513 = vpop.f32.mrf.mxu0
  %5514 = vmatprep.mubr.f32.mxu0 0.0
  %5515 = vmatmul.mubr.f32.gmra.mxu0 %v5250
  %v5516 = vpop.f32.mrf.mxu0
  %v5517 = vadd.f32 0.0, %v5516
  %v5518 = vpop.f32.mrf.mxu0
  %5519 = vmatprep.mubr.f32.mxu0 0.0
  %5520 = vmatmul.mubr.f32.gmra.mxu0 %v5251
  %v5521 = vpop.f32.mrf.mxu0
  %v5522 = vadd.f32 0.0, %v5521
  %v5523 = vpop.f32.mrf.mxu0
  %5524 = vmatprep.mubr.f32.mxu0 0.0
  %5525 = vmatmul.mubr.f32.gmra.mxu0 %v5252
  %v5526 = vpop.f32.mrf.mxu0
  %v5527 = vadd.f32 0.0, %v5526
  %v5528 = vpop.f32.mrf.mxu0
  %5529 = vmatprep.mubr.f32.mxu0 0.0
  %5530 = vmatmul.mubr.f32.gmra.mxu0 %v5253
  %v5531 = vpop.f32.mrf.mxu0
  %v5532 = vadd.f32 0.0, %v5531
  %v5533 = vpop.f32.mrf.mxu0
  %5534 = vmatprep.mubr.f32.mxu0 0.0
  %5535 = vmatmul.mubr.f32.gmra.mxu0 %v5254
  %v5536 = vpop.f32.mrf.mxu0
  %v5537 = vadd.f32 0.0, %v5536
  %v5538 = vpop.f32.mrf.mxu0
  %5539 = vmatprep.mubr.f32.mxu0 0.0
  %5540 = vmatmul.mubr.f32.gmra.mxu0 %v5255
  %v5541 = vpop.f32.mrf.mxu0
  %v5542 = vadd.f32 0.0, %v5541
  %v5543 = vpop.f32.mrf.mxu0
  %5544 = vmatprep.mubr.f32.mxu0 0.0
  %5545 = vmatmul.mubr.f32.gmra.mxu0 %v5256
  %v5546 = vpop.f32.mrf.mxu0
  %v5547 = vadd.f32 0.0, %v5546
  %v5548 = vpop.f32.mrf.mxu0
  %5549 = vmatprep.mubr.f32.mxu0 0.0
  %5550 = vmatmul.mubr.f32.gmra.mxu0 %v5257
  %v5551 = vpop.f32.mrf.mxu0
  %v5552 = vadd.f32 0.0, %v5551
  %v5553 = vpop.f32.mrf.mxu0
  %5554 = vmatprep.mubr.f32.mxu0 0.0
  %5555 = vmatmul.mubr.f32.gmra.mxu0 %v5258
  %v5556 = vpop.f32.mrf.mxu0
  %v5557 = vadd.f32 0.0, %v5556
  %v5558 = vpop.f32.mrf.mxu0
  %5559 = vmatprep.mubr.f32.mxu0 0.0
  %5560 = vmatmul.mubr.f32.gmra.mxu0 %v5259
  %v5561 = vpop.f32.mrf.mxu0
  %v5562 = vadd.f32 0.0, %v5561
  %v5563 = vpop.f32.mrf.mxu0
  %5564 = vmatprep.mubr.f32.mxu0 0.0
  %5565 = vmatmul.mubr.f32.gmra.mxu0 %v5260
  %v5566 = vpop.f32.mrf.mxu0
  %v5567 = vadd.f32 0.0, %v5566
  %v5568 = vpop.f32.mrf.mxu0
  %5569 = vmatprep.mubr.f32.mxu0 0.0
  %5570 = vmatmul.mubr.f32.gmra.mxu0 %v5261
  %v5571 = vpop.f32.mrf.mxu0
  %v5572 = vadd.f32 0.0, %v5571
  %v5573 = vpop.f32.mrf.mxu0
  %5574 = vmatprep.mubr.f32.mxu0 0.0
  %5575 = vmatmul.mubr.f32.gmra.mxu0 %v5262
  %v5576 = vpop.f32.mrf.mxu0
  %v5577 = vadd.f32 0.0, %v5576
  %v5578 = vpop.f32.mrf.mxu0
  %5579 = vmatprep.mubr.f32.mxu0 0.0
  %5580 = vmatmul.mubr.f32.gmra.mxu0 %v5263
  %v5581 = vpop.f32.mrf.mxu0
  %v5582 = vadd.f32 0.0, %v5581
  %v5583 = vpop.f32.mrf.mxu0
  %5584 = vmatprep.mubr.f32.mxu0 0.0
  %5585 = vmatmul.mubr.f32.gmra.mxu0 %v5264
  %v5586 = vpop.f32.mrf.mxu0
  %v5587 = vadd.f32 0.0, %v5586
  %v5588 = vpop.f32.mrf.mxu0
  %5589 = vmatprep.mubr.f32.mxu0 0.0
  %5590 = vmatmul.mubr.f32.gmra.mxu0 %v5265
  %v5591 = vpop.f32.mrf.mxu0
  %v5592 = vadd.f32 0.0, %v5591
  %v5593 = vpop.f32.mrf.mxu0
  %5594 = vmatprep.mubr.f32.mxu0 0.0
  %5595 = vmatmul.mubr.f32.gmra.mxu0 %v5266
  %v5596 = vpop.f32.mrf.mxu0
  %v5597 = vadd.f32 0.0, %v5596
  %v5598 = vpop.f32.mrf.mxu0
  %5599 = vmatprep.mubr.f32.mxu0 0.0
  %5600 = vmatmul.mubr.f32.gmra.mxu0 %v5267
  %v5601 = vpop.f32.mrf.mxu0
  %v5602 = vadd.f32 0.0, %v5601
  %v5603 = vpop.f32.mrf.mxu0
  %5604 = vmatprep.mubr.f32.mxu0 0.0
  %5605 = vmatmul.mubr.f32.gmra.mxu0 %v5268
  %v5606 = vpop.f32.mrf.mxu0
  %v5607 = vadd.f32 0.0, %v5606
  %v5608 = vpop.f32.mrf.mxu0
  %5609 = vmatprep.mubr.f32.mxu0 0.0
  %5610 = vmatmul.mubr.f32.gmra.mxu0 %v5269
  %v5611 = vpop.f32.mrf.mxu0
  %v5612 = vadd.f32 0.0, %v5611
  %v5613 = vpop.f32.mrf.mxu0
  %5614 = vmatprep.mubr.f32.mxu0 0.0
  %5615 = vmatmul.mubr.f32.gmra.mxu0 %v5270
  %v5616 = vpop.f32.mrf.mxu0
  %v5617 = vadd.f32 0.0, %v5616
  %v5618 = vpop.f32.mrf.mxu0
  %5619 = vmatprep.mubr.f32.mxu0 0.0
  %5620 = vmatmul.mubr.f32.gmra.mxu0 %v5271
  %v5621 = vpop.f32.mrf.mxu0
  %v5622 = vadd.f32 0.0, %v5621
  %v5623 = vpop.f32.mrf.mxu0
  %5624 = vmatprep.mubr.f32.mxu0 0.0
  %5625 = vmatmul.mubr.f32.gmra.mxu0 %v5272
  %v5626 = vpop.f32.mrf.mxu0
  %v5627 = vadd.f32 0.0, %v5626
  %v5628 = vpop.f32.mrf.mxu0
  %5629 = vmatprep.mubr.f32.mxu0 0.0
  %5630 = vmatmul.mubr.f32.gmra.mxu0 %v5273
  %v5631 = vpop.f32.mrf.mxu0
  %v5632 = vadd.f32 0.0, %v5631
  %v5633 = vpop.f32.mrf.mxu0
  %5634 = vmatprep.mubr.f32.mxu0 0.0
  %5635 = vmatmul.mubr.f32.gmra.mxu0 %v5274
  %v5636 = vpop.f32.mrf.mxu0
  %v5637 = vadd.f32 0.0, %v5636
  %v5638 = vpop.f32.mrf.mxu0
  %5639 = vmatprep.mubr.f32.mxu0 0.0
  %5640 = vmatmul.mubr.f32.gmra.mxu0 %v5275
  %v5641 = vpop.f32.mrf.mxu0
  %v5642 = vadd.f32 0.0, %v5641
  %v5643 = vpop.f32.mrf.mxu0
  %5644 = vmatprep.mubr.f32.mxu0 0.0
  %5645 = vmatmul.mubr.f32.gmra.mxu0 %v5276
  %v5646 = vpop.f32.mrf.mxu0
  %v5647 = vadd.f32 0.0, %v5646
  %v5648 = vpop.f32.mrf.mxu0
  %5649 = vmatprep.mubr.f32.mxu0 0.0
  %5650 = vmatmul.mubr.f32.gmra.mxu0 %v5277
  %v5651 = vpop.f32.mrf.mxu0
  %v5652 = vadd.f32 0.0, %v5651
  %v5653 = vpop.f32.mrf.mxu0
  %5654 = vmatprep.mubr.f32.mxu0 0.0
  %5655 = vmatmul.mubr.f32.gmra.mxu0 %v5278
  %v5656 = vpop.f32.mrf.mxu0
  %v5657 = vadd.f32 0.0, %v5656
  %v5658 = vpop.f32.mrf.mxu0
  %5659 = vmatprep.mubr.f32.mxu0 0.0
  %5660 = vmatmul.mubr.f32.gmra.mxu0 %v5279
  %v5661 = vpop.f32.mrf.mxu0
  %v5662 = vadd.f32 0.0, %v5661
  %v5663 = vpop.f32.mrf.mxu0
  %5664 = vdwg.mxu0
  %vm5665 = vcmask 261120
  %5666 = vst.msk [vmem:[%s3] sm:$0xff] %vm5665, %v5347
  %5667 = vst.msk [vmem:[%s3 + $0x8] sm:$0xff] %vm5665, %v5352
  %5668 = vst.msk [vmem:[%s3 + $0x10] sm:$0xff] %vm5665, %v5357
  %5669 = vst.msk [vmem:[%s3 + $0x18] sm:$0xff] %vm5665, %v5362
  %5670 = vst.msk [vmem:[%s3 + $0x20] sm:$0xff] %vm5665, %v5367
  %5671 = vst.msk [vmem:[%s3 + $0x28] sm:$0xff] %vm5665, %v5372
  %5672 = vst.msk [vmem:[%s3 + $0x30] sm:$0xff] %vm5665, %v5377
  %5673 = vst.msk [vmem:[%s3 + $0x38] sm:$0xff] %vm5665, %v5382
  %5674 = vst.msk [vmem:[%s3 + $0x40] sm:$0xff] %vm5665, %v5387
  %5675 = vst.msk [vmem:[%s3 + $0x48] sm:$0xff] %vm5665, %v5392
  %5676 = vst.msk [vmem:[%s3 + $0x50] sm:$0xff] %vm5665, %v5397
  %5677 = vst.msk [vmem:[%s3 + $0x58] sm:$0xff] %vm5665, %v5402
  %5678 = vst.msk [vmem:[%s3 + $0x60] sm:$0xff] %vm5665, %v5407
  %5679 = vst.msk [vmem:[%s3 + $0x68] sm:$0xff] %vm5665, %v5412
  %5680 = vst.msk [vmem:[%s3 + $0x70] sm:$0xff] %vm5665, %v5417
  %5681 = vst.msk [vmem:[%s3 + $0x78] sm:$0xff] %vm5665, %v5422
  %5682 = vst.msk [vmem:[%s3 + $0x80] sm:$0xff] %vm5665, %v5427
  %5683 = vst.msk [vmem:[%s3 + $0x88] sm:$0xff] %vm5665, %v5432
  %5684 = vst.msk [vmem:[%s3 + $0x90] sm:$0xff] %vm5665, %v5437
  %5685 = vst.msk [vmem:[%s3 + $0x98] sm:$0xff] %vm5665, %v5442
  %5686 = vst.msk [vmem:[%s3 + $0xa0] sm:$0xff] %vm5665, %v5447
  %5687 = vst.msk [vmem:[%s3 + $0xa8] sm:$0xff] %vm5665, %v5452
  %5688 = vst.msk [vmem:[%s3 + $0xb0] sm:$0xff] %vm5665, %v5457
  %5689 = vst.msk [vmem:[%s3 + $0xb8] sm:$0xff] %vm5665, %v5462
  %5690 = vst.msk [vmem:[%s3 + $0xc0] sm:$0xff] %vm5665, %v5467
  %5691 = vst.msk [vmem:[%s3 + $0xc8] sm:$0xff] %vm5665, %v5472
  %5692 = vst.msk [vmem:[%s3 + $0xd0] sm:$0xff] %vm5665, %v5477
  %5693 = vst.msk [vmem:[%s3 + $0xd8] sm:$0xff] %vm5665, %v5482
  %5694 = vst.msk [vmem:[%s3 + $0xe0] sm:$0xff] %vm5665, %v5487
  %5695 = vst.msk [vmem:[%s3 + $0xe8] sm:$0xff] %vm5665, %v5492
  %5696 = vst.msk [vmem:[%s3 + $0xf0] sm:$0xff] %vm5665, %v5497
  %5697 = vst.msk [vmem:[%s3 + $0xf8] sm:$0xff] %vm5665, %v5502
  %5698 = vst.msk [vmem:[%s3 + $0x100] sm:$0xff] %vm5665, %v5507
  %5699 = vst.msk [vmem:[%s3 + $0x108] sm:$0xff] %vm5665, %v5512
  %5700 = vst.msk [vmem:[%s3 + $0x110] sm:$0xff] %vm5665, %v5517
  %5701 = vst.msk [vmem:[%s3 + $0x118] sm:$0xff] %vm5665, %v5522
  %5702 = vst.msk [vmem:[%s3 + $0x120] sm:$0xff] %vm5665, %v5527
  %5703 = vst.msk [vmem:[%s3 + $0x128] sm:$0xff] %vm5665, %v5532
  %5704 = vst.msk [vmem:[%s3 + $0x130] sm:$0xff] %vm5665, %v5537
  %5705 = vst.msk [vmem:[%s3 + $0x138] sm:$0xff] %vm5665, %v5542
  %5706 = vst.msk [vmem:[%s3 + $0x140] sm:$0xff] %vm5665, %v5547
  %5707 = vst.msk [vmem:[%s3 + $0x148] sm:$0xff] %vm5665, %v5552
  %5708 = vst.msk [vmem:[%s3 + $0x150] sm:$0xff] %vm5665, %v5557
  %5709 = vst.msk [vmem:[%s3 + $0x158] sm:$0xff] %vm5665, %v5562
  %5710 = vst.msk [vmem:[%s3 + $0x160] sm:$0xff] %vm5665, %v5567
  %5711 = vst.msk [vmem:[%s3 + $0x168] sm:$0xff] %vm5665, %v5572
  %5712 = vst.msk [vmem:[%s3 + $0x170] sm:$0xff] %vm5665, %v5577
  %5713 = vst.msk [vmem:[%s3 + $0x178] sm:$0xff] %vm5665, %v5582
  %5714 = vst.msk [vmem:[%s3 + $0x180] sm:$0xff] %vm5665, %v5587
  %5715 = vst.msk [vmem:[%s3 + $0x188] sm:$0xff] %vm5665, %v5592
  %5716 = vst.msk [vmem:[%s3 + $0x190] sm:$0xff] %vm5665, %v5597
  %5717 = vst.msk [vmem:[%s3 + $0x198] sm:$0xff] %vm5665, %v5602
  %5718 = vst.msk [vmem:[%s3 + $0x1a0] sm:$0xff] %vm5665, %v5607
  %5719 = vst.msk [vmem:[%s3 + $0x1a8] sm:$0xff] %vm5665, %v5612
  %5720 = vst.msk [vmem:[%s3 + $0x1b0] sm:$0xff] %vm5665, %v5617
  %5721 = vst.msk [vmem:[%s3 + $0x1b8] sm:$0xff] %vm5665, %v5622
  %5722 = vst.msk [vmem:[%s3 + $0x1c0] sm:$0xff] %vm5665, %v5627
  %5723 = vst.msk [vmem:[%s3 + $0x1c8] sm:$0xff] %vm5665, %v5632
  %5724 = vst.msk [vmem:[%s3 + $0x1d0] sm:$0xff] %vm5665, %v5637
  %5725 = vst.msk [vmem:[%s3 + $0x1d8] sm:$0xff] %vm5665, %v5642
  %5726 = vst.msk [vmem:[%s3 + $0x1e0] sm:$0xff] %vm5665, %v5647
  %5727 = vst.msk [vmem:[%s3 + $0x1e8] sm:$0xff] %vm5665, %v5652
  %5728 = vst.msk [vmem:[%s3 + $0x1f0] sm:$0xff] %vm5665, %v5657
  %5729 = vst.msk [vmem:[%s3 + $0x1f8] sm:$0xff] %vm5665, %v5662
  // Predicated region
  $region14: #{tpu_custom_call.1} parent=0 // pred_check
    _
  $region15: #{tpu_custom_call.1} parent=0 // pred_check_branch
    %5731 = sbr.rel (0) target = $region17
  $region16: #{tpu_custom_call.1} parent=0 // pred_region
    _
  $region17: #{tpu_custom_call.1} parent=0 // pred_fallthru
    _
  // Predicated region
  $region18: #{tpu_custom_call.1} parent=0 // pred_check
    _
  $region19: #{tpu_custom_call.1} parent=0 // pred_check_branch
    %5733 = sbr.rel (0) target = $region21
  $region20: #{tpu_custom_call.1} parent=0 // pred_region
    _
  $region21: #{tpu_custom_call.1} parent=0 // pred_fallthru
    _

</llo_original>
